<compile_context>
chip_gen: v6e
topology: v6e:2x2x1
jax: 0.10.0
libtpu: 0.0.40
codegen_flags: <defaults>
</compile_context>

<pallas_src>
import functools

import numpy as np
import jax
import jax.numpy as jnp
from jax import lax
from jax.experimental import pallas as pl
from jax.experimental.pallas import tpu as pltpu


@functools.lru_cache(maxsize=None)
def _bilinear_upsample_matrix(in_size: int, scale: int = 2) -> np.ndarray:
    """(out, in) interpolation matrix reproducing nn.Upsample(scale_factor=scale,
    mode='bilinear', align_corners=False) along one axis.  Host-side, static
    shapes only, cached."""
    out_size = in_size * scale
    M = np.zeros((out_size, in_size), dtype=np.float32)
    for o in range(out_size):
        src = (o + 0.5) / scale - 0.5
        src = max(src, 0.0)                      # PyTorch clamps negative src to 0
        i0 = min(int(np.floor(src)), in_size - 1)
        i1 = min(i0 + 1, in_size - 1)
        frac = src - i0
        M[o, i0] += 1.0 - frac
        M[o, i1] += frac
    return M


def _pick_lane_packing(W2: int) -> int:
    """How many consecutive output rows to pack per lane row so the output
    block's last dim is a full 128 lanes (dense vst / dense output DMA)."""
    if W2 >= 128 or 128 % W2 != 0:
        return 1
    return 128 // W2


def _pick_num_channel_groups(N: int, C: int, H: int, W: int, g: int,
                             vmem_budget_bytes: int = 24 * 1024 * 1024):
    """Number of output-channel groups (inner grid axis).  Aim for >= 4 total
    grid steps (software pipelining + v7x megacore) with per-step blocks that
    satisfy the (8,128) alignment rules and fit a conservative VMEM budget."""
    H2, W2, K = 2 * H, 2 * W, C * H
    candidates = []
    for ng in range(1, C + 1):
        if C % ng:
            continue
        rows = (C // ng) * H2                    # output rows produced per step
        if rows % g:
            continue
        rpk = rows // g                          # packed output rows per step
        if rpk % 8 != 0 and not (ng == 1 and N == 1):
            continue                             # out-block sublane dim must be 8-aligned
        # Per-step f32 live set: x(2x buffered) + uw scratch + BigH block + out(2x buffered).
        step_bytes = 4 * (2 * K * W + K * W2 + rows * K + 2 * rpk * g * W2)
        candidates.append((ng, step_bytes))
    if not candidates:
        return None
    for ng, b in candidates:                     # smallest #groups reaching >= 4 steps
        if b <= vmem_budget_bytes and N * ng >= 4:
            return ng
    fitting = [ng for ng, b in candidates if b <= vmem_budget_bytes]
    if fitting:
        return max(fitting)                      # as many steps as possible within budget
    return max(ng for ng, _ in candidates)       # nothing fits: take the smallest blocks


def _make_kernel(g: int):
    """Kernel specialized on the lane-packing factor g (static)."""

    def kernel(x_ref, bighp_ref, mwT_ref, o_ref, uw_ref):
        # x_ref    : (C*H, W)        one input image, channels stacked along rows
        # bighp_ref: (1, g, R, C*H)  folded (1x1 conv (x) height-interp) rows for
        #                            this output-channel group; lane-group jl
        #                            holds output rows r*g + jl
        # mwT_ref  : (W, 2W)         width interpolation matrix (transposed)
        # o_ref    : (R, g*2W)       lane-dense packed output block
        # uw_ref   : (C*H, 2W)       scratch: width-upsampled image; persists
        #                            across the inner (channel-group) grid axis
        jg = pl.program_id(1)

        # Width upsample once per image (the inner axis reuses the scratch;
        # the input block index is unchanged over jg, so no re-fetch either).
        @pl.when(jg == 0)
        def _():
            uw_ref[...] = jnp.dot(x_ref[...], mwT_ref[...],
                                  preferred_element_type=jnp.float32,
                                  precision=lax.Precision.HIGHEST)

        uw = uw_ref[...]
        # Height upsample + channel mix in one MXU contraction per lane group.
        # The g pieces are concatenated along lanes so the single store below
        # is full-lane-width (lane-dense out_spec).
        pieces = [jnp.dot(bighp_ref[0, jl], uw,
                          preferred_element_type=jnp.float32,
                          precision=lax.Precision.HIGHEST)
                  for jl in range(g)]
        res = pieces[0] if g == 1 else jnp.concatenate(pieces, axis=-1)
        o_ref[...] = res.astype(o_ref.dtype)

    return kernel


def scale_upsample(x_nchw: jax.Array, weight: jax.Array) -> jax.Array:
    """Forward of ScaleUpSample.

    x_nchw : (N, C, H, W) float32   (PyTorch NCHW convention)
    weight : (C, C) float32         (Conv2d 1x1 weight [out_ch, in_ch], no bias)
    returns: (N, C, 2H, 2W) float32
    """
    N, C, H, W = x_nchw.shape
    H2, W2, K = 2 * H, 2 * W, C * H

    assert H % 4 == 0, "H must be a multiple of 4 (8-sublane-aligned 2H row blocks)"
    assert K % 8 == 0 or N == 1, "C*H must be a multiple of 8 to tile over the batch"

    g = _pick_lane_packing(W2)
    ng = _pick_num_channel_groups(N, C, H, W, g)
    if ng is None and g > 1:                     # packing not expressible -> plain layout
        g = 1
        ng = _pick_num_channel_groups(N, C, H, W, g)
    assert ng is not None, "no legal channel-group tiling for these shapes"
    R = (C // ng) * H2 // g                      # packed output rows per grid step

    Mh = jnp.asarray(_bilinear_upsample_matrix(H, 2))                # (2H, H)
    MwT = jnp.asarray(_bilinear_upsample_matrix(W, 2).T.copy())      # (W, 2W)

    # Fold the 1x1 conv into the height interpolation (exact: linear ops on
    # disjoint axes):  BigH[co*2H + r, ci*H + h] = weight[co, ci] * Mh[r, h].
    # TODO(synk): for large C*H this kron is O(C^2*H^2) floats; switch the mix
    # back to a separate (C, C) MXU matmul before this becomes VMEM-relevant.
    BigH = jnp.kron(weight.astype(jnp.float32), Mh)                  # (C*2H, C*H)
    # Row-permute so lane-group jl of the packed output comes from rows r*g+jl.
    BigHp = BigH.reshape(ng, R, g, K).transpose(0, 2, 1, 3)          # (ng, g, R, K)

    # Free, contiguous reshapes only (NCHW kept, no HBM transposes).
    x_rows = x_nchw.reshape(N * K, W)

    # TODO(synk): for very large N with tiny per-image work, group several
    # images per outer grid step to amortize the ~0.35 us/step pipeline cost;
    # for very large H*W, chunk the width->height pipeline per row block so the
    # full per-image uw never has to be resident.
    out2d = pl.pallas_call(
        _make_kernel(g),
        out_shape=jax.ShapeDtypeStruct((N * C * H2 // g, g * W2), jnp.float32),
        grid_spec=pltpu.PrefetchScalarGridSpec(
            num_scalar_prefetch=0,
            grid=(N, ng),                        # demo: (2, 2) = 4 pipelined steps
            in_specs=[
                pl.BlockSpec((K, W), lambda i, j: (i, 0)),          # image i (reused over j)
                pl.BlockSpec((1, g, R, K), lambda i, j: (j, 0, 0, 0)),
                pl.BlockSpec((W, W2), lambda i, j: (0, 0)),         # constant matrix
            ],
            out_specs=pl.BlockSpec((R, g * W2), lambda i, j: (i * ng + j, 0)),
            scratch_shapes=[pltpu.VMEM((K, W2), jnp.float32)],      # per-image uw
        ),
        compiler_params=pltpu.CompilerParams(
            dimension_semantics=("parallel", "arbitrary"),
            vmem_limit_bytes=48 * 1024 * 1024),
    )(x_rows, BigHp, MwT)

    return out2d.reshape(N, C, H2, W2)


def scale_upsample_reference(x_nchw: jax.Array, weight: jax.Array) -> jax.Array:
    """Pure-JAX reference in the PyTorch order: upsample (as matrices), then 1x1 conv."""
    _, _, H, W = x_nchw.shape
    Mh = jnp.asarray(_bilinear_upsample_matrix(H, 2))
    Mw = jnp.asarray(_bilinear_upsample_matrix(W, 2))
    hi = lax.Precision.HIGHEST
    up_h = jnp.einsum("ph,nchw->ncpw", Mh, x_nchw, precision=hi)
    up = jnp.einsum("qw,ncpw->ncpq", Mw, up_h, precision=hi)
    return jnp.einsum("ncpq,dc->ndpq", up, weight, precision=hi)    # 1x1 conv, no bias


if __name__ == "__main__":
    N, C, H, W = 2, 4, 16, 16
    key = jax.random.PRNGKey(0)
    kx, kw = jax.random.split(key)
    x = jax.random.normal(kx, (N, C, H, W), dtype=jnp.float32)
    # deterministic Conv2d(C, C, 1, bias=False) weight, shape [out_ch, in_ch]
    weight = jax.random.normal(kw, (C, C), dtype=jnp.float32) * (1.0 / np.sqrt(C))

    fwd = jax.jit(scale_upsample)
    out = jax.block_until_ready(fwd(x, weight))
    assert out.shape == (N, C, 2 * H, 2 * W), out.shape

    ref = jax.block_until_ready(scale_upsample_reference(x, weight))
    np.testing.assert_allclose(np.asarray(out), np.asarray(ref), rtol=1e-4, atol=1e-4)

    print("KERNEL_OK")
</pallas_src>

<mosaic_0001>
module attributes {stable_mosaic.version = 11 : i64} {
  func.func @kernel(%arg0: i32, %arg1: i32, %arg2: memref<64x16xf32, #tpu.memory_space<vmem>>, %arg3: memref<1x4x16x64xf32, #tpu.memory_space<vmem>>, %arg4: memref<16x32xf32, #tpu.memory_space<vmem>>, %arg5: memref<16x128xf32, #tpu.memory_space<vmem>>, %arg6: memref<64x32xf32, #tpu.memory_space<vmem>>) attributes {dimension_semantics = [#tpu.dimension_semantics<parallel>, #tpu.dimension_semantics<arbitrary>], iteration_bounds = array<i64: 2, 2>, scalar_prefetch = 0 : i64, scratch_operands = 1 : i64, tpu.core_type = #tpu.core_type<tc>, window_params = [{transform_indices = @transform_0, window_bounds = array<i64: 64, 16>}, {transform_indices = @transform_1, window_bounds = array<i64: 1, 4, 16, 64>}, {pipeline_mode = #tpu.pipeline_mode<synchronous>, transform_indices = @transform_2, window_bounds = array<i64: 16, 32>}, {transform_indices = @transform_3, window_bounds = array<i64: 16, 128>}]} {
    %c0_i32 = arith.constant 0 : i32
    %0 = arith.cmpi eq, %arg1, %c0_i32 : i32
    %1 = arith.extui %0 : i1 to i32
    %c0_i32_0 = arith.constant 0 : i32
    %2 = arith.cmpi ne, %1, %c0_i32_0 : i32
    scf.if %2 {
      %c0_20 = arith.constant 0 : index
      %c0_21 = arith.constant 0 : index
      %18 = vector.load %arg2[%c0_20, %c0_21] : memref<64x16xf32, #tpu.memory_space<vmem>>, vector<64x16xf32>
      %c0_22 = arith.constant 0 : index
      %c0_23 = arith.constant 0 : index
      %19 = vector.load %arg4[%c0_22, %c0_23] : memref<16x32xf32, #tpu.memory_space<vmem>>, vector<16x32xf32>
      %cst_24 = arith.constant dense<0.000000e+00> : vector<64x32xf32>
      %20 = tpu.matmul %18, %19, %cst_24 {dimension_numbers = #tpu.dot_dimension_numbers<[1], [0], [0], [1], [0, 0, 1, 1], [], []>, precision = #tpu.contract_precision<fp32>} : vector<64x16xf32>, vector<16x32xf32>, vector<64x32xf32> -> vector<64x32xf32>
      %c0_25 = arith.constant 0 : index
      %c0_26 = arith.constant 0 : index
      %21 = vector.load %arg6[%c0_25, %c0_26] : memref<64x32xf32, #tpu.memory_space<vmem>>, vector<64x32xf32>
      tpu.vector_store %arg6[%c0_25, %c0_26], %20 {strides = array<i32>} : memref<64x32xf32, #tpu.memory_space<vmem>>, vector<64x32xf32>,
    } else {
    }
    %c0 = arith.constant 0 : index
    %c0_1 = arith.constant 0 : index
    %3 = vector.load %arg6[%c0, %c0_1] : memref<64x32xf32, #tpu.memory_space<vmem>>, vector<64x32xf32>
    %c0_2 = arith.constant 0 : index
    %c0_3 = arith.constant 0 : index
    %c0_4 = arith.constant 0 : index
    %c0_5 = arith.constant 0 : index
    %4 = vector.load %arg3[%c0_2, %c0_3, %c0_4, %c0_5] : memref<1x4x16x64xf32, #tpu.memory_space<vmem>>, vector<1x1x16x64xf32>
    %5 = vector.shape_cast %4 : vector<1x1x16x64xf32> to vector<16x64xf32>
    %cst = arith.constant dense<0.000000e+00> : vector<16x32xf32>
    %6 = tpu.matmul %5, %3, %cst {dimension_numbers = #tpu.dot_dimension_numbers<[1], [0], [0], [1], [0, 0, 1, 1], [], []>, precision = #tpu.contract_precision<fp32>} : vector<16x64xf32>, vector<64x32xf32>, vector<16x32xf32> -> vector<16x32xf32>
    %c0_6 = arith.constant 0 : index
    %c1 = arith.constant 1 : index
    %c0_7 = arith.constant 0 : index
    %c0_8 = arith.constant 0 : index
    %7 = vector.load %arg3[%c0_6, %c1, %c0_7, %c0_8] : memref<1x4x16x64xf32, #tpu.memory_space<vmem>>, vector<1x1x16x64xf32>
    %8 = vector.shape_cast %7 : vector<1x1x16x64xf32> to vector<16x64xf32>
    %cst_9 = arith.constant dense<0.000000e+00> : vector<16x32xf32>
    %9 = tpu.matmul %8, %3, %cst_9 {dimension_numbers = #tpu.dot_dimension_numbers<[1], [0], [0], [1], [0, 0, 1, 1], [], []>, precision = #tpu.contract_precision<fp32>} : vector<16x64xf32>, vector<64x32xf32>, vector<16x32xf32> -> vector<16x32xf32>
    %c0_10 = arith.constant 0 : index
    %c2 = arith.constant 2 : index
    %c0_11 = arith.constant 0 : index
    %c0_12 = arith.constant 0 : index
    %10 = vector.load %arg3[%c0_10, %c2, %c0_11, %c0_12] : memref<1x4x16x64xf32, #tpu.memory_space<vmem>>, vector<1x1x16x64xf32>
    %11 = vector.shape_cast %10 : vector<1x1x16x64xf32> to vector<16x64xf32>
    %cst_13 = arith.constant dense<0.000000e+00> : vector<16x32xf32>
    %12 = tpu.matmul %11, %3, %cst_13 {dimension_numbers = #tpu.dot_dimension_numbers<[1], [0], [0], [1], [0, 0, 1, 1], [], []>, precision = #tpu.contract_precision<fp32>} : vector<16x64xf32>, vector<64x32xf32>, vector<16x32xf32> -> vector<16x32xf32>
    %c0_14 = arith.constant 0 : index
    %c3 = arith.constant 3 : index
    %c0_15 = arith.constant 0 : index
    %c0_16 = arith.constant 0 : index
    %13 = vector.load %arg3[%c0_14, %c3, %c0_15, %c0_16] : memref<1x4x16x64xf32, #tpu.memory_space<vmem>>, vector<1x1x16x64xf32>
    %14 = vector.shape_cast %13 : vector<1x1x16x64xf32> to vector<16x64xf32>
    %cst_17 = arith.constant dense<0.000000e+00> : vector<16x32xf32>
    %15 = tpu.matmul %14, %3, %cst_17 {dimension_numbers = #tpu.dot_dimension_numbers<[1], [0], [0], [1], [0, 0, 1, 1], [], []>, precision = #tpu.contract_precision<fp32>} : vector<16x64xf32>, vector<64x32xf32>, vector<16x32xf32> -> vector<16x32xf32>
    %16 = tpu.concatenate %6, %9, %12, %15 in 1 : vector<16x32xf32>, vector<16x32xf32>, vector<16x32xf32>, vector<16x32xf32> -> vector<16x128xf32>
    %c0_18 = arith.constant 0 : index
    %c0_19 = arith.constant 0 : index
    %17 = vector.load %arg5[%c0_18, %c0_19] : memref<16x128xf32, #tpu.memory_space<vmem>>, vector<16x128xf32>
    tpu.vector_store %arg5[%c0_18, %c0_19], %16 {strides = array<i32>} : memref<16x128xf32, #tpu.memory_space<vmem>>, vector<16x128xf32>,
    return
  }
  func.func @transform_0(%arg0: i32, %arg1: i32) -> (i32, i32) {
    %c0_i32 = arith.constant 0 : i32
    %c0_i32_0 = arith.constant 0 : i32
    return %arg0, %c0_i32 : i32, i32
  }
  func.func @transform_1(%arg0: i32, %arg1: i32) -> (i32, i32, i32, i32) {
    %c0_i32 = arith.constant 0 : i32
    %c0_i32_0 = arith.constant 0 : i32
    %c0_i32_1 = arith.constant 0 : i32
    %c0_i32_2 = arith.constant 0 : i32
    return %arg1, %c0_i32, %c0_i32_0, %c0_i32_1 : i32, i32, i32, i32
  }
  func.func @transform_2(%arg0: i32, %arg1: i32) -> (i32, i32) {
    %c0_i32 = arith.constant 0 : i32
    %c0_i32_0 = arith.constant 0 : i32
    %c0_i32_1 = arith.constant 0 : i32
    return %c0_i32, %c0_i32_0 : i32, i32
  }
  func.func @transform_3(%arg0: i32, %arg1: i32) -> (i32, i32) {
    %c2_i32 = arith.constant 2 : i32
    %0 = arith.muli %arg0, %c2_i32 : i32
    %1 = arith.addi %0, %arg1 : i32
    %c0_i32 = arith.constant 0 : i32
    %c0_i32_0 = arith.constant 0 : i32
    return %1, %c0_i32 : i32, i32
  }
}

</mosaic_0001>

<llo_original>
// kernel: scale_upsample.1
$region0: #{scale_upsample.1}
  #allocation0 [shape = 'u32[]', space=smem, size = 0x4, offset = 0x4, fixed_abs, tag = 'smem constant byte address 0x4 - core index']
  #allocation1 [shape = 'u32[144,128]{1,0:T(1,128)}', space=vmem, size = 0x12000, scoped, tag = 'internal scratch']
  #allocation2 [shape = 'f32[64,32]{1,0:T(8,128)}', space=vmem, size = 0x8000, scoped, tag = 'scratch operand']
  %s0 = inlined_call_operand.vmem [shape: f32[128,16], index: 0, kind: input, shape index: {}]
  %s1 = inlined_call_operand.vmem [shape: f32[2,4,16,64], index: 1, kind: input, shape index: {}]
  %s2 = inlined_call_operand.vmem [shape: f32[16,32], index: 2, kind: input, shape index: {}]
  %s3 = inlined_call_operand.vmem [shape: f32[64,128], index: 3, kind: output, shape index: {}]
  %s4 = sld [smem:[#allocation0]]
  $region49: #{scale_upsample.1} parent=0
    _
  %s6 = ssub.s32 1, %s4
  %s7 = scalar_select 0, %s6, %s4
  loop: start=0, step=1, limit=6
  $region2: #{scale_upsample.1} parent=0 // loop_pre_header
    _
  $region3: #{scale_upsample.1} parent=0 // loop_header
    %s9 = sphi 0, %s13
    %p10 = scmp.ge.s32.totalorder %s9, 6
    %s16 = sphi 0, %s28
    %s17 = sphi 0, %s24
    %s18 = sphi 0, %s16
    %s19 = sphi 0, %s17
    %s20 = sphi 0, %s18
    %s21 = sphi 0, %s19
    %s31 = sphi 0, %s33
    %s34 = sphi 0, %s31
    %s35 = sphi 0, %s34
    %s51 = sphi 0, %s35
    %s57 = sphi 0, %s59
    %s60 = sphi 0, %s57
    %s61 = sphi 0, %s60
    %s77 = sphi 0, %s61
    %s81 = sphi 0, %s81
    %s83 = sphi 0, %s81
    %s84 = sphi 0, %s83
    %s98 = sphi 0, %s84
    %s108 = sphi 0, %s110
    %s111 = sphi 0, %s108
    %s112 = sphi 0, %s111
    %s128 = sphi 0, %s112
  $region4: #{scale_upsample.1} parent=0 // loop_header_branch
    %12 = sbr.rel (%p10) target = $region8
  $region5: #{scale_upsample.1} parent=0 // loop_body
    %s14 = ssub.s32 %s9, 1
    %s15 = ssub.s32 %s9, 2
    %s22 = sadd.s32 1, %s17
    %p23 = scmp.ge.s32.totalorder %s22, 2
    %s24 = scalar_select %p23, 0, %s22
    %s25 = sadd.s32 1, %s16
    %s26 = scalar_select %p23, %s25, %s16
    %p27 = scmp.ge.s32.totalorder %s26, 2
    %s28 = scalar_select %p27, 0, %s26
    %s29 = ssub.s32 %s16, %s28
    %p30 = scmp.eq.s32.totalorder %s29, 0
    %s32 = sadd.s32 %s31, 1
    %s33 = scalar_select %p30, %s31, %s32
    %p36 = pneg %p30
    %p37 = scmp.eq.s32.totalorder %s9, 3
    %p38 = por %p36, %p37
    %p39 = scmp.ne.s32.totalorder %s31, %s34
    %p40 = scmp.eq.s32.totalorder %s9, 0
    %p41 = por %p39, %p40
    %p42 = scmp.ne.s32.totalorder %s31, %s34
    %p43 = scmp.eq.s32.totalorder %s14, 3
    %p44 = por %p42, %p43
    %p45 = scmp.ne.s32.totalorder %s34, %s35
    %p46 = scmp.eq.s32.totalorder %s14, 0
    %p47 = por %p45, %p46
    %p48 = scmp.ne.s32.totalorder %s34, %s35
    %p49 = scmp.eq.s32.totalorder %s15, 3
    %p50 = por %p48, %p49
    %p52 = scmp.ne.s32.totalorder %s35, %s51
    %p53 = scmp.eq.s32.totalorder %s15, 0
    %p54 = por %p52, %p53
    %s55 = ssub.s32 %s17, %s24
    %p56 = scmp.eq.s32.totalorder %s55, 0
    %s58 = sadd.s32 %s57, 1
    %s59 = scalar_select %p56, %s57, %s58
    %p62 = pneg %p56
    %p63 = scmp.eq.s32.totalorder %s9, 3
    %p64 = por %p62, %p63
    %p65 = scmp.ne.s32.totalorder %s57, %s60
    %p66 = scmp.eq.s32.totalorder %s9, 0
    %p67 = por %p65, %p66
    %p68 = scmp.ne.s32.totalorder %s57, %s60
    %p69 = scmp.eq.s32.totalorder %s14, 3
    %p70 = por %p68, %p69
    %p71 = scmp.ne.s32.totalorder %s60, %s61
    %p72 = scmp.eq.s32.totalorder %s14, 0
    %p73 = por %p71, %p72
    %p74 = scmp.ne.s32.totalorder %s60, %s61
    %p75 = scmp.eq.s32.totalorder %s15, 3
    %p76 = por %p74, %p75
    %p78 = scmp.ne.s32.totalorder %s61, %s77
    %p79 = scmp.eq.s32.totalorder %s15, 0
    %p80 = por %p78, %p79
    %s82 = sadd.s32 %s81, 1
    %p85 = scmp.eq.s32.totalorder %s9, 3
    %p86 = scmp.ne.s32.totalorder %s81, %s83
    %p87 = scmp.eq.s32.totalorder %s9, 0
    %p88 = por %p86, %p87
    %p89 = scmp.ne.s32.totalorder %s81, %s83
    %p90 = scmp.eq.s32.totalorder %s14, 3
    %p91 = por %p89, %p90
    %p92 = scmp.ne.s32.totalorder %s83, %s84
    %p93 = scmp.eq.s32.totalorder %s14, 0
    %p94 = por %p92, %p93
    %p95 = scmp.ne.s32.totalorder %s83, %s84
    %p96 = scmp.eq.s32.totalorder %s15, 3
    %p97 = por %p95, %p96
    %p99 = scmp.ne.s32.totalorder %s84, %s98
    %p100 = scmp.eq.s32.totalorder %s15, 0
    %p101 = por %p99, %p100
    %s102 = smul.u32 %s16, 2
    %s103 = sadd.s32 %s102, %s17
    %s104 = smul.u32 %s28, 2
    %s105 = sadd.s32 %s104, %s24
    %s106 = ssub.s32 %s103, %s105
    %p107 = scmp.eq.s32.totalorder %s106, 0
    %s109 = sadd.s32 %s108, 1
    %s110 = scalar_select %p107, %s108, %s109
    %p113 = pneg %p107
    %p114 = scmp.eq.s32.totalorder %s9, 3
    %p115 = por %p113, %p114
    %p116 = scmp.ne.s32.totalorder %s108, %s111
    %p117 = scmp.eq.s32.totalorder %s9, 0
    %p118 = por %p116, %p117
    %p119 = scmp.ne.s32.totalorder %s108, %s111
    %p120 = scmp.eq.s32.totalorder %s14, 3
    %p121 = por %p119, %p120
    %p122 = scmp.ne.s32.totalorder %s111, %s112
    %p123 = scmp.eq.s32.totalorder %s14, 0
    %p124 = por %p122, %p123
    %p125 = scmp.ne.s32.totalorder %s111, %s112
    %p126 = scmp.eq.s32.totalorder %s15, 3
    %p127 = por %p125, %p126
    %p129 = scmp.ne.s32.totalorder %s112, %s128
    %p130 = scmp.eq.s32.totalorder %s15, 0
    %p131 = por %p129, %p130
    %p132 = scmp.le.s32.totalorder 1, %s9
    %p133 = scmp.lt.s32.totalorder %s9, 5
    %p134 = pnand %p132, %p133
    %p135 = pneg %p134
    // Predicated region
    $region9: #{scale_upsample.1} parent=5 // pred_check
      _
    $region10: #{scale_upsample.1} parent=5 // pred_check_branch
      %137 = sbr.rel (%p134) target = $region12
    $region11: #{scale_upsample.1} parent=5 // pred_region
      %s138 = ssub.s32 %s9, 1
      // Predicated region
      $region13: #{scale_upsample.1} parent=11 // pred_check
        %p139 = pneg %p94
      $region14: #{scale_upsample.1} parent=11 // pred_check_branch
        %141 = sbr.rel (%p139) target = $region16
      $region15: #{scale_upsample.1} parent=11 // pred_region
        _
      $region16: #{scale_upsample.1} parent=11 // pred_fallthru
        _
    $region12: #{scale_upsample.1} parent=5 // pred_fallthru
      _
    %p142 = scmp.lt.s32.totalorder %s9, 4
    // Predicated region
    $region17: #{scale_upsample.1} parent=5 // pred_check
      %p143 = pneg %p142
    $region18: #{scale_upsample.1} parent=5 // pred_check_branch
      %145 = sbr.rel (%p143) target = $region20
    $region19: #{scale_upsample.1} parent=5 // pred_region
      // Predicated region
      $region21: #{scale_upsample.1} parent=19 // pred_check
        %p146 = pneg %p41
      $region22: #{scale_upsample.1} parent=19 // pred_check_branch
        %148 = sbr.rel (%p146) target = $region24
      $region23: #{scale_upsample.1} parent=19 // pred_region
        %s149 = smul.u32 8, %s16
        %p150 = scmp.lt.s32.totalorder %s149, 15
        %s151 = scalar_select %p150, %s149, 15
        %s152 = smul.addr %s151, 8
        %s153 = scalar_lea.vmem %s0, %s152
        %s154 = smul.u32 8, %s16
      $region24: #{scale_upsample.1} parent=19 // pred_fallthru
        _
      // Predicated region
      $region25: #{scale_upsample.1} parent=19 // pred_check
        %p155 = pneg %p67
      $region26: #{scale_upsample.1} parent=19 // pred_check_branch
        %157 = sbr.rel (%p155) target = $region28
      $region27: #{scale_upsample.1} parent=19 // pred_region
        %p158 = scmp.lt.s32.totalorder %s17, 1
        %s159 = scalar_select %p158, %s17, 1
        %s160 = smul.addr %s159, 8
        %s161 = smul.addr %s160, 8
        %s162 = scalar_lea.vmem %s1, %s161
      $region28: #{scale_upsample.1} parent=19 // pred_fallthru
        _
    $region20: #{scale_upsample.1} parent=5 // pred_fallthru
      _
    %p163 = scmp.le.s32.totalorder 1, %s9
    %p164 = scmp.lt.s32.totalorder %s9, 5
    %p165 = pnand %p163, %p164
    %p166 = pneg %p165
    // Predicated region
    $region29: #{scale_upsample.1} parent=5 // pred_check
      _
    $region30: #{scale_upsample.1} parent=5 // pred_check_branch
      %168 = sbr.rel (%p165) target = $region32
    $region31: #{scale_upsample.1} parent=5 // pred_region
      %s169 = ssub.s32 %s9, 1
      %s170 = smul.u32 8, %s18
      %p171 = scmp.lt.s32.totalorder %s170, 15
      %s172 = scalar_select %p171, %s170, 15
      %s173 = smul.addr %s172, 8
      %s174 = scalar_lea.vmem %s0, %s173
      %p175 = pneg %p47
      %p176 = pneg %p44
      %p177 = scmp.lt.s32.totalorder %s19, 1
      %s178 = scalar_select %p177, %s19, 1
      %s179 = smul.addr %s178, 8
      %s180 = smul.addr %s179, 8
      %s181 = scalar_lea.vmem %s1, %s180
      %p182 = pneg %p73
      %p183 = pneg %p70
      %p184 = pneg %p94
      %p185 = pneg %p91
      %p186 = pneg %p124
      %p187 = pneg %p121
      %s188 = smul.u32 %s18, 2
      %s189 = sadd.s32 %s188, %s19
      %s190 = smul.u32 2, %s189
      %p191 = scmp.lt.s32.totalorder %s190, 7
      %s192 = scalar_select %p191, %s190, 7
      %s193 = smul.addr %s192, 8
      %s194 = scalar_lea.vmem %s3, %s193
      %s195 = smul.u32 8, %s18
      %p196 = scmp.lt.s32.totalorder %s195, 15
      %s197 = scalar_select %p196, %s195, 15
      %s198 = smul.addr %s197, 8
      %s199 = scalar_lea.vmem %s0, %s198
      %s200 = smul.u32 8, %s18
      %p201 = scmp.lt.s32.totalorder %s19, 1
      %s202 = scalar_select %p201, %s19, 1
      %s203 = smul.addr %s202, 8
      %s204 = smul.addr %s203, 8
      %s205 = scalar_lea.vmem %s1, %s204
      %s206 = smul.u32 %s18, 2
      %s207 = sadd.s32 %s206, %s19
      %s208 = smul.u32 2, %s207
      %p209 = scmp.lt.s32.totalorder %s208, 7
      %s210 = scalar_select %p209, %s208, 7
      %s211 = smul.addr %s210, 8
      %s212 = scalar_lea.vmem %s3, %s211
      %s213 = smul.u32 %s18, 2
      %s214 = sadd.s32 %s213, %s19
      %s215 = smul.u32 2, %s214
      %p216 = scmp.eq.s32.totalorder %s19, 0
      // Predicated region
      $region33: #{scale_upsample.1} parent=31 // pred_check
        %p217 = pneg %p216
      $region34: #{scale_upsample.1} parent=31 // pred_check_branch
        %219 = sbr.rel (%p217) target = $region36
      $region35: #{scale_upsample.1} parent=31 // pred_region
        %v220 = vld [vmem:[%s199] sm:$0xff]
        %v221 = vld [vmem:[%s199 + $0x8] sm:$0xff]
        %v222 = vld [vmem:[%s199 + $0x10] sm:$0xff]
        %v223 = vld [vmem:[%s199 + $0x18] sm:$0xff]
        %v224 = vld [vmem:[%s199 + $0x20] sm:$0xff]
        %v225 = vld [vmem:[%s199 + $0x28] sm:$0xff]
        %v226 = vld [vmem:[%s199 + $0x30] sm:$0xff]
        %v227 = vld [vmem:[%s199 + $0x38] sm:$0xff]
        %v228 = vld [vmem:[%s2] sm:$0xff]
        %v229 = vld [vmem:[%s2 + $0x8] sm:$0xff]
        %vm230 = vcmask 130048
        %v232 = vsel %vm230, %v220, 0
        %v235 = vsel %vm230, %v221, 0
        %v238 = vsel %vm230, %v222, 0
        %v241 = vsel %vm230, %v223, 0
        %v244 = vsel %vm230, %v224, 0
        %v247 = vsel %vm230, %v225, 0
        %v250 = vsel %vm230, %v226, 0
        %v253 = vsel %vm230, %v227, 0
        %255 = vmatprep.subr.mxu0 0.0
        %256 = vmatpush1.msra.mxu0 0.0
        %257 = vmatprep.subr.mxu0 0.0
        %258 = vmatpush1.msra.mxu0 0.0
        %259 = vmatprep.subr.mxu0 0.0
        %260 = vmatpush1.msra.mxu0 0.0
        %261 = vmatprep.subr.mxu0 0.0
        %262 = vmatpush1.msra.mxu0 0.0
        %263 = vmatprep.subr.mxu0 0.0
        %264 = vmatpush1.msra.mxu0 0.0
        %265 = vmatprep.subr.mxu0 0.0
        %266 = vmatpush1.msra.mxu0 0.0
        %267 = vmatprep.subr.mxu0 0.0
        %268 = vmatpush1.msra.mxu0 0.0
        %269 = vmatprep.subr.mxu0 0.0
        %270 = vmatpush1.msra.mxu0 0.0
        %271 = vmatprep.subr.mxu0 0.0
        %272 = vmatpush1.msra.mxu0 0.0
        %273 = vmatprep.subr.mxu0 0.0
        %274 = vmatpush1.msra.mxu0 0.0
        %275 = vmatprep.subr.mxu0 0.0
        %276 = vmatpush1.msra.mxu0 0.0
        %277 = vmatprep.subr.mxu0 0.0
        %278 = vmatpush1.msra.mxu0 0.0
        %279 = vmatprep.subr.mxu0 0.0
        %280 = vmatpush1.msra.mxu0 0.0
        %281 = vmatprep.subr.mxu0 0.0
        %282 = vmatpush1.msra.mxu0 0.0
        %283 = vmatprep.subr.mxu0 0.0
        %v284 = vand.u32 %v229, 4294901760
        %285 = vmatpush1.msra.mxu0 %v284
        %286 = vmatprep.subr.mxu0 0.0
        %v287 = vand.u32 %v228, 4294901760
        %288 = vmatpush1.msra.mxu0 %v287
        %289 = vmatprep.subr.mxu0 0.0
        %290 = vmatpush2.msra.mxu0 0.0
        %291 = vmatprep.subr.mxu0 0.0
        %292 = vmatpush2.msra.mxu0 0.0
        %293 = vmatprep.subr.mxu0 0.0
        %294 = vmatpush2.msra.mxu0 0.0
        %295 = vmatprep.subr.mxu0 0.0
        %296 = vmatpush2.msra.mxu0 0.0
        %297 = vmatprep.subr.mxu0 0.0
        %298 = vmatpush2.msra.mxu0 0.0
        %299 = vmatprep.subr.mxu0 0.0
        %300 = vmatpush2.msra.mxu0 0.0
        %301 = vmatprep.subr.mxu0 0.0
        %302 = vmatpush2.msra.mxu0 0.0
        %303 = vmatprep.subr.mxu0 0.0
        %304 = vmatpush2.msra.mxu0 0.0
        %305 = vmatprep.subr.mxu0 0.0
        %306 = vmatpush2.msra.mxu0 0.0
        %307 = vmatprep.subr.mxu0 0.0
        %308 = vmatpush2.msra.mxu0 0.0
        %309 = vmatprep.subr.mxu0 0.0
        %310 = vmatpush2.msra.mxu0 0.0
        %311 = vmatprep.subr.mxu0 0.0
        %312 = vmatpush2.msra.mxu0 0.0
        %313 = vmatprep.subr.mxu0 0.0
        %314 = vmatpush2.msra.mxu0 0.0
        %315 = vmatprep.subr.mxu0 0.0
        %316 = vmatpush2.msra.mxu0 0.0
        %317 = vmatprep.subr.mxu0 0.0
        %318 = vmatpush2.msra.mxu0 0.0
        %319 = vmatprep.subr.mxu0 0.0
        %320 = vmatpush2.msra.mxu0 0.0
        %321 = vmatprep.mubr.f32.mxu0 0.0
        %v322 = vand.u32 %v232, 4294901760
        %v323 = vsub.f32 %v232, %v322
        %v324 = vand.u32 %v323, 4294901760
        %v325 = vsub.f32 %v323, %v324
        %v326 = vand.u32 %v325, 4294901760
        %327 = vmatmul.mubr.f32.gmra.mxu0 %v326
        %v328 = vpop.f32.mrf.mxu0
        %v329 = vadd.f32 0.0, %v328
        %v330 = vpop.f32.mrf.mxu0
        %331 = vmatprep.mubr.f32.mxu0 0.0
        %v332 = vand.u32 %v235, 4294901760
        %v333 = vsub.f32 %v235, %v332
        %v334 = vand.u32 %v333, 4294901760
        %v335 = vsub.f32 %v333, %v334
        %v336 = vand.u32 %v335, 4294901760
        %337 = vmatmul.mubr.f32.gmra.mxu0 %v336
        %v338 = vpop.f32.mrf.mxu0
        %v339 = vadd.f32 0.0, %v338
        %v340 = vpop.f32.mrf.mxu0
        %341 = vmatprep.mubr.f32.mxu0 0.0
        %v342 = vand.u32 %v238, 4294901760
        %v343 = vsub.f32 %v238, %v342
        %v344 = vand.u32 %v343, 4294901760
        %v345 = vsub.f32 %v343, %v344
        %v346 = vand.u32 %v345, 4294901760
        %347 = vmatmul.mubr.f32.gmra.mxu0 %v346
        %v348 = vpop.f32.mrf.mxu0
        %v349 = vadd.f32 0.0, %v348
        %v350 = vpop.f32.mrf.mxu0
        %351 = vmatprep.mubr.f32.mxu0 0.0
        %v352 = vand.u32 %v241, 4294901760
        %v353 = vsub.f32 %v241, %v352
        %v354 = vand.u32 %v353, 4294901760
        %v355 = vsub.f32 %v353, %v354
        %v356 = vand.u32 %v355, 4294901760
        %357 = vmatmul.mubr.f32.gmra.mxu0 %v356
        %v358 = vpop.f32.mrf.mxu0
        %v359 = vadd.f32 0.0, %v358
        %v360 = vpop.f32.mrf.mxu0
        %361 = vmatprep.mubr.f32.mxu0 0.0
        %v362 = vand.u32 %v244, 4294901760
        %v363 = vsub.f32 %v244, %v362
        %v364 = vand.u32 %v363, 4294901760
        %v365 = vsub.f32 %v363, %v364
        %v366 = vand.u32 %v365, 4294901760
        %367 = vmatmul.mubr.f32.gmra.mxu0 %v366
        %v368 = vpop.f32.mrf.mxu0
        %v369 = vadd.f32 0.0, %v368
        %v370 = vpop.f32.mrf.mxu0
        %371 = vmatprep.mubr.f32.mxu0 0.0
        %v372 = vand.u32 %v247, 4294901760
        %v373 = vsub.f32 %v247, %v372
        %v374 = vand.u32 %v373, 4294901760
        %v375 = vsub.f32 %v373, %v374
        %v376 = vand.u32 %v375, 4294901760
        %377 = vmatmul.mubr.f32.gmra.mxu0 %v376
        %v378 = vpop.f32.mrf.mxu0
        %v379 = vadd.f32 0.0, %v378
        %v380 = vpop.f32.mrf.mxu0
        %381 = vmatprep.mubr.f32.mxu0 0.0
        %v382 = vand.u32 %v250, 4294901760
        %v383 = vsub.f32 %v250, %v382
        %v384 = vand.u32 %v383, 4294901760
        %v385 = vsub.f32 %v383, %v384
        %v386 = vand.u32 %v385, 4294901760
        %387 = vmatmul.mubr.f32.gmra.mxu0 %v386
        %v388 = vpop.f32.mrf.mxu0
        %v389 = vadd.f32 0.0, %v388
        %v390 = vpop.f32.mrf.mxu0
        %391 = vmatprep.mubr.f32.mxu0 0.0
        %v392 = vand.u32 %v253, 4294901760
        %v393 = vsub.f32 %v253, %v392
        %v394 = vand.u32 %v393, 4294901760
        %v395 = vsub.f32 %v393, %v394
        %v396 = vand.u32 %v395, 4294901760
        %397 = vmatmul.mubr.f32.gmra.mxu0 %v396
        %v398 = vpop.f32.mrf.mxu0
        %v399 = vadd.f32 0.0, %v398
        %v400 = vpop.f32.mrf.mxu0
        %401 = vdwg.mxu0
        %402 = vmatprep.subr.mxu0 0.0
        %403 = vmatpush1.msra.mxu0 0.0
        %404 = vmatprep.subr.mxu0 0.0
        %405 = vmatpush1.msra.mxu0 0.0
        %406 = vmatprep.subr.mxu0 0.0
        %407 = vmatpush1.msra.mxu0 0.0
        %408 = vmatprep.subr.mxu0 0.0
        %409 = vmatpush1.msra.mxu0 0.0
        %410 = vmatprep.subr.mxu0 0.0
        %411 = vmatpush1.msra.mxu0 0.0
        %412 = vmatprep.subr.mxu0 0.0
        %413 = vmatpush1.msra.mxu0 0.0
        %414 = vmatprep.subr.mxu0 0.0
        %415 = vmatpush1.msra.mxu0 0.0
        %416 = vmatprep.subr.mxu0 0.0
        %417 = vmatpush1.msra.mxu0 0.0
        %418 = vmatprep.subr.mxu0 0.0
        %419 = vmatpush1.msra.mxu0 0.0
        %420 = vmatprep.subr.mxu0 0.0
        %421 = vmatpush1.msra.mxu0 0.0
        %422 = vmatprep.subr.mxu0 0.0
        %423 = vmatpush1.msra.mxu0 0.0
        %424 = vmatprep.subr.mxu0 0.0
        %425 = vmatpush1.msra.mxu0 0.0
        %426 = vmatprep.subr.mxu0 0.0
        %427 = vmatpush1.msra.mxu0 0.0
        %428 = vmatprep.subr.mxu0 0.0
        %429 = vmatpush1.msra.mxu0 0.0
        %430 = vmatprep.subr.mxu0 0.0
        %v431 = vand.u32 %v229, 4294901760
        %v432 = vsub.f32 %v229, %v431
        %v433 = vand.u32 %v432, 4294901760
        %v434 = vsub.f32 %v432, %v433
        %v435 = vand.u32 %v434, 4294901760
        %436 = vmatpush1.msra.mxu0 %v435
        %437 = vmatprep.subr.mxu0 0.0
        %v438 = vand.u32 %v228, 4294901760
        %v439 = vsub.f32 %v228, %v438
        %v440 = vand.u32 %v439, 4294901760
        %v441 = vsub.f32 %v439, %v440
        %v442 = vand.u32 %v441, 4294901760
        %443 = vmatpush1.msra.mxu0 %v442
        %444 = vmatprep.subr.mxu0 0.0
        %445 = vmatpush2.msra.mxu0 0.0
        %446 = vmatprep.subr.mxu0 0.0
        %447 = vmatpush2.msra.mxu0 0.0
        %448 = vmatprep.subr.mxu0 0.0
        %449 = vmatpush2.msra.mxu0 0.0
        %450 = vmatprep.subr.mxu0 0.0
        %451 = vmatpush2.msra.mxu0 0.0
        %452 = vmatprep.subr.mxu0 0.0
        %453 = vmatpush2.msra.mxu0 0.0
        %454 = vmatprep.subr.mxu0 0.0
        %455 = vmatpush2.msra.mxu0 0.0
        %456 = vmatprep.subr.mxu0 0.0
        %457 = vmatpush2.msra.mxu0 0.0
        %458 = vmatprep.subr.mxu0 0.0
        %459 = vmatpush2.msra.mxu0 0.0
        %460 = vmatprep.subr.mxu0 0.0
        %461 = vmatpush2.msra.mxu0 0.0
        %462 = vmatprep.subr.mxu0 0.0
        %463 = vmatpush2.msra.mxu0 0.0
        %464 = vmatprep.subr.mxu0 0.0
        %465 = vmatpush2.msra.mxu0 0.0
        %466 = vmatprep.subr.mxu0 0.0
        %467 = vmatpush2.msra.mxu0 0.0
        %468 = vmatprep.subr.mxu0 0.0
        %469 = vmatpush2.msra.mxu0 0.0
        %470 = vmatprep.subr.mxu0 0.0
        %471 = vmatpush2.msra.mxu0 0.0
        %472 = vmatprep.subr.mxu0 0.0
        %473 = vmatpush2.msra.mxu0 0.0
        %474 = vmatprep.subr.mxu0 0.0
        %475 = vmatpush2.msra.mxu0 0.0
        %476 = vmatprep.mubr.f32.mxu0 0.0
        %v477 = vand.u32 %v232, 4294901760
        %478 = vmatmul.mubr.f32.gmra.mxu0 %v477
        %v479 = vpop.f32.mrf.mxu0
        %v480 = vadd.f32 %v329, %v479
        %v481 = vpop.f32.mrf.mxu0
        %482 = vmatprep.mubr.f32.mxu0 0.0
        %v483 = vand.u32 %v235, 4294901760
        %484 = vmatmul.mubr.f32.gmra.mxu0 %v483
        %v485 = vpop.f32.mrf.mxu0
        %v486 = vadd.f32 %v339, %v485
        %v487 = vpop.f32.mrf.mxu0
        %488 = vmatprep.mubr.f32.mxu0 0.0
        %v489 = vand.u32 %v238, 4294901760
        %490 = vmatmul.mubr.f32.gmra.mxu0 %v489
        %v491 = vpop.f32.mrf.mxu0
        %v492 = vadd.f32 %v349, %v491
        %v493 = vpop.f32.mrf.mxu0
        %494 = vmatprep.mubr.f32.mxu0 0.0
        %v495 = vand.u32 %v241, 4294901760
        %496 = vmatmul.mubr.f32.gmra.mxu0 %v495
        %v497 = vpop.f32.mrf.mxu0
        %v498 = vadd.f32 %v359, %v497
        %v499 = vpop.f32.mrf.mxu0
        %500 = vmatprep.mubr.f32.mxu0 0.0
        %v501 = vand.u32 %v244, 4294901760
        %502 = vmatmul.mubr.f32.gmra.mxu0 %v501
        %v503 = vpop.f32.mrf.mxu0
        %v504 = vadd.f32 %v369, %v503
        %v505 = vpop.f32.mrf.mxu0
        %506 = vmatprep.mubr.f32.mxu0 0.0
        %v507 = vand.u32 %v247, 4294901760
        %508 = vmatmul.mubr.f32.gmra.mxu0 %v507
        %v509 = vpop.f32.mrf.mxu0
        %v510 = vadd.f32 %v379, %v509
        %v511 = vpop.f32.mrf.mxu0
        %512 = vmatprep.mubr.f32.mxu0 0.0
        %v513 = vand.u32 %v250, 4294901760
        %514 = vmatmul.mubr.f32.gmra.mxu0 %v513
        %v515 = vpop.f32.mrf.mxu0
        %v516 = vadd.f32 %v389, %v515
        %v517 = vpop.f32.mrf.mxu0
        %518 = vmatprep.mubr.f32.mxu0 0.0
        %v519 = vand.u32 %v253, 4294901760
        %520 = vmatmul.mubr.f32.gmra.mxu0 %v519
        %v521 = vpop.f32.mrf.mxu0
        %v522 = vadd.f32 %v399, %v521
        %v523 = vpop.f32.mrf.mxu0
        %524 = vdwg.mxu0
        %525 = vmatprep.subr.mxu0 0.0
        %526 = vmatpush1.msra.mxu0 0.0
        %527 = vmatprep.subr.mxu0 0.0
        %528 = vmatpush1.msra.mxu0 0.0
        %529 = vmatprep.subr.mxu0 0.0
        %530 = vmatpush1.msra.mxu0 0.0
        %531 = vmatprep.subr.mxu0 0.0
        %532 = vmatpush1.msra.mxu0 0.0
        %533 = vmatprep.subr.mxu0 0.0
        %534 = vmatpush1.msra.mxu0 0.0
        %535 = vmatprep.subr.mxu0 0.0
        %536 = vmatpush1.msra.mxu0 0.0
        %537 = vmatprep.subr.mxu0 0.0
        %538 = vmatpush1.msra.mxu0 0.0
        %539 = vmatprep.subr.mxu0 0.0
        %540 = vmatpush1.msra.mxu0 0.0
        %541 = vmatprep.subr.mxu0 0.0
        %542 = vmatpush1.msra.mxu0 0.0
        %543 = vmatprep.subr.mxu0 0.0
        %544 = vmatpush1.msra.mxu0 0.0
        %545 = vmatprep.subr.mxu0 0.0
        %546 = vmatpush1.msra.mxu0 0.0
        %547 = vmatprep.subr.mxu0 0.0
        %548 = vmatpush1.msra.mxu0 0.0
        %549 = vmatprep.subr.mxu0 0.0
        %550 = vmatpush1.msra.mxu0 0.0
        %551 = vmatprep.subr.mxu0 0.0
        %552 = vmatpush1.msra.mxu0 0.0
        %553 = vmatprep.subr.mxu0 0.0
        %v554 = vand.u32 %v229, 4294901760
        %v555 = vsub.f32 %v229, %v554
        %556 = vmatpush1.msra.mxu0 %v555
        %557 = vmatprep.subr.mxu0 0.0
        %v558 = vand.u32 %v228, 4294901760
        %v559 = vsub.f32 %v228, %v558
        %560 = vmatpush1.msra.mxu0 %v559
        %561 = vmatprep.subr.mxu0 0.0
        %562 = vmatpush2.msra.mxu0 0.0
        %563 = vmatprep.subr.mxu0 0.0
        %564 = vmatpush2.msra.mxu0 0.0
        %565 = vmatprep.subr.mxu0 0.0
        %566 = vmatpush2.msra.mxu0 0.0
        %567 = vmatprep.subr.mxu0 0.0
        %568 = vmatpush2.msra.mxu0 0.0
        %569 = vmatprep.subr.mxu0 0.0
        %570 = vmatpush2.msra.mxu0 0.0
        %571 = vmatprep.subr.mxu0 0.0
        %572 = vmatpush2.msra.mxu0 0.0
        %573 = vmatprep.subr.mxu0 0.0
        %574 = vmatpush2.msra.mxu0 0.0
        %575 = vmatprep.subr.mxu0 0.0
        %576 = vmatpush2.msra.mxu0 0.0
        %577 = vmatprep.subr.mxu0 0.0
        %578 = vmatpush2.msra.mxu0 0.0
        %579 = vmatprep.subr.mxu0 0.0
        %580 = vmatpush2.msra.mxu0 0.0
        %581 = vmatprep.subr.mxu0 0.0
        %582 = vmatpush2.msra.mxu0 0.0
        %583 = vmatprep.subr.mxu0 0.0
        %584 = vmatpush2.msra.mxu0 0.0
        %585 = vmatprep.subr.mxu0 0.0
        %586 = vmatpush2.msra.mxu0 0.0
        %587 = vmatprep.subr.mxu0 0.0
        %588 = vmatpush2.msra.mxu0 0.0
        %589 = vmatprep.subr.mxu0 0.0
        %590 = vmatpush2.msra.mxu0 0.0
        %591 = vmatprep.subr.mxu0 0.0
        %592 = vmatpush2.msra.mxu0 0.0
        %593 = vmatprep.mubr.f32.mxu0 0.0
        %v594 = vand.u32 %v232, 4294901760
        %v595 = vsub.f32 %v232, %v594
        %596 = vmatmul.mubr.f32.gmra.mxu0 %v595
        %v597 = vpop.f32.mrf.mxu0
        %v598 = vadd.f32 %v480, %v597
        %v599 = vpop.f32.mrf.mxu0
        %600 = vmatprep.mubr.f32.mxu0 0.0
        %v601 = vand.u32 %v235, 4294901760
        %v602 = vsub.f32 %v235, %v601
        %603 = vmatmul.mubr.f32.gmra.mxu0 %v602
        %v604 = vpop.f32.mrf.mxu0
        %v605 = vadd.f32 %v486, %v604
        %v606 = vpop.f32.mrf.mxu0
        %607 = vmatprep.mubr.f32.mxu0 0.0
        %v608 = vand.u32 %v238, 4294901760
        %v609 = vsub.f32 %v238, %v608
        %610 = vmatmul.mubr.f32.gmra.mxu0 %v609
        %v611 = vpop.f32.mrf.mxu0
        %v612 = vadd.f32 %v492, %v611
        %v613 = vpop.f32.mrf.mxu0
        %614 = vmatprep.mubr.f32.mxu0 0.0
        %v615 = vand.u32 %v241, 4294901760
        %v616 = vsub.f32 %v241, %v615
        %617 = vmatmul.mubr.f32.gmra.mxu0 %v616
        %v618 = vpop.f32.mrf.mxu0
        %v619 = vadd.f32 %v498, %v618
        %v620 = vpop.f32.mrf.mxu0
        %621 = vmatprep.mubr.f32.mxu0 0.0
        %v622 = vand.u32 %v244, 4294901760
        %v623 = vsub.f32 %v244, %v622
        %624 = vmatmul.mubr.f32.gmra.mxu0 %v623
        %v625 = vpop.f32.mrf.mxu0
        %v626 = vadd.f32 %v504, %v625
        %v627 = vpop.f32.mrf.mxu0
        %628 = vmatprep.mubr.f32.mxu0 0.0
        %v629 = vand.u32 %v247, 4294901760
        %v630 = vsub.f32 %v247, %v629
        %631 = vmatmul.mubr.f32.gmra.mxu0 %v630
        %v632 = vpop.f32.mrf.mxu0
        %v633 = vadd.f32 %v510, %v632
        %v634 = vpop.f32.mrf.mxu0
        %635 = vmatprep.mubr.f32.mxu0 0.0
        %v636 = vand.u32 %v250, 4294901760
        %v637 = vsub.f32 %v250, %v636
        %638 = vmatmul.mubr.f32.gmra.mxu0 %v637
        %v639 = vpop.f32.mrf.mxu0
        %v640 = vadd.f32 %v516, %v639
        %v641 = vpop.f32.mrf.mxu0
        %642 = vmatprep.mubr.f32.mxu0 0.0
        %v643 = vand.u32 %v253, 4294901760
        %v644 = vsub.f32 %v253, %v643
        %645 = vmatmul.mubr.f32.gmra.mxu0 %v644
        %v646 = vpop.f32.mrf.mxu0
        %v647 = vadd.f32 %v522, %v646
        %v648 = vpop.f32.mrf.mxu0
        %649 = vdwg.mxu0
        %650 = vmatprep.subr.mxu0 0.0
        %651 = vmatpush1.msra.mxu0 0.0
        %652 = vmatprep.subr.mxu0 0.0
        %653 = vmatpush1.msra.mxu0 0.0
        %654 = vmatprep.subr.mxu0 0.0
        %655 = vmatpush1.msra.mxu0 0.0
        %656 = vmatprep.subr.mxu0 0.0
        %657 = vmatpush1.msra.mxu0 0.0
        %658 = vmatprep.subr.mxu0 0.0
        %659 = vmatpush1.msra.mxu0 0.0
        %660 = vmatprep.subr.mxu0 0.0
        %661 = vmatpush1.msra.mxu0 0.0
        %662 = vmatprep.subr.mxu0 0.0
        %663 = vmatpush1.msra.mxu0 0.0
        %664 = vmatprep.subr.mxu0 0.0
        %665 = vmatpush1.msra.mxu0 0.0
        %666 = vmatprep.subr.mxu0 0.0
        %667 = vmatpush1.msra.mxu0 0.0
        %668 = vmatprep.subr.mxu0 0.0
        %669 = vmatpush1.msra.mxu0 0.0
        %670 = vmatprep.subr.mxu0 0.0
        %671 = vmatpush1.msra.mxu0 0.0
        %672 = vmatprep.subr.mxu0 0.0
        %673 = vmatpush1.msra.mxu0 0.0
        %674 = vmatprep.subr.mxu0 0.0
        %675 = vmatpush1.msra.mxu0 0.0
        %676 = vmatprep.subr.mxu0 0.0
        %677 = vmatpush1.msra.mxu0 0.0
        %678 = vmatprep.subr.mxu0 0.0
        %v679 = vand.u32 %v229, 4294901760
        %680 = vmatpush1.msra.mxu0 %v679
        %681 = vmatprep.subr.mxu0 0.0
        %v682 = vand.u32 %v228, 4294901760
        %683 = vmatpush1.msra.mxu0 %v682
        %684 = vmatprep.subr.mxu0 0.0
        %685 = vmatpush2.msra.mxu0 0.0
        %686 = vmatprep.subr.mxu0 0.0
        %687 = vmatpush2.msra.mxu0 0.0
        %688 = vmatprep.subr.mxu0 0.0
        %689 = vmatpush2.msra.mxu0 0.0
        %690 = vmatprep.subr.mxu0 0.0
        %691 = vmatpush2.msra.mxu0 0.0
        %692 = vmatprep.subr.mxu0 0.0
        %693 = vmatpush2.msra.mxu0 0.0
        %694 = vmatprep.subr.mxu0 0.0
        %695 = vmatpush2.msra.mxu0 0.0
        %696 = vmatprep.subr.mxu0 0.0
        %697 = vmatpush2.msra.mxu0 0.0
        %698 = vmatprep.subr.mxu0 0.0
        %699 = vmatpush2.msra.mxu0 0.0
        %700 = vmatprep.subr.mxu0 0.0
        %701 = vmatpush2.msra.mxu0 0.0
        %702 = vmatprep.subr.mxu0 0.0
        %703 = vmatpush2.msra.mxu0 0.0
        %704 = vmatprep.subr.mxu0 0.0
        %705 = vmatpush2.msra.mxu0 0.0
        %706 = vmatprep.subr.mxu0 0.0
        %707 = vmatpush2.msra.mxu0 0.0
        %708 = vmatprep.subr.mxu0 0.0
        %709 = vmatpush2.msra.mxu0 0.0
        %710 = vmatprep.subr.mxu0 0.0
        %711 = vmatpush2.msra.mxu0 0.0
        %712 = vmatprep.subr.mxu0 0.0
        %713 = vmatpush2.msra.mxu0 0.0
        %714 = vmatprep.subr.mxu0 0.0
        %715 = vmatpush2.msra.mxu0 0.0
        %716 = vmatprep.mubr.f32.mxu0 0.0
        %v717 = vand.u32 %v232, 4294901760
        %v718 = vsub.f32 %v232, %v717
        %v719 = vand.u32 %v718, 4294901760
        %720 = vmatmul.mubr.f32.gmra.mxu0 %v719
        %v721 = vpop.f32.mrf.mxu0
        %v722 = vadd.f32 %v598, %v721
        %v723 = vpop.f32.mrf.mxu0
        %724 = vmatprep.mubr.f32.mxu0 0.0
        %v725 = vand.u32 %v235, 4294901760
        %v726 = vsub.f32 %v235, %v725
        %v727 = vand.u32 %v726, 4294901760
        %728 = vmatmul.mubr.f32.gmra.mxu0 %v727
        %v729 = vpop.f32.mrf.mxu0
        %v730 = vadd.f32 %v605, %v729
        %v731 = vpop.f32.mrf.mxu0
        %732 = vmatprep.mubr.f32.mxu0 0.0
        %v733 = vand.u32 %v238, 4294901760
        %v734 = vsub.f32 %v238, %v733
        %v735 = vand.u32 %v734, 4294901760
        %736 = vmatmul.mubr.f32.gmra.mxu0 %v735
        %v737 = vpop.f32.mrf.mxu0
        %v738 = vadd.f32 %v612, %v737
        %v739 = vpop.f32.mrf.mxu0
        %740 = vmatprep.mubr.f32.mxu0 0.0
        %v741 = vand.u32 %v241, 4294901760
        %v742 = vsub.f32 %v241, %v741
        %v743 = vand.u32 %v742, 4294901760
        %744 = vmatmul.mubr.f32.gmra.mxu0 %v743
        %v745 = vpop.f32.mrf.mxu0
        %v746 = vadd.f32 %v619, %v745
        %v747 = vpop.f32.mrf.mxu0
        %748 = vmatprep.mubr.f32.mxu0 0.0
        %v749 = vand.u32 %v244, 4294901760
        %v750 = vsub.f32 %v244, %v749
        %v751 = vand.u32 %v750, 4294901760
        %752 = vmatmul.mubr.f32.gmra.mxu0 %v751
        %v753 = vpop.f32.mrf.mxu0
        %v754 = vadd.f32 %v626, %v753
        %v755 = vpop.f32.mrf.mxu0
        %756 = vmatprep.mubr.f32.mxu0 0.0
        %v757 = vand.u32 %v247, 4294901760
        %v758 = vsub.f32 %v247, %v757
        %v759 = vand.u32 %v758, 4294901760
        %760 = vmatmul.mubr.f32.gmra.mxu0 %v759
        %v761 = vpop.f32.mrf.mxu0
        %v762 = vadd.f32 %v633, %v761
        %v763 = vpop.f32.mrf.mxu0
        %764 = vmatprep.mubr.f32.mxu0 0.0
        %v765 = vand.u32 %v250, 4294901760
        %v766 = vsub.f32 %v250, %v765
        %v767 = vand.u32 %v766, 4294901760
        %768 = vmatmul.mubr.f32.gmra.mxu0 %v767
        %v769 = vpop.f32.mrf.mxu0
        %v770 = vadd.f32 %v640, %v769
        %v771 = vpop.f32.mrf.mxu0
        %772 = vmatprep.mubr.f32.mxu0 0.0
        %v773 = vand.u32 %v253, 4294901760
        %v774 = vsub.f32 %v253, %v773
        %v775 = vand.u32 %v774, 4294901760
        %776 = vmatmul.mubr.f32.gmra.mxu0 %v775
        %v777 = vpop.f32.mrf.mxu0
        %v778 = vadd.f32 %v647, %v777
        %v779 = vpop.f32.mrf.mxu0
        %780 = vdwg.mxu0
        %781 = vmatprep.subr.mxu0 0.0
        %782 = vmatpush1.msra.mxu0 0.0
        %783 = vmatprep.subr.mxu0 0.0
        %784 = vmatpush1.msra.mxu0 0.0
        %785 = vmatprep.subr.mxu0 0.0
        %786 = vmatpush1.msra.mxu0 0.0
        %787 = vmatprep.subr.mxu0 0.0
        %788 = vmatpush1.msra.mxu0 0.0
        %789 = vmatprep.subr.mxu0 0.0
        %790 = vmatpush1.msra.mxu0 0.0
        %791 = vmatprep.subr.mxu0 0.0
        %792 = vmatpush1.msra.mxu0 0.0
        %793 = vmatprep.subr.mxu0 0.0
        %794 = vmatpush1.msra.mxu0 0.0
        %795 = vmatprep.subr.mxu0 0.0
        %796 = vmatpush1.msra.mxu0 0.0
        %797 = vmatprep.subr.mxu0 0.0
        %798 = vmatpush1.msra.mxu0 0.0
        %799 = vmatprep.subr.mxu0 0.0
        %800 = vmatpush1.msra.mxu0 0.0
        %801 = vmatprep.subr.mxu0 0.0
        %802 = vmatpush1.msra.mxu0 0.0
        %803 = vmatprep.subr.mxu0 0.0
        %804 = vmatpush1.msra.mxu0 0.0
        %805 = vmatprep.subr.mxu0 0.0
        %806 = vmatpush1.msra.mxu0 0.0
        %807 = vmatprep.subr.mxu0 0.0
        %808 = vmatpush1.msra.mxu0 0.0
        %809 = vmatprep.subr.mxu0 0.0
        %v810 = vand.u32 %v229, 4294901760
        %v811 = vsub.f32 %v229, %v810
        %v812 = vand.u32 %v811, 4294901760
        %813 = vmatpush1.msra.mxu0 %v812
        %814 = vmatprep.subr.mxu0 0.0
        %v815 = vand.u32 %v228, 4294901760
        %v816 = vsub.f32 %v228, %v815
        %v817 = vand.u32 %v816, 4294901760
        %818 = vmatpush1.msra.mxu0 %v817
        %819 = vmatprep.subr.mxu0 0.0
        %820 = vmatpush2.msra.mxu0 0.0
        %821 = vmatprep.subr.mxu0 0.0
        %822 = vmatpush2.msra.mxu0 0.0
        %823 = vmatprep.subr.mxu0 0.0
        %824 = vmatpush2.msra.mxu0 0.0
        %825 = vmatprep.subr.mxu0 0.0
        %826 = vmatpush2.msra.mxu0 0.0
        %827 = vmatprep.subr.mxu0 0.0
        %828 = vmatpush2.msra.mxu0 0.0
        %829 = vmatprep.subr.mxu0 0.0
        %830 = vmatpush2.msra.mxu0 0.0
        %831 = vmatprep.subr.mxu0 0.0
        %832 = vmatpush2.msra.mxu0 0.0
        %833 = vmatprep.subr.mxu0 0.0
        %834 = vmatpush2.msra.mxu0 0.0
        %835 = vmatprep.subr.mxu0 0.0
        %836 = vmatpush2.msra.mxu0 0.0
        %837 = vmatprep.subr.mxu0 0.0
        %838 = vmatpush2.msra.mxu0 0.0
        %839 = vmatprep.subr.mxu0 0.0
        %840 = vmatpush2.msra.mxu0 0.0
        %841 = vmatprep.subr.mxu0 0.0
        %842 = vmatpush2.msra.mxu0 0.0
        %843 = vmatprep.subr.mxu0 0.0
        %844 = vmatpush2.msra.mxu0 0.0
        %845 = vmatprep.subr.mxu0 0.0
        %846 = vmatpush2.msra.mxu0 0.0
        %847 = vmatprep.subr.mxu0 0.0
        %848 = vmatpush2.msra.mxu0 0.0
        %849 = vmatprep.subr.mxu0 0.0
        %850 = vmatpush2.msra.mxu0 0.0
        %851 = vmatprep.mubr.f32.mxu0 0.0
        %v852 = vand.u32 %v232, 4294901760
        %853 = vmatmul.mubr.f32.gmra.mxu0 %v852
        %v854 = vpop.f32.mrf.mxu0
        %v855 = vadd.f32 %v722, %v854
        %v856 = vpop.f32.mrf.mxu0
        %857 = vmatprep.mubr.f32.mxu0 0.0
        %v858 = vand.u32 %v235, 4294901760
        %859 = vmatmul.mubr.f32.gmra.mxu0 %v858
        %v860 = vpop.f32.mrf.mxu0
        %v861 = vadd.f32 %v730, %v860
        %v862 = vpop.f32.mrf.mxu0
        %863 = vmatprep.mubr.f32.mxu0 0.0
        %v864 = vand.u32 %v238, 4294901760
        %865 = vmatmul.mubr.f32.gmra.mxu0 %v864
        %v866 = vpop.f32.mrf.mxu0
        %v867 = vadd.f32 %v738, %v866
        %v868 = vpop.f32.mrf.mxu0
        %869 = vmatprep.mubr.f32.mxu0 0.0
        %v870 = vand.u32 %v241, 4294901760
        %871 = vmatmul.mubr.f32.gmra.mxu0 %v870
        %v872 = vpop.f32.mrf.mxu0
        %v873 = vadd.f32 %v746, %v872
        %v874 = vpop.f32.mrf.mxu0
        %875 = vmatprep.mubr.f32.mxu0 0.0
        %v876 = vand.u32 %v244, 4294901760
        %877 = vmatmul.mubr.f32.gmra.mxu0 %v876
        %v878 = vpop.f32.mrf.mxu0
        %v879 = vadd.f32 %v754, %v878
        %v880 = vpop.f32.mrf.mxu0
        %881 = vmatprep.mubr.f32.mxu0 0.0
        %v882 = vand.u32 %v247, 4294901760
        %883 = vmatmul.mubr.f32.gmra.mxu0 %v882
        %v884 = vpop.f32.mrf.mxu0
        %v885 = vadd.f32 %v762, %v884
        %v886 = vpop.f32.mrf.mxu0
        %887 = vmatprep.mubr.f32.mxu0 0.0
        %v888 = vand.u32 %v250, 4294901760
        %889 = vmatmul.mubr.f32.gmra.mxu0 %v888
        %v890 = vpop.f32.mrf.mxu0
        %v891 = vadd.f32 %v770, %v890
        %v892 = vpop.f32.mrf.mxu0
        %893 = vmatprep.mubr.f32.mxu0 0.0
        %v894 = vand.u32 %v253, 4294901760
        %895 = vmatmul.mubr.f32.gmra.mxu0 %v894
        %v896 = vpop.f32.mrf.mxu0
        %v897 = vadd.f32 %v778, %v896
        %v898 = vpop.f32.mrf.mxu0
        %899 = vdwg.mxu0
        %900 = vmatprep.subr.mxu0 0.0
        %901 = vmatpush1.msra.mxu0 0.0
        %902 = vmatprep.subr.mxu0 0.0
        %903 = vmatpush1.msra.mxu0 0.0
        %904 = vmatprep.subr.mxu0 0.0
        %905 = vmatpush1.msra.mxu0 0.0
        %906 = vmatprep.subr.mxu0 0.0
        %907 = vmatpush1.msra.mxu0 0.0
        %908 = vmatprep.subr.mxu0 0.0
        %909 = vmatpush1.msra.mxu0 0.0
        %910 = vmatprep.subr.mxu0 0.0
        %911 = vmatpush1.msra.mxu0 0.0
        %912 = vmatprep.subr.mxu0 0.0
        %913 = vmatpush1.msra.mxu0 0.0
        %914 = vmatprep.subr.mxu0 0.0
        %915 = vmatpush1.msra.mxu0 0.0
        %916 = vmatprep.subr.mxu0 0.0
        %917 = vmatpush1.msra.mxu0 0.0
        %918 = vmatprep.subr.mxu0 0.0
        %919 = vmatpush1.msra.mxu0 0.0
        %920 = vmatprep.subr.mxu0 0.0
        %921 = vmatpush1.msra.mxu0 0.0
        %922 = vmatprep.subr.mxu0 0.0
        %923 = vmatpush1.msra.mxu0 0.0
        %924 = vmatprep.subr.mxu0 0.0
        %925 = vmatpush1.msra.mxu0 0.0
        %926 = vmatprep.subr.mxu0 0.0
        %927 = vmatpush1.msra.mxu0 0.0
        %928 = vmatprep.subr.mxu0 0.0
        %v929 = vand.u32 %v229, 4294901760
        %930 = vmatpush1.msra.mxu0 %v929
        %931 = vmatprep.subr.mxu0 0.0
        %v932 = vand.u32 %v228, 4294901760
        %933 = vmatpush1.msra.mxu0 %v932
        %934 = vmatprep.subr.mxu0 0.0
        %935 = vmatpush2.msra.mxu0 0.0
        %936 = vmatprep.subr.mxu0 0.0
        %937 = vmatpush2.msra.mxu0 0.0
        %938 = vmatprep.subr.mxu0 0.0
        %939 = vmatpush2.msra.mxu0 0.0
        %940 = vmatprep.subr.mxu0 0.0
        %941 = vmatpush2.msra.mxu0 0.0
        %942 = vmatprep.subr.mxu0 0.0
        %943 = vmatpush2.msra.mxu0 0.0
        %944 = vmatprep.subr.mxu0 0.0
        %945 = vmatpush2.msra.mxu0 0.0
        %946 = vmatprep.subr.mxu0 0.0
        %947 = vmatpush2.msra.mxu0 0.0
        %948 = vmatprep.subr.mxu0 0.0
        %949 = vmatpush2.msra.mxu0 0.0
        %950 = vmatprep.subr.mxu0 0.0
        %951 = vmatpush2.msra.mxu0 0.0
        %952 = vmatprep.subr.mxu0 0.0
        %953 = vmatpush2.msra.mxu0 0.0
        %954 = vmatprep.subr.mxu0 0.0
        %955 = vmatpush2.msra.mxu0 0.0
        %956 = vmatprep.subr.mxu0 0.0
        %957 = vmatpush2.msra.mxu0 0.0
        %958 = vmatprep.subr.mxu0 0.0
        %959 = vmatpush2.msra.mxu0 0.0
        %960 = vmatprep.subr.mxu0 0.0
        %961 = vmatpush2.msra.mxu0 0.0
        %962 = vmatprep.subr.mxu0 0.0
        %963 = vmatpush2.msra.mxu0 0.0
        %964 = vmatprep.subr.mxu0 0.0
        %965 = vmatpush2.msra.mxu0 0.0
        %966 = vmatprep.mubr.f32.mxu0 0.0
        %v967 = vand.u32 %v232, 4294901760
        %968 = vmatmul.mubr.f32.gmra.mxu0 %v967
        %v969 = vpop.f32.mrf.mxu0
        %v970 = vadd.f32 %v855, %v969
        %v971 = vpop.f32.mrf.mxu0
        %972 = vmatprep.mubr.f32.mxu0 0.0
        %v973 = vand.u32 %v235, 4294901760
        %974 = vmatmul.mubr.f32.gmra.mxu0 %v973
        %v975 = vpop.f32.mrf.mxu0
        %v976 = vadd.f32 %v861, %v975
        %v977 = vpop.f32.mrf.mxu0
        %978 = vmatprep.mubr.f32.mxu0 0.0
        %v979 = vand.u32 %v238, 4294901760
        %980 = vmatmul.mubr.f32.gmra.mxu0 %v979
        %v981 = vpop.f32.mrf.mxu0
        %v982 = vadd.f32 %v867, %v981
        %v983 = vpop.f32.mrf.mxu0
        %984 = vmatprep.mubr.f32.mxu0 0.0
        %v985 = vand.u32 %v241, 4294901760
        %986 = vmatmul.mubr.f32.gmra.mxu0 %v985
        %v987 = vpop.f32.mrf.mxu0
        %v988 = vadd.f32 %v873, %v987
        %v989 = vpop.f32.mrf.mxu0
        %990 = vmatprep.mubr.f32.mxu0 0.0
        %v991 = vand.u32 %v244, 4294901760
        %992 = vmatmul.mubr.f32.gmra.mxu0 %v991
        %v993 = vpop.f32.mrf.mxu0
        %v994 = vadd.f32 %v879, %v993
        %v995 = vpop.f32.mrf.mxu0
        %996 = vmatprep.mubr.f32.mxu0 0.0
        %v997 = vand.u32 %v247, 4294901760
        %998 = vmatmul.mubr.f32.gmra.mxu0 %v997
        %v999 = vpop.f32.mrf.mxu0
        %v1000 = vadd.f32 %v885, %v999
        %v1001 = vpop.f32.mrf.mxu0
        %1002 = vmatprep.mubr.f32.mxu0 0.0
        %v1003 = vand.u32 %v250, 4294901760
        %1004 = vmatmul.mubr.f32.gmra.mxu0 %v1003
        %v1005 = vpop.f32.mrf.mxu0
        %v1006 = vadd.f32 %v891, %v1005
        %v1007 = vpop.f32.mrf.mxu0
        %1008 = vmatprep.mubr.f32.mxu0 0.0
        %v1009 = vand.u32 %v253, 4294901760
        %1010 = vmatmul.mubr.f32.gmra.mxu0 %v1009
        %v1011 = vpop.f32.mrf.mxu0
        %v1012 = vadd.f32 %v897, %v1011
        %v1013 = vpop.f32.mrf.mxu0
        %1014 = vdwg.mxu0
        %vm1015 = vcmask 261120
        %1016 = vst.msk [vmem:[#allocation2] sm:$0xff] %vm1015, %v970
        %1017 = vst.msk [vmem:[#allocation2 + $0x8] sm:$0xff] %vm1015, %v976
        %1018 = vst.msk [vmem:[#allocation2 + $0x10] sm:$0xff] %vm1015, %v982
        %1019 = vst.msk [vmem:[#allocation2 + $0x18] sm:$0xff] %vm1015, %v988
        %1020 = vst.msk [vmem:[#allocation2 + $0x20] sm:$0xff] %vm1015, %v994
        %1021 = vst.msk [vmem:[#allocation2 + $0x28] sm:$0xff] %vm1015, %v1000
        %1022 = vst.msk [vmem:[#allocation2 + $0x30] sm:$0xff] %vm1015, %v1006
        %1023 = vst.msk [vmem:[#allocation2 + $0x38] sm:$0xff] %vm1015, %v1012
      $region36: #{scale_upsample.1} parent=31 // pred_fallthru
        _
      %v1024 = vld [vmem:[#allocation2] sm:$0xff]
      %v1025 = vld [vmem:[#allocation2 + $0x8] sm:$0xff]
      %v1026 = vld [vmem:[#allocation2 + $0x10] sm:$0xff]
      %v1027 = vld [vmem:[#allocation2 + $0x18] sm:$0xff]
      %v1028 = vld [vmem:[#allocation2 + $0x20] sm:$0xff]
      %v1029 = vld [vmem:[#allocation2 + $0x28] sm:$0xff]
      %v1030 = vld [vmem:[#allocation2 + $0x30] sm:$0xff]
      %v1031 = vld [vmem:[#allocation2 + $0x38] sm:$0xff]
      %v1032 = vld [vmem:[%s205] sm:$0xff]
      %v1033 = vld [vmem:[%s205 + $0x8] sm:$0xff]
      %vm1034 = vcmask 523264
      %v1036 = vsel %vm1034, %v1032, 0
      %v1039 = vsel %vm1034, %v1033, 0
      %1041 = vmatprep.subr.mxu0 0.0
      %1042 = vmatpush1.msra.mxu0 0.0
      %1043 = vmatprep.subr.mxu0 0.0
      %1044 = vmatpush1.msra.mxu0 0.0
      %1045 = vmatprep.subr.mxu0 0.0
      %1046 = vmatpush1.msra.mxu0 0.0
      %1047 = vmatprep.subr.mxu0 0.0
      %1048 = vmatpush1.msra.mxu0 0.0
      %1049 = vmatprep.subr.mxu0 0.0
      %1050 = vmatpush1.msra.mxu0 0.0
      %1051 = vmatprep.subr.mxu0 0.0
      %1052 = vmatpush1.msra.mxu0 0.0
      %1053 = vmatprep.subr.mxu0 0.0
      %1054 = vmatpush1.msra.mxu0 0.0
      %1055 = vmatprep.subr.mxu0 0.0
      %1056 = vmatpush1.msra.mxu0 0.0
      %1057 = vmatprep.subr.mxu0 0.0
      %v1058 = vand.u32 %v1031, 4294901760
      %1059 = vmatpush1.msra.mxu0 %v1058
      %1060 = vmatprep.subr.mxu0 0.0
      %v1061 = vand.u32 %v1030, 4294901760
      %1062 = vmatpush1.msra.mxu0 %v1061
      %1063 = vmatprep.subr.mxu0 0.0
      %v1064 = vand.u32 %v1029, 4294901760
      %1065 = vmatpush1.msra.mxu0 %v1064
      %1066 = vmatprep.subr.mxu0 0.0
      %v1067 = vand.u32 %v1028, 4294901760
      %1068 = vmatpush1.msra.mxu0 %v1067
      %1069 = vmatprep.subr.mxu0 0.0
      %v1070 = vand.u32 %v1027, 4294901760
      %1071 = vmatpush1.msra.mxu0 %v1070
      %1072 = vmatprep.subr.mxu0 0.0
      %v1073 = vand.u32 %v1026, 4294901760
      %1074 = vmatpush1.msra.mxu0 %v1073
      %1075 = vmatprep.subr.mxu0 0.0
      %v1076 = vand.u32 %v1025, 4294901760
      %1077 = vmatpush1.msra.mxu0 %v1076
      %1078 = vmatprep.subr.mxu0 0.0
      %v1079 = vand.u32 %v1024, 4294901760
      %1080 = vmatpush1.msra.mxu0 %v1079
      %1081 = vmatprep.subr.mxu0 0.0
      %1082 = vmatpush2.msra.mxu0 0.0
      %1083 = vmatprep.subr.mxu0 0.0
      %1084 = vmatpush2.msra.mxu0 0.0
      %1085 = vmatprep.subr.mxu0 0.0
      %1086 = vmatpush2.msra.mxu0 0.0
      %1087 = vmatprep.subr.mxu0 0.0
      %1088 = vmatpush2.msra.mxu0 0.0
      %1089 = vmatprep.subr.mxu0 0.0
      %1090 = vmatpush2.msra.mxu0 0.0
      %1091 = vmatprep.subr.mxu0 0.0
      %1092 = vmatpush2.msra.mxu0 0.0
      %1093 = vmatprep.subr.mxu0 0.0
      %1094 = vmatpush2.msra.mxu0 0.0
      %1095 = vmatprep.subr.mxu0 0.0
      %1096 = vmatpush2.msra.mxu0 0.0
      %1097 = vmatprep.subr.mxu0 0.0
      %1098 = vmatpush2.msra.mxu0 0.0
      %1099 = vmatprep.subr.mxu0 0.0
      %1100 = vmatpush2.msra.mxu0 0.0
      %1101 = vmatprep.subr.mxu0 0.0
      %1102 = vmatpush2.msra.mxu0 0.0
      %1103 = vmatprep.subr.mxu0 0.0
      %1104 = vmatpush2.msra.mxu0 0.0
      %1105 = vmatprep.subr.mxu0 0.0
      %1106 = vmatpush2.msra.mxu0 0.0
      %1107 = vmatprep.subr.mxu0 0.0
      %1108 = vmatpush2.msra.mxu0 0.0
      %1109 = vmatprep.subr.mxu0 0.0
      %1110 = vmatpush2.msra.mxu0 0.0
      %1111 = vmatprep.subr.mxu0 0.0
      %1112 = vmatpush2.msra.mxu0 0.0
      %1113 = vmatprep.mubr.f32.mxu0 0.0
      %v1114 = vand.u32 %v1036, 4294901760
      %v1115 = vsub.f32 %v1036, %v1114
      %v1116 = vand.u32 %v1115, 4294901760
      %v1117 = vsub.f32 %v1115, %v1116
      %v1118 = vand.u32 %v1117, 4294901760
      %1119 = vmatmul.mubr.f32.gmra.mxu0 %v1118
      %v1120 = vpop.f32.mrf.mxu0
      %v1121 = vadd.f32 0.0, %v1120
      %v1122 = vpop.f32.mrf.mxu0
      %1123 = vmatprep.mubr.f32.mxu0 0.0
      %v1124 = vand.u32 %v1039, 4294901760
      %v1125 = vsub.f32 %v1039, %v1124
      %v1126 = vand.u32 %v1125, 4294901760
      %v1127 = vsub.f32 %v1125, %v1126
      %v1128 = vand.u32 %v1127, 4294901760
      %1129 = vmatmul.mubr.f32.gmra.mxu0 %v1128
      %v1130 = vpop.f32.mrf.mxu0
      %v1131 = vadd.f32 0.0, %v1130
      %v1132 = vpop.f32.mrf.mxu0
      %1133 = vdwg.mxu0
      %1134 = vmatprep.subr.mxu0 0.0
      %1135 = vmatpush1.msra.mxu0 0.0
      %1136 = vmatprep.subr.mxu0 0.0
      %1137 = vmatpush1.msra.mxu0 0.0
      %1138 = vmatprep.subr.mxu0 0.0
      %1139 = vmatpush1.msra.mxu0 0.0
      %1140 = vmatprep.subr.mxu0 0.0
      %1141 = vmatpush1.msra.mxu0 0.0
      %1142 = vmatprep.subr.mxu0 0.0
      %1143 = vmatpush1.msra.mxu0 0.0
      %1144 = vmatprep.subr.mxu0 0.0
      %1145 = vmatpush1.msra.mxu0 0.0
      %1146 = vmatprep.subr.mxu0 0.0
      %1147 = vmatpush1.msra.mxu0 0.0
      %1148 = vmatprep.subr.mxu0 0.0
      %1149 = vmatpush1.msra.mxu0 0.0
      %1150 = vmatprep.subr.mxu0 0.0
      %v1151 = vand.u32 %v1031, 4294901760
      %v1152 = vsub.f32 %v1031, %v1151
      %v1153 = vand.u32 %v1152, 4294901760
      %v1154 = vsub.f32 %v1152, %v1153
      %v1155 = vand.u32 %v1154, 4294901760
      %1156 = vmatpush1.msra.mxu0 %v1155
      %1157 = vmatprep.subr.mxu0 0.0
      %v1158 = vand.u32 %v1030, 4294901760
      %v1159 = vsub.f32 %v1030, %v1158
      %v1160 = vand.u32 %v1159, 4294901760
      %v1161 = vsub.f32 %v1159, %v1160
      %v1162 = vand.u32 %v1161, 4294901760
      %1163 = vmatpush1.msra.mxu0 %v1162
      %1164 = vmatprep.subr.mxu0 0.0
      %v1165 = vand.u32 %v1029, 4294901760
      %v1166 = vsub.f32 %v1029, %v1165
      %v1167 = vand.u32 %v1166, 4294901760
      %v1168 = vsub.f32 %v1166, %v1167
      %v1169 = vand.u32 %v1168, 4294901760
      %1170 = vmatpush1.msra.mxu0 %v1169
      %1171 = vmatprep.subr.mxu0 0.0
      %v1172 = vand.u32 %v1028, 4294901760
      %v1173 = vsub.f32 %v1028, %v1172
      %v1174 = vand.u32 %v1173, 4294901760
      %v1175 = vsub.f32 %v1173, %v1174
      %v1176 = vand.u32 %v1175, 4294901760
      %1177 = vmatpush1.msra.mxu0 %v1176
      %1178 = vmatprep.subr.mxu0 0.0
      %v1179 = vand.u32 %v1027, 4294901760
      %v1180 = vsub.f32 %v1027, %v1179
      %v1181 = vand.u32 %v1180, 4294901760
      %v1182 = vsub.f32 %v1180, %v1181
      %v1183 = vand.u32 %v1182, 4294901760
      %1184 = vmatpush1.msra.mxu0 %v1183
      %1185 = vmatprep.subr.mxu0 0.0
      %v1186 = vand.u32 %v1026, 4294901760
      %v1187 = vsub.f32 %v1026, %v1186
      %v1188 = vand.u32 %v1187, 4294901760
      %v1189 = vsub.f32 %v1187, %v1188
      %v1190 = vand.u32 %v1189, 4294901760
      %1191 = vmatpush1.msra.mxu0 %v1190
      %1192 = vmatprep.subr.mxu0 0.0
      %v1193 = vand.u32 %v1025, 4294901760
      %v1194 = vsub.f32 %v1025, %v1193
      %v1195 = vand.u32 %v1194, 4294901760
      %v1196 = vsub.f32 %v1194, %v1195
      %v1197 = vand.u32 %v1196, 4294901760
      %1198 = vmatpush1.msra.mxu0 %v1197
      %1199 = vmatprep.subr.mxu0 0.0
      %v1200 = vand.u32 %v1024, 4294901760
      %v1201 = vsub.f32 %v1024, %v1200
      %v1202 = vand.u32 %v1201, 4294901760
      %v1203 = vsub.f32 %v1201, %v1202
      %v1204 = vand.u32 %v1203, 4294901760
      %1205 = vmatpush1.msra.mxu0 %v1204
      %1206 = vmatprep.subr.mxu0 0.0
      %1207 = vmatpush2.msra.mxu0 0.0
      %1208 = vmatprep.subr.mxu0 0.0
      %1209 = vmatpush2.msra.mxu0 0.0
      %1210 = vmatprep.subr.mxu0 0.0
      %1211 = vmatpush2.msra.mxu0 0.0
      %1212 = vmatprep.subr.mxu0 0.0
      %1213 = vmatpush2.msra.mxu0 0.0
      %1214 = vmatprep.subr.mxu0 0.0
      %1215 = vmatpush2.msra.mxu0 0.0
      %1216 = vmatprep.subr.mxu0 0.0
      %1217 = vmatpush2.msra.mxu0 0.0
      %1218 = vmatprep.subr.mxu0 0.0
      %1219 = vmatpush2.msra.mxu0 0.0
      %1220 = vmatprep.subr.mxu0 0.0
      %1221 = vmatpush2.msra.mxu0 0.0
      %1222 = vmatprep.subr.mxu0 0.0
      %1223 = vmatpush2.msra.mxu0 0.0
      %1224 = vmatprep.subr.mxu0 0.0
      %1225 = vmatpush2.msra.mxu0 0.0
      %1226 = vmatprep.subr.mxu0 0.0
      %1227 = vmatpush2.msra.mxu0 0.0
      %1228 = vmatprep.subr.mxu0 0.0
      %1229 = vmatpush2.msra.mxu0 0.0
      %1230 = vmatprep.subr.mxu0 0.0
      %1231 = vmatpush2.msra.mxu0 0.0
      %1232 = vmatprep.subr.mxu0 0.0
      %1233 = vmatpush2.msra.mxu0 0.0
      %1234 = vmatprep.subr.mxu0 0.0
      %1235 = vmatpush2.msra.mxu0 0.0
      %1236 = vmatprep.subr.mxu0 0.0
      %1237 = vmatpush2.msra.mxu0 0.0
      %1238 = vmatprep.mubr.f32.mxu0 0.0
      %v1239 = vand.u32 %v1036, 4294901760
      %1240 = vmatmul.mubr.f32.gmra.mxu0 %v1239
      %v1241 = vpop.f32.mrf.mxu0
      %v1242 = vadd.f32 %v1121, %v1241
      %v1243 = vpop.f32.mrf.mxu0
      %1244 = vmatprep.mubr.f32.mxu0 0.0
      %v1245 = vand.u32 %v1039, 4294901760
      %1246 = vmatmul.mubr.f32.gmra.mxu0 %v1245
      %v1247 = vpop.f32.mrf.mxu0
      %v1248 = vadd.f32 %v1131, %v1247
      %v1249 = vpop.f32.mrf.mxu0
      %1250 = vdwg.mxu0
      %1251 = vmatprep.subr.mxu0 0.0
      %1252 = vmatpush1.msra.mxu0 0.0
      %1253 = vmatprep.subr.mxu0 0.0
      %1254 = vmatpush1.msra.mxu0 0.0
      %1255 = vmatprep.subr.mxu0 0.0
      %1256 = vmatpush1.msra.mxu0 0.0
      %1257 = vmatprep.subr.mxu0 0.0
      %1258 = vmatpush1.msra.mxu0 0.0
      %1259 = vmatprep.subr.mxu0 0.0
      %1260 = vmatpush1.msra.mxu0 0.0
      %1261 = vmatprep.subr.mxu0 0.0
      %1262 = vmatpush1.msra.mxu0 0.0
      %1263 = vmatprep.subr.mxu0 0.0
      %1264 = vmatpush1.msra.mxu0 0.0
      %1265 = vmatprep.subr.mxu0 0.0
      %1266 = vmatpush1.msra.mxu0 0.0
      %1267 = vmatprep.subr.mxu0 0.0
      %v1268 = vand.u32 %v1031, 4294901760
      %v1269 = vsub.f32 %v1031, %v1268
      %1270 = vmatpush1.msra.mxu0 %v1269
      %1271 = vmatprep.subr.mxu0 0.0
      %v1272 = vand.u32 %v1030, 4294901760
      %v1273 = vsub.f32 %v1030, %v1272
      %1274 = vmatpush1.msra.mxu0 %v1273
      %1275 = vmatprep.subr.mxu0 0.0
      %v1276 = vand.u32 %v1029, 4294901760
      %v1277 = vsub.f32 %v1029, %v1276
      %1278 = vmatpush1.msra.mxu0 %v1277
      %1279 = vmatprep.subr.mxu0 0.0
      %v1280 = vand.u32 %v1028, 4294901760
      %v1281 = vsub.f32 %v1028, %v1280
      %1282 = vmatpush1.msra.mxu0 %v1281
      %1283 = vmatprep.subr.mxu0 0.0
      %v1284 = vand.u32 %v1027, 4294901760
      %v1285 = vsub.f32 %v1027, %v1284
      %1286 = vmatpush1.msra.mxu0 %v1285
      %1287 = vmatprep.subr.mxu0 0.0
      %v1288 = vand.u32 %v1026, 4294901760
      %v1289 = vsub.f32 %v1026, %v1288
      %1290 = vmatpush1.msra.mxu0 %v1289
      %1291 = vmatprep.subr.mxu0 0.0
      %v1292 = vand.u32 %v1025, 4294901760
      %v1293 = vsub.f32 %v1025, %v1292
      %1294 = vmatpush1.msra.mxu0 %v1293
      %1295 = vmatprep.subr.mxu0 0.0
      %v1296 = vand.u32 %v1024, 4294901760
      %v1297 = vsub.f32 %v1024, %v1296
      %1298 = vmatpush1.msra.mxu0 %v1297
      %1299 = vmatprep.subr.mxu0 0.0
      %1300 = vmatpush2.msra.mxu0 0.0
      %1301 = vmatprep.subr.mxu0 0.0
      %1302 = vmatpush2.msra.mxu0 0.0
      %1303 = vmatprep.subr.mxu0 0.0
      %1304 = vmatpush2.msra.mxu0 0.0
      %1305 = vmatprep.subr.mxu0 0.0
      %1306 = vmatpush2.msra.mxu0 0.0
      %1307 = vmatprep.subr.mxu0 0.0
      %1308 = vmatpush2.msra.mxu0 0.0
      %1309 = vmatprep.subr.mxu0 0.0
      %1310 = vmatpush2.msra.mxu0 0.0
      %1311 = vmatprep.subr.mxu0 0.0
      %1312 = vmatpush2.msra.mxu0 0.0
      %1313 = vmatprep.subr.mxu0 0.0
      %1314 = vmatpush2.msra.mxu0 0.0
      %1315 = vmatprep.subr.mxu0 0.0
      %1316 = vmatpush2.msra.mxu0 0.0
      %1317 = vmatprep.subr.mxu0 0.0
      %1318 = vmatpush2.msra.mxu0 0.0
      %1319 = vmatprep.subr.mxu0 0.0
      %1320 = vmatpush2.msra.mxu0 0.0
      %1321 = vmatprep.subr.mxu0 0.0
      %1322 = vmatpush2.msra.mxu0 0.0
      %1323 = vmatprep.subr.mxu0 0.0
      %1324 = vmatpush2.msra.mxu0 0.0
      %1325 = vmatprep.subr.mxu0 0.0
      %1326 = vmatpush2.msra.mxu0 0.0
      %1327 = vmatprep.subr.mxu0 0.0
      %1328 = vmatpush2.msra.mxu0 0.0
      %1329 = vmatprep.subr.mxu0 0.0
      %1330 = vmatpush2.msra.mxu0 0.0
      %1331 = vmatprep.mubr.f32.mxu0 0.0
      %v1332 = vand.u32 %v1036, 4294901760
      %v1333 = vsub.f32 %v1036, %v1332
      %1334 = vmatmul.mubr.f32.gmra.mxu0 %v1333
      %v1335 = vpop.f32.mrf.mxu0
      %v1336 = vadd.f32 %v1242, %v1335
      %v1337 = vpop.f32.mrf.mxu0
      %1338 = vmatprep.mubr.f32.mxu0 0.0
      %v1339 = vand.u32 %v1039, 4294901760
      %v1340 = vsub.f32 %v1039, %v1339
      %1341 = vmatmul.mubr.f32.gmra.mxu0 %v1340
      %v1342 = vpop.f32.mrf.mxu0
      %v1343 = vadd.f32 %v1248, %v1342
      %v1344 = vpop.f32.mrf.mxu0
      %1345 = vdwg.mxu0
      %1346 = vmatprep.subr.mxu0 0.0
      %1347 = vmatpush1.msra.mxu0 0.0
      %1348 = vmatprep.subr.mxu0 0.0
      %1349 = vmatpush1.msra.mxu0 0.0
      %1350 = vmatprep.subr.mxu0 0.0
      %1351 = vmatpush1.msra.mxu0 0.0
      %1352 = vmatprep.subr.mxu0 0.0
      %1353 = vmatpush1.msra.mxu0 0.0
      %1354 = vmatprep.subr.mxu0 0.0
      %1355 = vmatpush1.msra.mxu0 0.0
      %1356 = vmatprep.subr.mxu0 0.0
      %1357 = vmatpush1.msra.mxu0 0.0
      %1358 = vmatprep.subr.mxu0 0.0
      %1359 = vmatpush1.msra.mxu0 0.0
      %1360 = vmatprep.subr.mxu0 0.0
      %1361 = vmatpush1.msra.mxu0 0.0
      %1362 = vmatprep.subr.mxu0 0.0
      %v1363 = vand.u32 %v1031, 4294901760
      %1364 = vmatpush1.msra.mxu0 %v1363
      %1365 = vmatprep.subr.mxu0 0.0
      %v1366 = vand.u32 %v1030, 4294901760
      %1367 = vmatpush1.msra.mxu0 %v1366
      %1368 = vmatprep.subr.mxu0 0.0
      %v1369 = vand.u32 %v1029, 4294901760
      %1370 = vmatpush1.msra.mxu0 %v1369
      %1371 = vmatprep.subr.mxu0 0.0
      %v1372 = vand.u32 %v1028, 4294901760
      %1373 = vmatpush1.msra.mxu0 %v1372
      %1374 = vmatprep.subr.mxu0 0.0
      %v1375 = vand.u32 %v1027, 4294901760
      %1376 = vmatpush1.msra.mxu0 %v1375
      %1377 = vmatprep.subr.mxu0 0.0
      %v1378 = vand.u32 %v1026, 4294901760
      %1379 = vmatpush1.msra.mxu0 %v1378
      %1380 = vmatprep.subr.mxu0 0.0
      %v1381 = vand.u32 %v1025, 4294901760
      %1382 = vmatpush1.msra.mxu0 %v1381
      %1383 = vmatprep.subr.mxu0 0.0
      %v1384 = vand.u32 %v1024, 4294901760
      %1385 = vmatpush1.msra.mxu0 %v1384
      %1386 = vmatprep.subr.mxu0 0.0
      %1387 = vmatpush2.msra.mxu0 0.0
      %1388 = vmatprep.subr.mxu0 0.0
      %1389 = vmatpush2.msra.mxu0 0.0
      %1390 = vmatprep.subr.mxu0 0.0
      %1391 = vmatpush2.msra.mxu0 0.0
      %1392 = vmatprep.subr.mxu0 0.0
      %1393 = vmatpush2.msra.mxu0 0.0
      %1394 = vmatprep.subr.mxu0 0.0
      %1395 = vmatpush2.msra.mxu0 0.0
      %1396 = vmatprep.subr.mxu0 0.0
      %1397 = vmatpush2.msra.mxu0 0.0
      %1398 = vmatprep.subr.mxu0 0.0
      %1399 = vmatpush2.msra.mxu0 0.0
      %1400 = vmatprep.subr.mxu0 0.0
      %1401 = vmatpush2.msra.mxu0 0.0
      %1402 = vmatprep.subr.mxu0 0.0
      %1403 = vmatpush2.msra.mxu0 0.0
      %1404 = vmatprep.subr.mxu0 0.0
      %1405 = vmatpush2.msra.mxu0 0.0
      %1406 = vmatprep.subr.mxu0 0.0
      %1407 = vmatpush2.msra.mxu0 0.0
      %1408 = vmatprep.subr.mxu0 0.0
      %1409 = vmatpush2.msra.mxu0 0.0
      %1410 = vmatprep.subr.mxu0 0.0
      %1411 = vmatpush2.msra.mxu0 0.0
      %1412 = vmatprep.subr.mxu0 0.0
      %1413 = vmatpush2.msra.mxu0 0.0
      %1414 = vmatprep.subr.mxu0 0.0
      %1415 = vmatpush2.msra.mxu0 0.0
      %1416 = vmatprep.subr.mxu0 0.0
      %1417 = vmatpush2.msra.mxu0 0.0
      %1418 = vmatprep.mubr.f32.mxu0 0.0
      %v1419 = vand.u32 %v1036, 4294901760
      %v1420 = vsub.f32 %v1036, %v1419
      %v1421 = vand.u32 %v1420, 4294901760
      %1422 = vmatmul.mubr.f32.gmra.mxu0 %v1421
      %v1423 = vpop.f32.mrf.mxu0
      %v1424 = vadd.f32 %v1336, %v1423
      %v1425 = vpop.f32.mrf.mxu0
      %1426 = vmatprep.mubr.f32.mxu0 0.0
      %v1427 = vand.u32 %v1039, 4294901760
      %v1428 = vsub.f32 %v1039, %v1427
      %v1429 = vand.u32 %v1428, 4294901760
      %1430 = vmatmul.mubr.f32.gmra.mxu0 %v1429
      %v1431 = vpop.f32.mrf.mxu0
      %v1432 = vadd.f32 %v1343, %v1431
      %v1433 = vpop.f32.mrf.mxu0
      %1434 = vdwg.mxu0
      %1435 = vmatprep.subr.mxu0 0.0
      %1436 = vmatpush1.msra.mxu0 0.0
      %1437 = vmatprep.subr.mxu0 0.0
      %1438 = vmatpush1.msra.mxu0 0.0
      %1439 = vmatprep.subr.mxu0 0.0
      %1440 = vmatpush1.msra.mxu0 0.0
      %1441 = vmatprep.subr.mxu0 0.0
      %1442 = vmatpush1.msra.mxu0 0.0
      %1443 = vmatprep.subr.mxu0 0.0
      %1444 = vmatpush1.msra.mxu0 0.0
      %1445 = vmatprep.subr.mxu0 0.0
      %1446 = vmatpush1.msra.mxu0 0.0
      %1447 = vmatprep.subr.mxu0 0.0
      %1448 = vmatpush1.msra.mxu0 0.0
      %1449 = vmatprep.subr.mxu0 0.0
      %1450 = vmatpush1.msra.mxu0 0.0
      %1451 = vmatprep.subr.mxu0 0.0
      %v1452 = vand.u32 %v1031, 4294901760
      %v1453 = vsub.f32 %v1031, %v1452
      %v1454 = vand.u32 %v1453, 4294901760
      %1455 = vmatpush1.msra.mxu0 %v1454
      %1456 = vmatprep.subr.mxu0 0.0
      %v1457 = vand.u32 %v1030, 4294901760
      %v1458 = vsub.f32 %v1030, %v1457
      %v1459 = vand.u32 %v1458, 4294901760
      %1460 = vmatpush1.msra.mxu0 %v1459
      %1461 = vmatprep.subr.mxu0 0.0
      %v1462 = vand.u32 %v1029, 4294901760
      %v1463 = vsub.f32 %v1029, %v1462
      %v1464 = vand.u32 %v1463, 4294901760
      %1465 = vmatpush1.msra.mxu0 %v1464
      %1466 = vmatprep.subr.mxu0 0.0
      %v1467 = vand.u32 %v1028, 4294901760
      %v1468 = vsub.f32 %v1028, %v1467
      %v1469 = vand.u32 %v1468, 4294901760
      %1470 = vmatpush1.msra.mxu0 %v1469
      %1471 = vmatprep.subr.mxu0 0.0
      %v1472 = vand.u32 %v1027, 4294901760
      %v1473 = vsub.f32 %v1027, %v1472
      %v1474 = vand.u32 %v1473, 4294901760
      %1475 = vmatpush1.msra.mxu0 %v1474
      %1476 = vmatprep.subr.mxu0 0.0
      %v1477 = vand.u32 %v1026, 4294901760
      %v1478 = vsub.f32 %v1026, %v1477
      %v1479 = vand.u32 %v1478, 4294901760
      %1480 = vmatpush1.msra.mxu0 %v1479
      %1481 = vmatprep.subr.mxu0 0.0
      %v1482 = vand.u32 %v1025, 4294901760
      %v1483 = vsub.f32 %v1025, %v1482
      %v1484 = vand.u32 %v1483, 4294901760
      %1485 = vmatpush1.msra.mxu0 %v1484
      %1486 = vmatprep.subr.mxu0 0.0
      %v1487 = vand.u32 %v1024, 4294901760
      %v1488 = vsub.f32 %v1024, %v1487
      %v1489 = vand.u32 %v1488, 4294901760
      %1490 = vmatpush1.msra.mxu0 %v1489
      %1491 = vmatprep.subr.mxu0 0.0
      %1492 = vmatpush2.msra.mxu0 0.0
      %1493 = vmatprep.subr.mxu0 0.0
      %1494 = vmatpush2.msra.mxu0 0.0
      %1495 = vmatprep.subr.mxu0 0.0
      %1496 = vmatpush2.msra.mxu0 0.0
      %1497 = vmatprep.subr.mxu0 0.0
      %1498 = vmatpush2.msra.mxu0 0.0
      %1499 = vmatprep.subr.mxu0 0.0
      %1500 = vmatpush2.msra.mxu0 0.0
      %1501 = vmatprep.subr.mxu0 0.0
      %1502 = vmatpush2.msra.mxu0 0.0
      %1503 = vmatprep.subr.mxu0 0.0
      %1504 = vmatpush2.msra.mxu0 0.0
      %1505 = vmatprep.subr.mxu0 0.0
      %1506 = vmatpush2.msra.mxu0 0.0
      %1507 = vmatprep.subr.mxu0 0.0
      %1508 = vmatpush2.msra.mxu0 0.0
      %1509 = vmatprep.subr.mxu0 0.0
      %1510 = vmatpush2.msra.mxu0 0.0
      %1511 = vmatprep.subr.mxu0 0.0
      %1512 = vmatpush2.msra.mxu0 0.0
      %1513 = vmatprep.subr.mxu0 0.0
      %1514 = vmatpush2.msra.mxu0 0.0
      %1515 = vmatprep.subr.mxu0 0.0
      %1516 = vmatpush2.msra.mxu0 0.0
      %1517 = vmatprep.subr.mxu0 0.0
      %1518 = vmatpush2.msra.mxu0 0.0
      %1519 = vmatprep.subr.mxu0 0.0
      %1520 = vmatpush2.msra.mxu0 0.0
      %1521 = vmatprep.subr.mxu0 0.0
      %1522 = vmatpush2.msra.mxu0 0.0
      %1523 = vmatprep.mubr.f32.mxu0 0.0
      %v1524 = vand.u32 %v1036, 4294901760
      %1525 = vmatmul.mubr.f32.gmra.mxu0 %v1524
      %v1526 = vpop.f32.mrf.mxu0
      %v1527 = vadd.f32 %v1424, %v1526
      %v1528 = vpop.f32.mrf.mxu0
      %1529 = vmatprep.mubr.f32.mxu0 0.0
      %v1530 = vand.u32 %v1039, 4294901760
      %1531 = vmatmul.mubr.f32.gmra.mxu0 %v1530
      %v1532 = vpop.f32.mrf.mxu0
      %v1533 = vadd.f32 %v1432, %v1532
      %v1534 = vpop.f32.mrf.mxu0
      %1535 = vdwg.mxu0
      %1536 = vmatprep.subr.mxu0 0.0
      %1537 = vmatpush1.msra.mxu0 0.0
      %1538 = vmatprep.subr.mxu0 0.0
      %1539 = vmatpush1.msra.mxu0 0.0
      %1540 = vmatprep.subr.mxu0 0.0
      %1541 = vmatpush1.msra.mxu0 0.0
      %1542 = vmatprep.subr.mxu0 0.0
      %1543 = vmatpush1.msra.mxu0 0.0
      %1544 = vmatprep.subr.mxu0 0.0
      %1545 = vmatpush1.msra.mxu0 0.0
      %1546 = vmatprep.subr.mxu0 0.0
      %1547 = vmatpush1.msra.mxu0 0.0
      %1548 = vmatprep.subr.mxu0 0.0
      %1549 = vmatpush1.msra.mxu0 0.0
      %1550 = vmatprep.subr.mxu0 0.0
      %1551 = vmatpush1.msra.mxu0 0.0
      %1552 = vmatprep.subr.mxu0 0.0
      %v1553 = vand.u32 %v1031, 4294901760
      %1554 = vmatpush1.msra.mxu0 %v1553
      %1555 = vmatprep.subr.mxu0 0.0
      %v1556 = vand.u32 %v1030, 4294901760
      %1557 = vmatpush1.msra.mxu0 %v1556
      %1558 = vmatprep.subr.mxu0 0.0
      %v1559 = vand.u32 %v1029, 4294901760
      %1560 = vmatpush1.msra.mxu0 %v1559
      %1561 = vmatprep.subr.mxu0 0.0
      %v1562 = vand.u32 %v1028, 4294901760
      %1563 = vmatpush1.msra.mxu0 %v1562
      %1564 = vmatprep.subr.mxu0 0.0
      %v1565 = vand.u32 %v1027, 4294901760
      %1566 = vmatpush1.msra.mxu0 %v1565
      %1567 = vmatprep.subr.mxu0 0.0
      %v1568 = vand.u32 %v1026, 4294901760
      %1569 = vmatpush1.msra.mxu0 %v1568
      %1570 = vmatprep.subr.mxu0 0.0
      %v1571 = vand.u32 %v1025, 4294901760
      %1572 = vmatpush1.msra.mxu0 %v1571
      %1573 = vmatprep.subr.mxu0 0.0
      %v1574 = vand.u32 %v1024, 4294901760
      %1575 = vmatpush1.msra.mxu0 %v1574
      %1576 = vmatprep.subr.mxu0 0.0
      %1577 = vmatpush2.msra.mxu0 0.0
      %1578 = vmatprep.subr.mxu0 0.0
      %1579 = vmatpush2.msra.mxu0 0.0
      %1580 = vmatprep.subr.mxu0 0.0
      %1581 = vmatpush2.msra.mxu0 0.0
      %1582 = vmatprep.subr.mxu0 0.0
      %1583 = vmatpush2.msra.mxu0 0.0
      %1584 = vmatprep.subr.mxu0 0.0
      %1585 = vmatpush2.msra.mxu0 0.0
      %1586 = vmatprep.subr.mxu0 0.0
      %1587 = vmatpush2.msra.mxu0 0.0
      %1588 = vmatprep.subr.mxu0 0.0
      %1589 = vmatpush2.msra.mxu0 0.0
      %1590 = vmatprep.subr.mxu0 0.0
      %1591 = vmatpush2.msra.mxu0 0.0
      %1592 = vmatprep.subr.mxu0 0.0
      %1593 = vmatpush2.msra.mxu0 0.0
      %1594 = vmatprep.subr.mxu0 0.0
      %1595 = vmatpush2.msra.mxu0 0.0
      %1596 = vmatprep.subr.mxu0 0.0
      %1597 = vmatpush2.msra.mxu0 0.0
      %1598 = vmatprep.subr.mxu0 0.0
      %1599 = vmatpush2.msra.mxu0 0.0
      %1600 = vmatprep.subr.mxu0 0.0
      %1601 = vmatpush2.msra.mxu0 0.0
      %1602 = vmatprep.subr.mxu0 0.0
      %1603 = vmatpush2.msra.mxu0 0.0
      %1604 = vmatprep.subr.mxu0 0.0
      %1605 = vmatpush2.msra.mxu0 0.0
      %1606 = vmatprep.subr.mxu0 0.0
      %1607 = vmatpush2.msra.mxu0 0.0
      %1608 = vmatprep.mubr.f32.mxu0 0.0
      %v1609 = vand.u32 %v1036, 4294901760
      %1610 = vmatmul.mubr.f32.gmra.mxu0 %v1609
      %v1611 = vpop.f32.mrf.mxu0
      %v1612 = vadd.f32 %v1527, %v1611
      %v1613 = vpop.f32.mrf.mxu0
      %1614 = vmatprep.mubr.f32.mxu0 0.0
      %v1615 = vand.u32 %v1039, 4294901760
      %1616 = vmatmul.mubr.f32.gmra.mxu0 %v1615
      %v1617 = vpop.f32.mrf.mxu0
      %v1618 = vadd.f32 %v1533, %v1617
      %v1619 = vpop.f32.mrf.mxu0
      %1620 = vdwg.mxu0
      %s1621 = scalar_lea.vmem %s205, 16
      %v1622 = vld [vmem:[%s1621] sm:$0xff]
      %v1623 = vld [vmem:[%s1621 + $0x8] sm:$0xff]
      %v1625 = vsel %vm1034, %v1622, 0
      %v1628 = vsel %vm1034, %v1623, 0
      %1630 = vmatprep.subr.mxu0 0.0
      %1631 = vmatpush1.msra.mxu0 0.0
      %1632 = vmatprep.subr.mxu0 0.0
      %1633 = vmatpush1.msra.mxu0 0.0
      %1634 = vmatprep.subr.mxu0 0.0
      %1635 = vmatpush1.msra.mxu0 0.0
      %1636 = vmatprep.subr.mxu0 0.0
      %1637 = vmatpush1.msra.mxu0 0.0
      %1638 = vmatprep.subr.mxu0 0.0
      %1639 = vmatpush1.msra.mxu0 0.0
      %1640 = vmatprep.subr.mxu0 0.0
      %1641 = vmatpush1.msra.mxu0 0.0
      %1642 = vmatprep.subr.mxu0 0.0
      %1643 = vmatpush1.msra.mxu0 0.0
      %1644 = vmatprep.subr.mxu0 0.0
      %1645 = vmatpush1.msra.mxu0 0.0
      %1646 = vmatprep.subr.mxu0 0.0
      %v1647 = vand.u32 %v1031, 4294901760
      %1648 = vmatpush1.msra.mxu0 %v1647
      %1649 = vmatprep.subr.mxu0 0.0
      %v1650 = vand.u32 %v1030, 4294901760
      %1651 = vmatpush1.msra.mxu0 %v1650
      %1652 = vmatprep.subr.mxu0 0.0
      %v1653 = vand.u32 %v1029, 4294901760
      %1654 = vmatpush1.msra.mxu0 %v1653
      %1655 = vmatprep.subr.mxu0 0.0
      %v1656 = vand.u32 %v1028, 4294901760
      %1657 = vmatpush1.msra.mxu0 %v1656
      %1658 = vmatprep.subr.mxu0 0.0
      %v1659 = vand.u32 %v1027, 4294901760
      %1660 = vmatpush1.msra.mxu0 %v1659
      %1661 = vmatprep.subr.mxu0 0.0
      %v1662 = vand.u32 %v1026, 4294901760
      %1663 = vmatpush1.msra.mxu0 %v1662
      %1664 = vmatprep.subr.mxu0 0.0
      %v1665 = vand.u32 %v1025, 4294901760
      %1666 = vmatpush1.msra.mxu0 %v1665
      %1667 = vmatprep.subr.mxu0 0.0
      %v1668 = vand.u32 %v1024, 4294901760
      %1669 = vmatpush1.msra.mxu0 %v1668
      %1670 = vmatprep.subr.mxu0 0.0
      %1671 = vmatpush2.msra.mxu0 0.0
      %1672 = vmatprep.subr.mxu0 0.0
      %1673 = vmatpush2.msra.mxu0 0.0
      %1674 = vmatprep.subr.mxu0 0.0
      %1675 = vmatpush2.msra.mxu0 0.0
      %1676 = vmatprep.subr.mxu0 0.0
      %1677 = vmatpush2.msra.mxu0 0.0
      %1678 = vmatprep.subr.mxu0 0.0
      %1679 = vmatpush2.msra.mxu0 0.0
      %1680 = vmatprep.subr.mxu0 0.0
      %1681 = vmatpush2.msra.mxu0 0.0
      %1682 = vmatprep.subr.mxu0 0.0
      %1683 = vmatpush2.msra.mxu0 0.0
      %1684 = vmatprep.subr.mxu0 0.0
      %1685 = vmatpush2.msra.mxu0 0.0
      %1686 = vmatprep.subr.mxu0 0.0
      %1687 = vmatpush2.msra.mxu0 0.0
      %1688 = vmatprep.subr.mxu0 0.0
      %1689 = vmatpush2.msra.mxu0 0.0
      %1690 = vmatprep.subr.mxu0 0.0
      %1691 = vmatpush2.msra.mxu0 0.0
      %1692 = vmatprep.subr.mxu0 0.0
      %1693 = vmatpush2.msra.mxu0 0.0
      %1694 = vmatprep.subr.mxu0 0.0
      %1695 = vmatpush2.msra.mxu0 0.0
      %1696 = vmatprep.subr.mxu0 0.0
      %1697 = vmatpush2.msra.mxu0 0.0
      %1698 = vmatprep.subr.mxu0 0.0
      %1699 = vmatpush2.msra.mxu0 0.0
      %1700 = vmatprep.subr.mxu0 0.0
      %1701 = vmatpush2.msra.mxu0 0.0
      %1702 = vmatprep.mubr.f32.mxu0 0.0
      %v1703 = vand.u32 %v1625, 4294901760
      %v1704 = vsub.f32 %v1625, %v1703
      %v1705 = vand.u32 %v1704, 4294901760
      %v1706 = vsub.f32 %v1704, %v1705
      %v1707 = vand.u32 %v1706, 4294901760
      %1708 = vmatmul.mubr.f32.gmra.mxu0 %v1707
      %v1709 = vpop.f32.mrf.mxu0
      %v1710 = vadd.f32 0.0, %v1709
      %v1711 = vpop.f32.mrf.mxu0
      %1712 = vmatprep.mubr.f32.mxu0 0.0
      %v1713 = vand.u32 %v1628, 4294901760
      %v1714 = vsub.f32 %v1628, %v1713
      %v1715 = vand.u32 %v1714, 4294901760
      %v1716 = vsub.f32 %v1714, %v1715
      %v1717 = vand.u32 %v1716, 4294901760
      %1718 = vmatmul.mubr.f32.gmra.mxu0 %v1717
      %v1719 = vpop.f32.mrf.mxu0
      %v1720 = vadd.f32 0.0, %v1719
      %v1721 = vpop.f32.mrf.mxu0
      %1722 = vdwg.mxu0
      %1723 = vmatprep.subr.mxu0 0.0
      %1724 = vmatpush1.msra.mxu0 0.0
      %1725 = vmatprep.subr.mxu0 0.0
      %1726 = vmatpush1.msra.mxu0 0.0
      %1727 = vmatprep.subr.mxu0 0.0
      %1728 = vmatpush1.msra.mxu0 0.0
      %1729 = vmatprep.subr.mxu0 0.0
      %1730 = vmatpush1.msra.mxu0 0.0
      %1731 = vmatprep.subr.mxu0 0.0
      %1732 = vmatpush1.msra.mxu0 0.0
      %1733 = vmatprep.subr.mxu0 0.0
      %1734 = vmatpush1.msra.mxu0 0.0
      %1735 = vmatprep.subr.mxu0 0.0
      %1736 = vmatpush1.msra.mxu0 0.0
      %1737 = vmatprep.subr.mxu0 0.0
      %1738 = vmatpush1.msra.mxu0 0.0
      %1739 = vmatprep.subr.mxu0 0.0
      %v1740 = vand.u32 %v1031, 4294901760
      %v1741 = vsub.f32 %v1031, %v1740
      %v1742 = vand.u32 %v1741, 4294901760
      %v1743 = vsub.f32 %v1741, %v1742
      %v1744 = vand.u32 %v1743, 4294901760
      %1745 = vmatpush1.msra.mxu0 %v1744
      %1746 = vmatprep.subr.mxu0 0.0
      %v1747 = vand.u32 %v1030, 4294901760
      %v1748 = vsub.f32 %v1030, %v1747
      %v1749 = vand.u32 %v1748, 4294901760
      %v1750 = vsub.f32 %v1748, %v1749
      %v1751 = vand.u32 %v1750, 4294901760
      %1752 = vmatpush1.msra.mxu0 %v1751
      %1753 = vmatprep.subr.mxu0 0.0
      %v1754 = vand.u32 %v1029, 4294901760
      %v1755 = vsub.f32 %v1029, %v1754
      %v1756 = vand.u32 %v1755, 4294901760
      %v1757 = vsub.f32 %v1755, %v1756
      %v1758 = vand.u32 %v1757, 4294901760
      %1759 = vmatpush1.msra.mxu0 %v1758
      %1760 = vmatprep.subr.mxu0 0.0
      %v1761 = vand.u32 %v1028, 4294901760
      %v1762 = vsub.f32 %v1028, %v1761
      %v1763 = vand.u32 %v1762, 4294901760
      %v1764 = vsub.f32 %v1762, %v1763
      %v1765 = vand.u32 %v1764, 4294901760
      %1766 = vmatpush1.msra.mxu0 %v1765
      %1767 = vmatprep.subr.mxu0 0.0
      %v1768 = vand.u32 %v1027, 4294901760
      %v1769 = vsub.f32 %v1027, %v1768
      %v1770 = vand.u32 %v1769, 4294901760
      %v1771 = vsub.f32 %v1769, %v1770
      %v1772 = vand.u32 %v1771, 4294901760
      %1773 = vmatpush1.msra.mxu0 %v1772
      %1774 = vmatprep.subr.mxu0 0.0
      %v1775 = vand.u32 %v1026, 4294901760
      %v1776 = vsub.f32 %v1026, %v1775
      %v1777 = vand.u32 %v1776, 4294901760
      %v1778 = vsub.f32 %v1776, %v1777
      %v1779 = vand.u32 %v1778, 4294901760
      %1780 = vmatpush1.msra.mxu0 %v1779
      %1781 = vmatprep.subr.mxu0 0.0
      %v1782 = vand.u32 %v1025, 4294901760
      %v1783 = vsub.f32 %v1025, %v1782
      %v1784 = vand.u32 %v1783, 4294901760
      %v1785 = vsub.f32 %v1783, %v1784
      %v1786 = vand.u32 %v1785, 4294901760
      %1787 = vmatpush1.msra.mxu0 %v1786
      %1788 = vmatprep.subr.mxu0 0.0
      %v1789 = vand.u32 %v1024, 4294901760
      %v1790 = vsub.f32 %v1024, %v1789
      %v1791 = vand.u32 %v1790, 4294901760
      %v1792 = vsub.f32 %v1790, %v1791
      %v1793 = vand.u32 %v1792, 4294901760
      %1794 = vmatpush1.msra.mxu0 %v1793
      %1795 = vmatprep.subr.mxu0 0.0
      %1796 = vmatpush2.msra.mxu0 0.0
      %1797 = vmatprep.subr.mxu0 0.0
      %1798 = vmatpush2.msra.mxu0 0.0
      %1799 = vmatprep.subr.mxu0 0.0
      %1800 = vmatpush2.msra.mxu0 0.0
      %1801 = vmatprep.subr.mxu0 0.0
      %1802 = vmatpush2.msra.mxu0 0.0
      %1803 = vmatprep.subr.mxu0 0.0
      %1804 = vmatpush2.msra.mxu0 0.0
      %1805 = vmatprep.subr.mxu0 0.0
      %1806 = vmatpush2.msra.mxu0 0.0
      %1807 = vmatprep.subr.mxu0 0.0
      %1808 = vmatpush2.msra.mxu0 0.0
      %1809 = vmatprep.subr.mxu0 0.0
      %1810 = vmatpush2.msra.mxu0 0.0
      %1811 = vmatprep.subr.mxu0 0.0
      %1812 = vmatpush2.msra.mxu0 0.0
      %1813 = vmatprep.subr.mxu0 0.0
      %1814 = vmatpush2.msra.mxu0 0.0
      %1815 = vmatprep.subr.mxu0 0.0
      %1816 = vmatpush2.msra.mxu0 0.0
      %1817 = vmatprep.subr.mxu0 0.0
      %1818 = vmatpush2.msra.mxu0 0.0
      %1819 = vmatprep.subr.mxu0 0.0
      %1820 = vmatpush2.msra.mxu0 0.0
      %1821 = vmatprep.subr.mxu0 0.0
      %1822 = vmatpush2.msra.mxu0 0.0
      %1823 = vmatprep.subr.mxu0 0.0
      %1824 = vmatpush2.msra.mxu0 0.0
      %1825 = vmatprep.subr.mxu0 0.0
      %1826 = vmatpush2.msra.mxu0 0.0
      %1827 = vmatprep.mubr.f32.mxu0 0.0
      %v1828 = vand.u32 %v1625, 4294901760
      %1829 = vmatmul.mubr.f32.gmra.mxu0 %v1828
      %v1830 = vpop.f32.mrf.mxu0
      %v1831 = vadd.f32 %v1710, %v1830
      %v1832 = vpop.f32.mrf.mxu0
      %1833 = vmatprep.mubr.f32.mxu0 0.0
      %v1834 = vand.u32 %v1628, 4294901760
      %1835 = vmatmul.mubr.f32.gmra.mxu0 %v1834
      %v1836 = vpop.f32.mrf.mxu0
      %v1837 = vadd.f32 %v1720, %v1836
      %v1838 = vpop.f32.mrf.mxu0
      %1839 = vdwg.mxu0
      %1840 = vmatprep.subr.mxu0 0.0
      %1841 = vmatpush1.msra.mxu0 0.0
      %1842 = vmatprep.subr.mxu0 0.0
      %1843 = vmatpush1.msra.mxu0 0.0
      %1844 = vmatprep.subr.mxu0 0.0
      %1845 = vmatpush1.msra.mxu0 0.0
      %1846 = vmatprep.subr.mxu0 0.0
      %1847 = vmatpush1.msra.mxu0 0.0
      %1848 = vmatprep.subr.mxu0 0.0
      %1849 = vmatpush1.msra.mxu0 0.0
      %1850 = vmatprep.subr.mxu0 0.0
      %1851 = vmatpush1.msra.mxu0 0.0
      %1852 = vmatprep.subr.mxu0 0.0
      %1853 = vmatpush1.msra.mxu0 0.0
      %1854 = vmatprep.subr.mxu0 0.0
      %1855 = vmatpush1.msra.mxu0 0.0
      %1856 = vmatprep.subr.mxu0 0.0
      %v1857 = vand.u32 %v1031, 4294901760
      %v1858 = vsub.f32 %v1031, %v1857
      %1859 = vmatpush1.msra.mxu0 %v1858
      %1860 = vmatprep.subr.mxu0 0.0
      %v1861 = vand.u32 %v1030, 4294901760
      %v1862 = vsub.f32 %v1030, %v1861
      %1863 = vmatpush1.msra.mxu0 %v1862
      %1864 = vmatprep.subr.mxu0 0.0
      %v1865 = vand.u32 %v1029, 4294901760
      %v1866 = vsub.f32 %v1029, %v1865
      %1867 = vmatpush1.msra.mxu0 %v1866
      %1868 = vmatprep.subr.mxu0 0.0
      %v1869 = vand.u32 %v1028, 4294901760
      %v1870 = vsub.f32 %v1028, %v1869
      %1871 = vmatpush1.msra.mxu0 %v1870
      %1872 = vmatprep.subr.mxu0 0.0
      %v1873 = vand.u32 %v1027, 4294901760
      %v1874 = vsub.f32 %v1027, %v1873
      %1875 = vmatpush1.msra.mxu0 %v1874
      %1876 = vmatprep.subr.mxu0 0.0
      %v1877 = vand.u32 %v1026, 4294901760
      %v1878 = vsub.f32 %v1026, %v1877
      %1879 = vmatpush1.msra.mxu0 %v1878
      %1880 = vmatprep.subr.mxu0 0.0
      %v1881 = vand.u32 %v1025, 4294901760
      %v1882 = vsub.f32 %v1025, %v1881
      %1883 = vmatpush1.msra.mxu0 %v1882
      %1884 = vmatprep.subr.mxu0 0.0
      %v1885 = vand.u32 %v1024, 4294901760
      %v1886 = vsub.f32 %v1024, %v1885
      %1887 = vmatpush1.msra.mxu0 %v1886
      %1888 = vmatprep.subr.mxu0 0.0
      %1889 = vmatpush2.msra.mxu0 0.0
      %1890 = vmatprep.subr.mxu0 0.0
      %1891 = vmatpush2.msra.mxu0 0.0
      %1892 = vmatprep.subr.mxu0 0.0
      %1893 = vmatpush2.msra.mxu0 0.0
      %1894 = vmatprep.subr.mxu0 0.0
      %1895 = vmatpush2.msra.mxu0 0.0
      %1896 = vmatprep.subr.mxu0 0.0
      %1897 = vmatpush2.msra.mxu0 0.0
      %1898 = vmatprep.subr.mxu0 0.0
      %1899 = vmatpush2.msra.mxu0 0.0
      %1900 = vmatprep.subr.mxu0 0.0
      %1901 = vmatpush2.msra.mxu0 0.0
      %1902 = vmatprep.subr.mxu0 0.0
      %1903 = vmatpush2.msra.mxu0 0.0
      %1904 = vmatprep.subr.mxu0 0.0
      %1905 = vmatpush2.msra.mxu0 0.0
      %1906 = vmatprep.subr.mxu0 0.0
      %1907 = vmatpush2.msra.mxu0 0.0
      %1908 = vmatprep.subr.mxu0 0.0
      %1909 = vmatpush2.msra.mxu0 0.0
      %1910 = vmatprep.subr.mxu0 0.0
      %1911 = vmatpush2.msra.mxu0 0.0
      %1912 = vmatprep.subr.mxu0 0.0
      %1913 = vmatpush2.msra.mxu0 0.0
      %1914 = vmatprep.subr.mxu0 0.0
      %1915 = vmatpush2.msra.mxu0 0.0
      %1916 = vmatprep.subr.mxu0 0.0
      %1917 = vmatpush2.msra.mxu0 0.0
      %1918 = vmatprep.subr.mxu0 0.0
      %1919 = vmatpush2.msra.mxu0 0.0
      %1920 = vmatprep.mubr.f32.mxu0 0.0
      %v1921 = vand.u32 %v1625, 4294901760
      %v1922 = vsub.f32 %v1625, %v1921
      %1923 = vmatmul.mubr.f32.gmra.mxu0 %v1922
      %v1924 = vpop.f32.mrf.mxu0
      %v1925 = vadd.f32 %v1831, %v1924
      %v1926 = vpop.f32.mrf.mxu0
      %1927 = vmatprep.mubr.f32.mxu0 0.0
      %v1928 = vand.u32 %v1628, 4294901760
      %v1929 = vsub.f32 %v1628, %v1928
      %1930 = vmatmul.mubr.f32.gmra.mxu0 %v1929
      %v1931 = vpop.f32.mrf.mxu0
      %v1932 = vadd.f32 %v1837, %v1931
      %v1933 = vpop.f32.mrf.mxu0
      %1934 = vdwg.mxu0
      %1935 = vmatprep.subr.mxu0 0.0
      %1936 = vmatpush1.msra.mxu0 0.0
      %1937 = vmatprep.subr.mxu0 0.0
      %1938 = vmatpush1.msra.mxu0 0.0
      %1939 = vmatprep.subr.mxu0 0.0
      %1940 = vmatpush1.msra.mxu0 0.0
      %1941 = vmatprep.subr.mxu0 0.0
      %1942 = vmatpush1.msra.mxu0 0.0
      %1943 = vmatprep.subr.mxu0 0.0
      %1944 = vmatpush1.msra.mxu0 0.0
      %1945 = vmatprep.subr.mxu0 0.0
      %1946 = vmatpush1.msra.mxu0 0.0
      %1947 = vmatprep.subr.mxu0 0.0
      %1948 = vmatpush1.msra.mxu0 0.0
      %1949 = vmatprep.subr.mxu0 0.0
      %1950 = vmatpush1.msra.mxu0 0.0
      %1951 = vmatprep.subr.mxu0 0.0
      %v1952 = vand.u32 %v1031, 4294901760
      %1953 = vmatpush1.msra.mxu0 %v1952
      %1954 = vmatprep.subr.mxu0 0.0
      %v1955 = vand.u32 %v1030, 4294901760
      %1956 = vmatpush1.msra.mxu0 %v1955
      %1957 = vmatprep.subr.mxu0 0.0
      %v1958 = vand.u32 %v1029, 4294901760
      %1959 = vmatpush1.msra.mxu0 %v1958
      %1960 = vmatprep.subr.mxu0 0.0
      %v1961 = vand.u32 %v1028, 4294901760
      %1962 = vmatpush1.msra.mxu0 %v1961
      %1963 = vmatprep.subr.mxu0 0.0
      %v1964 = vand.u32 %v1027, 4294901760
      %1965 = vmatpush1.msra.mxu0 %v1964
      %1966 = vmatprep.subr.mxu0 0.0
      %v1967 = vand.u32 %v1026, 4294901760
      %1968 = vmatpush1.msra.mxu0 %v1967
      %1969 = vmatprep.subr.mxu0 0.0
      %v1970 = vand.u32 %v1025, 4294901760
      %1971 = vmatpush1.msra.mxu0 %v1970
      %1972 = vmatprep.subr.mxu0 0.0
      %v1973 = vand.u32 %v1024, 4294901760
      %1974 = vmatpush1.msra.mxu0 %v1973
      %1975 = vmatprep.subr.mxu0 0.0
      %1976 = vmatpush2.msra.mxu0 0.0
      %1977 = vmatprep.subr.mxu0 0.0
      %1978 = vmatpush2.msra.mxu0 0.0
      %1979 = vmatprep.subr.mxu0 0.0
      %1980 = vmatpush2.msra.mxu0 0.0
      %1981 = vmatprep.subr.mxu0 0.0
      %1982 = vmatpush2.msra.mxu0 0.0
      %1983 = vmatprep.subr.mxu0 0.0
      %1984 = vmatpush2.msra.mxu0 0.0
      %1985 = vmatprep.subr.mxu0 0.0
      %1986 = vmatpush2.msra.mxu0 0.0
      %1987 = vmatprep.subr.mxu0 0.0
      %1988 = vmatpush2.msra.mxu0 0.0
      %1989 = vmatprep.subr.mxu0 0.0
      %1990 = vmatpush2.msra.mxu0 0.0
      %1991 = vmatprep.subr.mxu0 0.0
      %1992 = vmatpush2.msra.mxu0 0.0
      %1993 = vmatprep.subr.mxu0 0.0
      %1994 = vmatpush2.msra.mxu0 0.0
      %1995 = vmatprep.subr.mxu0 0.0
      %1996 = vmatpush2.msra.mxu0 0.0
      %1997 = vmatprep.subr.mxu0 0.0
      %1998 = vmatpush2.msra.mxu0 0.0
      %1999 = vmatprep.subr.mxu0 0.0
      %2000 = vmatpush2.msra.mxu0 0.0
      %2001 = vmatprep.subr.mxu0 0.0
      %2002 = vmatpush2.msra.mxu0 0.0
      %2003 = vmatprep.subr.mxu0 0.0
      %2004 = vmatpush2.msra.mxu0 0.0
      %2005 = vmatprep.subr.mxu0 0.0
      %2006 = vmatpush2.msra.mxu0 0.0
      %2007 = vmatprep.mubr.f32.mxu0 0.0
      %v2008 = vand.u32 %v1625, 4294901760
      %v2009 = vsub.f32 %v1625, %v2008
      %v2010 = vand.u32 %v2009, 4294901760
      %2011 = vmatmul.mubr.f32.gmra.mxu0 %v2010
      %v2012 = vpop.f32.mrf.mxu0
      %v2013 = vadd.f32 %v1925, %v2012
      %v2014 = vpop.f32.mrf.mxu0
      %2015 = vmatprep.mubr.f32.mxu0 0.0
      %v2016 = vand.u32 %v1628, 4294901760
      %v2017 = vsub.f32 %v1628, %v2016
      %v2018 = vand.u32 %v2017, 4294901760
      %2019 = vmatmul.mubr.f32.gmra.mxu0 %v2018
      %v2020 = vpop.f32.mrf.mxu0
      %v2021 = vadd.f32 %v1932, %v2020
      %v2022 = vpop.f32.mrf.mxu0
      %2023 = vdwg.mxu0
      %2024 = vmatprep.subr.mxu0 0.0
      %2025 = vmatpush1.msra.mxu0 0.0
      %2026 = vmatprep.subr.mxu0 0.0
      %2027 = vmatpush1.msra.mxu0 0.0
      %2028 = vmatprep.subr.mxu0 0.0
      %2029 = vmatpush1.msra.mxu0 0.0
      %2030 = vmatprep.subr.mxu0 0.0
      %2031 = vmatpush1.msra.mxu0 0.0
      %2032 = vmatprep.subr.mxu0 0.0
      %2033 = vmatpush1.msra.mxu0 0.0
      %2034 = vmatprep.subr.mxu0 0.0
      %2035 = vmatpush1.msra.mxu0 0.0
      %2036 = vmatprep.subr.mxu0 0.0
      %2037 = vmatpush1.msra.mxu0 0.0
      %2038 = vmatprep.subr.mxu0 0.0
      %2039 = vmatpush1.msra.mxu0 0.0
      %2040 = vmatprep.subr.mxu0 0.0
      %v2041 = vand.u32 %v1031, 4294901760
      %v2042 = vsub.f32 %v1031, %v2041
      %v2043 = vand.u32 %v2042, 4294901760
      %2044 = vmatpush1.msra.mxu0 %v2043
      %2045 = vmatprep.subr.mxu0 0.0
      %v2046 = vand.u32 %v1030, 4294901760
      %v2047 = vsub.f32 %v1030, %v2046
      %v2048 = vand.u32 %v2047, 4294901760
      %2049 = vmatpush1.msra.mxu0 %v2048
      %2050 = vmatprep.subr.mxu0 0.0
      %v2051 = vand.u32 %v1029, 4294901760
      %v2052 = vsub.f32 %v1029, %v2051
      %v2053 = vand.u32 %v2052, 4294901760
      %2054 = vmatpush1.msra.mxu0 %v2053
      %2055 = vmatprep.subr.mxu0 0.0
      %v2056 = vand.u32 %v1028, 4294901760
      %v2057 = vsub.f32 %v1028, %v2056
      %v2058 = vand.u32 %v2057, 4294901760
      %2059 = vmatpush1.msra.mxu0 %v2058
      %2060 = vmatprep.subr.mxu0 0.0
      %v2061 = vand.u32 %v1027, 4294901760
      %v2062 = vsub.f32 %v1027, %v2061
      %v2063 = vand.u32 %v2062, 4294901760
      %2064 = vmatpush1.msra.mxu0 %v2063
      %2065 = vmatprep.subr.mxu0 0.0
      %v2066 = vand.u32 %v1026, 4294901760
      %v2067 = vsub.f32 %v1026, %v2066
      %v2068 = vand.u32 %v2067, 4294901760
      %2069 = vmatpush1.msra.mxu0 %v2068
      %2070 = vmatprep.subr.mxu0 0.0
      %v2071 = vand.u32 %v1025, 4294901760
      %v2072 = vsub.f32 %v1025, %v2071
      %v2073 = vand.u32 %v2072, 4294901760
      %2074 = vmatpush1.msra.mxu0 %v2073
      %2075 = vmatprep.subr.mxu0 0.0
      %v2076 = vand.u32 %v1024, 4294901760
      %v2077 = vsub.f32 %v1024, %v2076
      %v2078 = vand.u32 %v2077, 4294901760
      %2079 = vmatpush1.msra.mxu0 %v2078
      %2080 = vmatprep.subr.mxu0 0.0
      %2081 = vmatpush2.msra.mxu0 0.0
      %2082 = vmatprep.subr.mxu0 0.0
      %2083 = vmatpush2.msra.mxu0 0.0
      %2084 = vmatprep.subr.mxu0 0.0
      %2085 = vmatpush2.msra.mxu0 0.0
      %2086 = vmatprep.subr.mxu0 0.0
      %2087 = vmatpush2.msra.mxu0 0.0
      %2088 = vmatprep.subr.mxu0 0.0
      %2089 = vmatpush2.msra.mxu0 0.0
      %2090 = vmatprep.subr.mxu0 0.0
      %2091 = vmatpush2.msra.mxu0 0.0
      %2092 = vmatprep.subr.mxu0 0.0
      %2093 = vmatpush2.msra.mxu0 0.0
      %2094 = vmatprep.subr.mxu0 0.0
      %2095 = vmatpush2.msra.mxu0 0.0
      %2096 = vmatprep.subr.mxu0 0.0
      %2097 = vmatpush2.msra.mxu0 0.0
      %2098 = vmatprep.subr.mxu0 0.0
      %2099 = vmatpush2.msra.mxu0 0.0
      %2100 = vmatprep.subr.mxu0 0.0
      %2101 = vmatpush2.msra.mxu0 0.0
      %2102 = vmatprep.subr.mxu0 0.0
      %2103 = vmatpush2.msra.mxu0 0.0
      %2104 = vmatprep.subr.mxu0 0.0
      %2105 = vmatpush2.msra.mxu0 0.0
      %2106 = vmatprep.subr.mxu0 0.0
      %2107 = vmatpush2.msra.mxu0 0.0
      %2108 = vmatprep.subr.mxu0 0.0
      %2109 = vmatpush2.msra.mxu0 0.0
      %2110 = vmatprep.subr.mxu0 0.0
      %2111 = vmatpush2.msra.mxu0 0.0
      %2112 = vmatprep.mubr.f32.mxu0 0.0
      %v2113 = vand.u32 %v1625, 4294901760
      %2114 = vmatmul.mubr.f32.gmra.mxu0 %v2113
      %v2115 = vpop.f32.mrf.mxu0
      %v2116 = vadd.f32 %v2013, %v2115
      %v2117 = vpop.f32.mrf.mxu0
      %2118 = vmatprep.mubr.f32.mxu0 0.0
      %v2119 = vand.u32 %v1628, 4294901760
      %2120 = vmatmul.mubr.f32.gmra.mxu0 %v2119
      %v2121 = vpop.f32.mrf.mxu0
      %v2122 = vadd.f32 %v2021, %v2121
      %v2123 = vpop.f32.mrf.mxu0
      %2124 = vdwg.mxu0
      %2125 = vmatprep.subr.mxu0 0.0
      %2126 = vmatpush1.msra.mxu0 0.0
      %2127 = vmatprep.subr.mxu0 0.0
      %2128 = vmatpush1.msra.mxu0 0.0
      %2129 = vmatprep.subr.mxu0 0.0
      %2130 = vmatpush1.msra.mxu0 0.0
      %2131 = vmatprep.subr.mxu0 0.0
      %2132 = vmatpush1.msra.mxu0 0.0
      %2133 = vmatprep.subr.mxu0 0.0
      %2134 = vmatpush1.msra.mxu0 0.0
      %2135 = vmatprep.subr.mxu0 0.0
      %2136 = vmatpush1.msra.mxu0 0.0
      %2137 = vmatprep.subr.mxu0 0.0
      %2138 = vmatpush1.msra.mxu0 0.0
      %2139 = vmatprep.subr.mxu0 0.0
      %2140 = vmatpush1.msra.mxu0 0.0
      %2141 = vmatprep.subr.mxu0 0.0
      %v2142 = vand.u32 %v1031, 4294901760
      %2143 = vmatpush1.msra.mxu0 %v2142
      %2144 = vmatprep.subr.mxu0 0.0
      %v2145 = vand.u32 %v1030, 4294901760
      %2146 = vmatpush1.msra.mxu0 %v2145
      %2147 = vmatprep.subr.mxu0 0.0
      %v2148 = vand.u32 %v1029, 4294901760
      %2149 = vmatpush1.msra.mxu0 %v2148
      %2150 = vmatprep.subr.mxu0 0.0
      %v2151 = vand.u32 %v1028, 4294901760
      %2152 = vmatpush1.msra.mxu0 %v2151
      %2153 = vmatprep.subr.mxu0 0.0
      %v2154 = vand.u32 %v1027, 4294901760
      %2155 = vmatpush1.msra.mxu0 %v2154
      %2156 = vmatprep.subr.mxu0 0.0
      %v2157 = vand.u32 %v1026, 4294901760
      %2158 = vmatpush1.msra.mxu0 %v2157
      %2159 = vmatprep.subr.mxu0 0.0
      %v2160 = vand.u32 %v1025, 4294901760
      %2161 = vmatpush1.msra.mxu0 %v2160
      %2162 = vmatprep.subr.mxu0 0.0
      %v2163 = vand.u32 %v1024, 4294901760
      %2164 = vmatpush1.msra.mxu0 %v2163
      %2165 = vmatprep.subr.mxu0 0.0
      %2166 = vmatpush2.msra.mxu0 0.0
      %2167 = vmatprep.subr.mxu0 0.0
      %2168 = vmatpush2.msra.mxu0 0.0
      %2169 = vmatprep.subr.mxu0 0.0
      %2170 = vmatpush2.msra.mxu0 0.0
      %2171 = vmatprep.subr.mxu0 0.0
      %2172 = vmatpush2.msra.mxu0 0.0
      %2173 = vmatprep.subr.mxu0 0.0
      %2174 = vmatpush2.msra.mxu0 0.0
      %2175 = vmatprep.subr.mxu0 0.0
      %2176 = vmatpush2.msra.mxu0 0.0
      %2177 = vmatprep.subr.mxu0 0.0
      %2178 = vmatpush2.msra.mxu0 0.0
      %2179 = vmatprep.subr.mxu0 0.0
      %2180 = vmatpush2.msra.mxu0 0.0
      %2181 = vmatprep.subr.mxu0 0.0
      %2182 = vmatpush2.msra.mxu0 0.0
      %2183 = vmatprep.subr.mxu0 0.0
      %2184 = vmatpush2.msra.mxu0 0.0
      %2185 = vmatprep.subr.mxu0 0.0
      %2186 = vmatpush2.msra.mxu0 0.0
      %2187 = vmatprep.subr.mxu0 0.0
      %2188 = vmatpush2.msra.mxu0 0.0
      %2189 = vmatprep.subr.mxu0 0.0
      %2190 = vmatpush2.msra.mxu0 0.0
      %2191 = vmatprep.subr.mxu0 0.0
      %2192 = vmatpush2.msra.mxu0 0.0
      %2193 = vmatprep.subr.mxu0 0.0
      %2194 = vmatpush2.msra.mxu0 0.0
      %2195 = vmatprep.subr.mxu0 0.0
      %2196 = vmatpush2.msra.mxu0 0.0
      %2197 = vmatprep.mubr.f32.mxu0 0.0
      %v2198 = vand.u32 %v1625, 4294901760
      %2199 = vmatmul.mubr.f32.gmra.mxu0 %v2198
      %v2200 = vpop.f32.mrf.mxu0
      %v2201 = vadd.f32 %v2116, %v2200
      %v2202 = vpop.f32.mrf.mxu0
      %2203 = vmatprep.mubr.f32.mxu0 0.0
      %v2204 = vand.u32 %v1628, 4294901760
      %2205 = vmatmul.mubr.f32.gmra.mxu0 %v2204
      %v2206 = vpop.f32.mrf.mxu0
      %v2207 = vadd.f32 %v2122, %v2206
      %v2208 = vpop.f32.mrf.mxu0
      %2209 = vdwg.mxu0
      %s2210 = scalar_lea.vmem %s205, 32
      %v2211 = vld [vmem:[%s2210] sm:$0xff]
      %v2212 = vld [vmem:[%s2210 + $0x8] sm:$0xff]
      %v2214 = vsel %vm1034, %v2211, 0
      %v2217 = vsel %vm1034, %v2212, 0
      %2219 = vmatprep.subr.mxu0 0.0
      %2220 = vmatpush1.msra.mxu0 0.0
      %2221 = vmatprep.subr.mxu0 0.0
      %2222 = vmatpush1.msra.mxu0 0.0
      %2223 = vmatprep.subr.mxu0 0.0
      %2224 = vmatpush1.msra.mxu0 0.0
      %2225 = vmatprep.subr.mxu0 0.0
      %2226 = vmatpush1.msra.mxu0 0.0
      %2227 = vmatprep.subr.mxu0 0.0
      %2228 = vmatpush1.msra.mxu0 0.0
      %2229 = vmatprep.subr.mxu0 0.0
      %2230 = vmatpush1.msra.mxu0 0.0
      %2231 = vmatprep.subr.mxu0 0.0
      %2232 = vmatpush1.msra.mxu0 0.0
      %2233 = vmatprep.subr.mxu0 0.0
      %2234 = vmatpush1.msra.mxu0 0.0
      %2235 = vmatprep.subr.mxu0 0.0
      %v2236 = vand.u32 %v1031, 4294901760
      %2237 = vmatpush1.msra.mxu0 %v2236
      %2238 = vmatprep.subr.mxu0 0.0
      %v2239 = vand.u32 %v1030, 4294901760
      %2240 = vmatpush1.msra.mxu0 %v2239
      %2241 = vmatprep.subr.mxu0 0.0
      %v2242 = vand.u32 %v1029, 4294901760
      %2243 = vmatpush1.msra.mxu0 %v2242
      %2244 = vmatprep.subr.mxu0 0.0
      %v2245 = vand.u32 %v1028, 4294901760
      %2246 = vmatpush1.msra.mxu0 %v2245
      %2247 = vmatprep.subr.mxu0 0.0
      %v2248 = vand.u32 %v1027, 4294901760
      %2249 = vmatpush1.msra.mxu0 %v2248
      %2250 = vmatprep.subr.mxu0 0.0
      %v2251 = vand.u32 %v1026, 4294901760
      %2252 = vmatpush1.msra.mxu0 %v2251
      %2253 = vmatprep.subr.mxu0 0.0
      %v2254 = vand.u32 %v1025, 4294901760
      %2255 = vmatpush1.msra.mxu0 %v2254
      %2256 = vmatprep.subr.mxu0 0.0
      %v2257 = vand.u32 %v1024, 4294901760
      %2258 = vmatpush1.msra.mxu0 %v2257
      %2259 = vmatprep.subr.mxu0 0.0
      %2260 = vmatpush2.msra.mxu0 0.0
      %2261 = vmatprep.subr.mxu0 0.0
      %2262 = vmatpush2.msra.mxu0 0.0
      %2263 = vmatprep.subr.mxu0 0.0
      %2264 = vmatpush2.msra.mxu0 0.0
      %2265 = vmatprep.subr.mxu0 0.0
      %2266 = vmatpush2.msra.mxu0 0.0
      %2267 = vmatprep.subr.mxu0 0.0
      %2268 = vmatpush2.msra.mxu0 0.0
      %2269 = vmatprep.subr.mxu0 0.0
      %2270 = vmatpush2.msra.mxu0 0.0
      %2271 = vmatprep.subr.mxu0 0.0
      %2272 = vmatpush2.msra.mxu0 0.0
      %2273 = vmatprep.subr.mxu0 0.0
      %2274 = vmatpush2.msra.mxu0 0.0
      %2275 = vmatprep.subr.mxu0 0.0
      %2276 = vmatpush2.msra.mxu0 0.0
      %2277 = vmatprep.subr.mxu0 0.0
      %2278 = vmatpush2.msra.mxu0 0.0
      %2279 = vmatprep.subr.mxu0 0.0
      %2280 = vmatpush2.msra.mxu0 0.0
      %2281 = vmatprep.subr.mxu0 0.0
      %2282 = vmatpush2.msra.mxu0 0.0
      %2283 = vmatprep.subr.mxu0 0.0
      %2284 = vmatpush2.msra.mxu0 0.0
      %2285 = vmatprep.subr.mxu0 0.0
      %2286 = vmatpush2.msra.mxu0 0.0
      %2287 = vmatprep.subr.mxu0 0.0
      %2288 = vmatpush2.msra.mxu0 0.0
      %2289 = vmatprep.subr.mxu0 0.0
      %2290 = vmatpush2.msra.mxu0 0.0
      %2291 = vmatprep.mubr.f32.mxu0 0.0
      %v2292 = vand.u32 %v2214, 4294901760
      %v2293 = vsub.f32 %v2214, %v2292
      %v2294 = vand.u32 %v2293, 4294901760
      %v2295 = vsub.f32 %v2293, %v2294
      %v2296 = vand.u32 %v2295, 4294901760
      %2297 = vmatmul.mubr.f32.gmra.mxu0 %v2296
      %v2298 = vpop.f32.mrf.mxu0
      %v2299 = vadd.f32 0.0, %v2298
      %v2300 = vpop.f32.mrf.mxu0
      %2301 = vmatprep.mubr.f32.mxu0 0.0
      %v2302 = vand.u32 %v2217, 4294901760
      %v2303 = vsub.f32 %v2217, %v2302
      %v2304 = vand.u32 %v2303, 4294901760
      %v2305 = vsub.f32 %v2303, %v2304
      %v2306 = vand.u32 %v2305, 4294901760
      %2307 = vmatmul.mubr.f32.gmra.mxu0 %v2306
      %v2308 = vpop.f32.mrf.mxu0
      %v2309 = vadd.f32 0.0, %v2308
      %v2310 = vpop.f32.mrf.mxu0
      %2311 = vdwg.mxu0
      %2312 = vmatprep.subr.mxu0 0.0
      %2313 = vmatpush1.msra.mxu0 0.0
      %2314 = vmatprep.subr.mxu0 0.0
      %2315 = vmatpush1.msra.mxu0 0.0
      %2316 = vmatprep.subr.mxu0 0.0
      %2317 = vmatpush1.msra.mxu0 0.0
      %2318 = vmatprep.subr.mxu0 0.0
      %2319 = vmatpush1.msra.mxu0 0.0
      %2320 = vmatprep.subr.mxu0 0.0
      %2321 = vmatpush1.msra.mxu0 0.0
      %2322 = vmatprep.subr.mxu0 0.0
      %2323 = vmatpush1.msra.mxu0 0.0
      %2324 = vmatprep.subr.mxu0 0.0
      %2325 = vmatpush1.msra.mxu0 0.0
      %2326 = vmatprep.subr.mxu0 0.0
      %2327 = vmatpush1.msra.mxu0 0.0
      %2328 = vmatprep.subr.mxu0 0.0
      %v2329 = vand.u32 %v1031, 4294901760
      %v2330 = vsub.f32 %v1031, %v2329
      %v2331 = vand.u32 %v2330, 4294901760
      %v2332 = vsub.f32 %v2330, %v2331
      %v2333 = vand.u32 %v2332, 4294901760
      %2334 = vmatpush1.msra.mxu0 %v2333
      %2335 = vmatprep.subr.mxu0 0.0
      %v2336 = vand.u32 %v1030, 4294901760
      %v2337 = vsub.f32 %v1030, %v2336
      %v2338 = vand.u32 %v2337, 4294901760
      %v2339 = vsub.f32 %v2337, %v2338
      %v2340 = vand.u32 %v2339, 4294901760
      %2341 = vmatpush1.msra.mxu0 %v2340
      %2342 = vmatprep.subr.mxu0 0.0
      %v2343 = vand.u32 %v1029, 4294901760
      %v2344 = vsub.f32 %v1029, %v2343
      %v2345 = vand.u32 %v2344, 4294901760
      %v2346 = vsub.f32 %v2344, %v2345
      %v2347 = vand.u32 %v2346, 4294901760
      %2348 = vmatpush1.msra.mxu0 %v2347
      %2349 = vmatprep.subr.mxu0 0.0
      %v2350 = vand.u32 %v1028, 4294901760
      %v2351 = vsub.f32 %v1028, %v2350
      %v2352 = vand.u32 %v2351, 4294901760
      %v2353 = vsub.f32 %v2351, %v2352
      %v2354 = vand.u32 %v2353, 4294901760
      %2355 = vmatpush1.msra.mxu0 %v2354
      %2356 = vmatprep.subr.mxu0 0.0
      %v2357 = vand.u32 %v1027, 4294901760
      %v2358 = vsub.f32 %v1027, %v2357
      %v2359 = vand.u32 %v2358, 4294901760
      %v2360 = vsub.f32 %v2358, %v2359
      %v2361 = vand.u32 %v2360, 4294901760
      %2362 = vmatpush1.msra.mxu0 %v2361
      %2363 = vmatprep.subr.mxu0 0.0
      %v2364 = vand.u32 %v1026, 4294901760
      %v2365 = vsub.f32 %v1026, %v2364
      %v2366 = vand.u32 %v2365, 4294901760
      %v2367 = vsub.f32 %v2365, %v2366
      %v2368 = vand.u32 %v2367, 4294901760
      %2369 = vmatpush1.msra.mxu0 %v2368
      %2370 = vmatprep.subr.mxu0 0.0
      %v2371 = vand.u32 %v1025, 4294901760
      %v2372 = vsub.f32 %v1025, %v2371
      %v2373 = vand.u32 %v2372, 4294901760
      %v2374 = vsub.f32 %v2372, %v2373
      %v2375 = vand.u32 %v2374, 4294901760
      %2376 = vmatpush1.msra.mxu0 %v2375
      %2377 = vmatprep.subr.mxu0 0.0
      %v2378 = vand.u32 %v1024, 4294901760
      %v2379 = vsub.f32 %v1024, %v2378
      %v2380 = vand.u32 %v2379, 4294901760
      %v2381 = vsub.f32 %v2379, %v2380
      %v2382 = vand.u32 %v2381, 4294901760
      %2383 = vmatpush1.msra.mxu0 %v2382
      %2384 = vmatprep.subr.mxu0 0.0
      %2385 = vmatpush2.msra.mxu0 0.0
      %2386 = vmatprep.subr.mxu0 0.0
      %2387 = vmatpush2.msra.mxu0 0.0
      %2388 = vmatprep.subr.mxu0 0.0
      %2389 = vmatpush2.msra.mxu0 0.0
      %2390 = vmatprep.subr.mxu0 0.0
      %2391 = vmatpush2.msra.mxu0 0.0
      %2392 = vmatprep.subr.mxu0 0.0
      %2393 = vmatpush2.msra.mxu0 0.0
      %2394 = vmatprep.subr.mxu0 0.0
      %2395 = vmatpush2.msra.mxu0 0.0
      %2396 = vmatprep.subr.mxu0 0.0
      %2397 = vmatpush2.msra.mxu0 0.0
      %2398 = vmatprep.subr.mxu0 0.0
      %2399 = vmatpush2.msra.mxu0 0.0
      %2400 = vmatprep.subr.mxu0 0.0
      %2401 = vmatpush2.msra.mxu0 0.0
      %2402 = vmatprep.subr.mxu0 0.0
      %2403 = vmatpush2.msra.mxu0 0.0
      %2404 = vmatprep.subr.mxu0 0.0
      %2405 = vmatpush2.msra.mxu0 0.0
      %2406 = vmatprep.subr.mxu0 0.0
      %2407 = vmatpush2.msra.mxu0 0.0
      %2408 = vmatprep.subr.mxu0 0.0
      %2409 = vmatpush2.msra.mxu0 0.0
      %2410 = vmatprep.subr.mxu0 0.0
      %2411 = vmatpush2.msra.mxu0 0.0
      %2412 = vmatprep.subr.mxu0 0.0
      %2413 = vmatpush2.msra.mxu0 0.0
      %2414 = vmatprep.subr.mxu0 0.0
      %2415 = vmatpush2.msra.mxu0 0.0
      %2416 = vmatprep.mubr.f32.mxu0 0.0
      %v2417 = vand.u32 %v2214, 4294901760
      %2418 = vmatmul.mubr.f32.gmra.mxu0 %v2417
      %v2419 = vpop.f32.mrf.mxu0
      %v2420 = vadd.f32 %v2299, %v2419
      %v2421 = vpop.f32.mrf.mxu0
      %2422 = vmatprep.mubr.f32.mxu0 0.0
      %v2423 = vand.u32 %v2217, 4294901760
      %2424 = vmatmul.mubr.f32.gmra.mxu0 %v2423
      %v2425 = vpop.f32.mrf.mxu0
      %v2426 = vadd.f32 %v2309, %v2425
      %v2427 = vpop.f32.mrf.mxu0
      %2428 = vdwg.mxu0
      %2429 = vmatprep.subr.mxu0 0.0
      %2430 = vmatpush1.msra.mxu0 0.0
      %2431 = vmatprep.subr.mxu0 0.0
      %2432 = vmatpush1.msra.mxu0 0.0
      %2433 = vmatprep.subr.mxu0 0.0
      %2434 = vmatpush1.msra.mxu0 0.0
      %2435 = vmatprep.subr.mxu0 0.0
      %2436 = vmatpush1.msra.mxu0 0.0
      %2437 = vmatprep.subr.mxu0 0.0
      %2438 = vmatpush1.msra.mxu0 0.0
      %2439 = vmatprep.subr.mxu0 0.0
      %2440 = vmatpush1.msra.mxu0 0.0
      %2441 = vmatprep.subr.mxu0 0.0
      %2442 = vmatpush1.msra.mxu0 0.0
      %2443 = vmatprep.subr.mxu0 0.0
      %2444 = vmatpush1.msra.mxu0 0.0
      %2445 = vmatprep.subr.mxu0 0.0
      %v2446 = vand.u32 %v1031, 4294901760
      %v2447 = vsub.f32 %v1031, %v2446
      %2448 = vmatpush1.msra.mxu0 %v2447
      %2449 = vmatprep.subr.mxu0 0.0
      %v2450 = vand.u32 %v1030, 4294901760
      %v2451 = vsub.f32 %v1030, %v2450
      %2452 = vmatpush1.msra.mxu0 %v2451
      %2453 = vmatprep.subr.mxu0 0.0
      %v2454 = vand.u32 %v1029, 4294901760
      %v2455 = vsub.f32 %v1029, %v2454
      %2456 = vmatpush1.msra.mxu0 %v2455
      %2457 = vmatprep.subr.mxu0 0.0
      %v2458 = vand.u32 %v1028, 4294901760
      %v2459 = vsub.f32 %v1028, %v2458
      %2460 = vmatpush1.msra.mxu0 %v2459
      %2461 = vmatprep.subr.mxu0 0.0
      %v2462 = vand.u32 %v1027, 4294901760
      %v2463 = vsub.f32 %v1027, %v2462
      %2464 = vmatpush1.msra.mxu0 %v2463
      %2465 = vmatprep.subr.mxu0 0.0
      %v2466 = vand.u32 %v1026, 4294901760
      %v2467 = vsub.f32 %v1026, %v2466
      %2468 = vmatpush1.msra.mxu0 %v2467
      %2469 = vmatprep.subr.mxu0 0.0
      %v2470 = vand.u32 %v1025, 4294901760
      %v2471 = vsub.f32 %v1025, %v2470
      %2472 = vmatpush1.msra.mxu0 %v2471
      %2473 = vmatprep.subr.mxu0 0.0
      %v2474 = vand.u32 %v1024, 4294901760
      %v2475 = vsub.f32 %v1024, %v2474
      %2476 = vmatpush1.msra.mxu0 %v2475
      %2477 = vmatprep.subr.mxu0 0.0
      %2478 = vmatpush2.msra.mxu0 0.0
      %2479 = vmatprep.subr.mxu0 0.0
      %2480 = vmatpush2.msra.mxu0 0.0
      %2481 = vmatprep.subr.mxu0 0.0
      %2482 = vmatpush2.msra.mxu0 0.0
      %2483 = vmatprep.subr.mxu0 0.0
      %2484 = vmatpush2.msra.mxu0 0.0
      %2485 = vmatprep.subr.mxu0 0.0
      %2486 = vmatpush2.msra.mxu0 0.0
      %2487 = vmatprep.subr.mxu0 0.0
      %2488 = vmatpush2.msra.mxu0 0.0
      %2489 = vmatprep.subr.mxu0 0.0
      %2490 = vmatpush2.msra.mxu0 0.0
      %2491 = vmatprep.subr.mxu0 0.0
      %2492 = vmatpush2.msra.mxu0 0.0
      %2493 = vmatprep.subr.mxu0 0.0
      %2494 = vmatpush2.msra.mxu0 0.0
      %2495 = vmatprep.subr.mxu0 0.0
      %2496 = vmatpush2.msra.mxu0 0.0
      %2497 = vmatprep.subr.mxu0 0.0
      %2498 = vmatpush2.msra.mxu0 0.0
      %2499 = vmatprep.subr.mxu0 0.0
      %2500 = vmatpush2.msra.mxu0 0.0
      %2501 = vmatprep.subr.mxu0 0.0
      %2502 = vmatpush2.msra.mxu0 0.0
      %2503 = vmatprep.subr.mxu0 0.0
      %2504 = vmatpush2.msra.mxu0 0.0
      %2505 = vmatprep.subr.mxu0 0.0
      %2506 = vmatpush2.msra.mxu0 0.0
      %2507 = vmatprep.subr.mxu0 0.0
      %2508 = vmatpush2.msra.mxu0 0.0
      %2509 = vmatprep.mubr.f32.mxu0 0.0
      %v2510 = vand.u32 %v2214, 4294901760
      %v2511 = vsub.f32 %v2214, %v2510
      %2512 = vmatmul.mubr.f32.gmra.mxu0 %v2511
      %v2513 = vpop.f32.mrf.mxu0
      %v2514 = vadd.f32 %v2420, %v2513
      %v2515 = vpop.f32.mrf.mxu0
      %2516 = vmatprep.mubr.f32.mxu0 0.0
      %v2517 = vand.u32 %v2217, 4294901760
      %v2518 = vsub.f32 %v2217, %v2517
      %2519 = vmatmul.mubr.f32.gmra.mxu0 %v2518
      %v2520 = vpop.f32.mrf.mxu0
      %v2521 = vadd.f32 %v2426, %v2520
      %v2522 = vpop.f32.mrf.mxu0
      %2523 = vdwg.mxu0
      %2524 = vmatprep.subr.mxu0 0.0
      %2525 = vmatpush1.msra.mxu0 0.0
      %2526 = vmatprep.subr.mxu0 0.0
      %2527 = vmatpush1.msra.mxu0 0.0
      %2528 = vmatprep.subr.mxu0 0.0
      %2529 = vmatpush1.msra.mxu0 0.0
      %2530 = vmatprep.subr.mxu0 0.0
      %2531 = vmatpush1.msra.mxu0 0.0
      %2532 = vmatprep.subr.mxu0 0.0
      %2533 = vmatpush1.msra.mxu0 0.0
      %2534 = vmatprep.subr.mxu0 0.0
      %2535 = vmatpush1.msra.mxu0 0.0
      %2536 = vmatprep.subr.mxu0 0.0
      %2537 = vmatpush1.msra.mxu0 0.0
      %2538 = vmatprep.subr.mxu0 0.0
      %2539 = vmatpush1.msra.mxu0 0.0
      %2540 = vmatprep.subr.mxu0 0.0
      %v2541 = vand.u32 %v1031, 4294901760
      %2542 = vmatpush1.msra.mxu0 %v2541
      %2543 = vmatprep.subr.mxu0 0.0
      %v2544 = vand.u32 %v1030, 4294901760
      %2545 = vmatpush1.msra.mxu0 %v2544
      %2546 = vmatprep.subr.mxu0 0.0
      %v2547 = vand.u32 %v1029, 4294901760
      %2548 = vmatpush1.msra.mxu0 %v2547
      %2549 = vmatprep.subr.mxu0 0.0
      %v2550 = vand.u32 %v1028, 4294901760
      %2551 = vmatpush1.msra.mxu0 %v2550
      %2552 = vmatprep.subr.mxu0 0.0
      %v2553 = vand.u32 %v1027, 4294901760
      %2554 = vmatpush1.msra.mxu0 %v2553
      %2555 = vmatprep.subr.mxu0 0.0
      %v2556 = vand.u32 %v1026, 4294901760
      %2557 = vmatpush1.msra.mxu0 %v2556
      %2558 = vmatprep.subr.mxu0 0.0
      %v2559 = vand.u32 %v1025, 4294901760
      %2560 = vmatpush1.msra.mxu0 %v2559
      %2561 = vmatprep.subr.mxu0 0.0
      %v2562 = vand.u32 %v1024, 4294901760
      %2563 = vmatpush1.msra.mxu0 %v2562
      %2564 = vmatprep.subr.mxu0 0.0
      %2565 = vmatpush2.msra.mxu0 0.0
      %2566 = vmatprep.subr.mxu0 0.0
      %2567 = vmatpush2.msra.mxu0 0.0
      %2568 = vmatprep.subr.mxu0 0.0
      %2569 = vmatpush2.msra.mxu0 0.0
      %2570 = vmatprep.subr.mxu0 0.0
      %2571 = vmatpush2.msra.mxu0 0.0
      %2572 = vmatprep.subr.mxu0 0.0
      %2573 = vmatpush2.msra.mxu0 0.0
      %2574 = vmatprep.subr.mxu0 0.0
      %2575 = vmatpush2.msra.mxu0 0.0
      %2576 = vmatprep.subr.mxu0 0.0
      %2577 = vmatpush2.msra.mxu0 0.0
      %2578 = vmatprep.subr.mxu0 0.0
      %2579 = vmatpush2.msra.mxu0 0.0
      %2580 = vmatprep.subr.mxu0 0.0
      %2581 = vmatpush2.msra.mxu0 0.0
      %2582 = vmatprep.subr.mxu0 0.0
      %2583 = vmatpush2.msra.mxu0 0.0
      %2584 = vmatprep.subr.mxu0 0.0
      %2585 = vmatpush2.msra.mxu0 0.0
      %2586 = vmatprep.subr.mxu0 0.0
      %2587 = vmatpush2.msra.mxu0 0.0
      %2588 = vmatprep.subr.mxu0 0.0
      %2589 = vmatpush2.msra.mxu0 0.0
      %2590 = vmatprep.subr.mxu0 0.0
      %2591 = vmatpush2.msra.mxu0 0.0
      %2592 = vmatprep.subr.mxu0 0.0
      %2593 = vmatpush2.msra.mxu0 0.0
      %2594 = vmatprep.subr.mxu0 0.0
      %2595 = vmatpush2.msra.mxu0 0.0
      %2596 = vmatprep.mubr.f32.mxu0 0.0
      %v2597 = vand.u32 %v2214, 4294901760
      %v2598 = vsub.f32 %v2214, %v2597
      %v2599 = vand.u32 %v2598, 4294901760
      %2600 = vmatmul.mubr.f32.gmra.mxu0 %v2599
      %v2601 = vpop.f32.mrf.mxu0
      %v2602 = vadd.f32 %v2514, %v2601
      %v2603 = vpop.f32.mrf.mxu0
      %2604 = vmatprep.mubr.f32.mxu0 0.0
      %v2605 = vand.u32 %v2217, 4294901760
      %v2606 = vsub.f32 %v2217, %v2605
      %v2607 = vand.u32 %v2606, 4294901760
      %2608 = vmatmul.mubr.f32.gmra.mxu0 %v2607
      %v2609 = vpop.f32.mrf.mxu0
      %v2610 = vadd.f32 %v2521, %v2609
      %v2611 = vpop.f32.mrf.mxu0
      %2612 = vdwg.mxu0
      %2613 = vmatprep.subr.mxu0 0.0
      %2614 = vmatpush1.msra.mxu0 0.0
      %2615 = vmatprep.subr.mxu0 0.0
      %2616 = vmatpush1.msra.mxu0 0.0
      %2617 = vmatprep.subr.mxu0 0.0
      %2618 = vmatpush1.msra.mxu0 0.0
      %2619 = vmatprep.subr.mxu0 0.0
      %2620 = vmatpush1.msra.mxu0 0.0
      %2621 = vmatprep.subr.mxu0 0.0
      %2622 = vmatpush1.msra.mxu0 0.0
      %2623 = vmatprep.subr.mxu0 0.0
      %2624 = vmatpush1.msra.mxu0 0.0
      %2625 = vmatprep.subr.mxu0 0.0
      %2626 = vmatpush1.msra.mxu0 0.0
      %2627 = vmatprep.subr.mxu0 0.0
      %2628 = vmatpush1.msra.mxu0 0.0
      %2629 = vmatprep.subr.mxu0 0.0
      %v2630 = vand.u32 %v1031, 4294901760
      %v2631 = vsub.f32 %v1031, %v2630
      %v2632 = vand.u32 %v2631, 4294901760
      %2633 = vmatpush1.msra.mxu0 %v2632
      %2634 = vmatprep.subr.mxu0 0.0
      %v2635 = vand.u32 %v1030, 4294901760
      %v2636 = vsub.f32 %v1030, %v2635
      %v2637 = vand.u32 %v2636, 4294901760
      %2638 = vmatpush1.msra.mxu0 %v2637
      %2639 = vmatprep.subr.mxu0 0.0
      %v2640 = vand.u32 %v1029, 4294901760
      %v2641 = vsub.f32 %v1029, %v2640
      %v2642 = vand.u32 %v2641, 4294901760
      %2643 = vmatpush1.msra.mxu0 %v2642
      %2644 = vmatprep.subr.mxu0 0.0
      %v2645 = vand.u32 %v1028, 4294901760
      %v2646 = vsub.f32 %v1028, %v2645
      %v2647 = vand.u32 %v2646, 4294901760
      %2648 = vmatpush1.msra.mxu0 %v2647
      %2649 = vmatprep.subr.mxu0 0.0
      %v2650 = vand.u32 %v1027, 4294901760
      %v2651 = vsub.f32 %v1027, %v2650
      %v2652 = vand.u32 %v2651, 4294901760
      %2653 = vmatpush1.msra.mxu0 %v2652
      %2654 = vmatprep.subr.mxu0 0.0
      %v2655 = vand.u32 %v1026, 4294901760
      %v2656 = vsub.f32 %v1026, %v2655
      %v2657 = vand.u32 %v2656, 4294901760
      %2658 = vmatpush1.msra.mxu0 %v2657
      %2659 = vmatprep.subr.mxu0 0.0
      %v2660 = vand.u32 %v1025, 4294901760
      %v2661 = vsub.f32 %v1025, %v2660
      %v2662 = vand.u32 %v2661, 4294901760
      %2663 = vmatpush1.msra.mxu0 %v2662
      %2664 = vmatprep.subr.mxu0 0.0
      %v2665 = vand.u32 %v1024, 4294901760
      %v2666 = vsub.f32 %v1024, %v2665
      %v2667 = vand.u32 %v2666, 4294901760
      %2668 = vmatpush1.msra.mxu0 %v2667
      %2669 = vmatprep.subr.mxu0 0.0
      %2670 = vmatpush2.msra.mxu0 0.0
      %2671 = vmatprep.subr.mxu0 0.0
      %2672 = vmatpush2.msra.mxu0 0.0
      %2673 = vmatprep.subr.mxu0 0.0
      %2674 = vmatpush2.msra.mxu0 0.0
      %2675 = vmatprep.subr.mxu0 0.0
      %2676 = vmatpush2.msra.mxu0 0.0
      %2677 = vmatprep.subr.mxu0 0.0
      %2678 = vmatpush2.msra.mxu0 0.0
      %2679 = vmatprep.subr.mxu0 0.0
      %2680 = vmatpush2.msra.mxu0 0.0
      %2681 = vmatprep.subr.mxu0 0.0
      %2682 = vmatpush2.msra.mxu0 0.0
      %2683 = vmatprep.subr.mxu0 0.0
      %2684 = vmatpush2.msra.mxu0 0.0
      %2685 = vmatprep.subr.mxu0 0.0
      %2686 = vmatpush2.msra.mxu0 0.0
      %2687 = vmatprep.subr.mxu0 0.0
      %2688 = vmatpush2.msra.mxu0 0.0
      %2689 = vmatprep.subr.mxu0 0.0
      %2690 = vmatpush2.msra.mxu0 0.0
      %2691 = vmatprep.subr.mxu0 0.0
      %2692 = vmatpush2.msra.mxu0 0.0
      %2693 = vmatprep.subr.mxu0 0.0
      %2694 = vmatpush2.msra.mxu0 0.0
      %2695 = vmatprep.subr.mxu0 0.0
      %2696 = vmatpush2.msra.mxu0 0.0
      %2697 = vmatprep.subr.mxu0 0.0
      %2698 = vmatpush2.msra.mxu0 0.0
      %2699 = vmatprep.subr.mxu0 0.0
      %2700 = vmatpush2.msra.mxu0 0.0
      %2701 = vmatprep.mubr.f32.mxu0 0.0
      %v2702 = vand.u32 %v2214, 4294901760
      %2703 = vmatmul.mubr.f32.gmra.mxu0 %v2702
      %v2704 = vpop.f32.mrf.mxu0
      %v2705 = vadd.f32 %v2602, %v2704
      %v2706 = vpop.f32.mrf.mxu0
      %2707 = vmatprep.mubr.f32.mxu0 0.0
      %v2708 = vand.u32 %v2217, 4294901760
      %2709 = vmatmul.mubr.f32.gmra.mxu0 %v2708
      %v2710 = vpop.f32.mrf.mxu0
      %v2711 = vadd.f32 %v2610, %v2710
      %v2712 = vpop.f32.mrf.mxu0
      %2713 = vdwg.mxu0
      %2714 = vmatprep.subr.mxu0 0.0
      %2715 = vmatpush1.msra.mxu0 0.0
      %2716 = vmatprep.subr.mxu0 0.0
      %2717 = vmatpush1.msra.mxu0 0.0
      %2718 = vmatprep.subr.mxu0 0.0
      %2719 = vmatpush1.msra.mxu0 0.0
      %2720 = vmatprep.subr.mxu0 0.0
      %2721 = vmatpush1.msra.mxu0 0.0
      %2722 = vmatprep.subr.mxu0 0.0
      %2723 = vmatpush1.msra.mxu0 0.0
      %2724 = vmatprep.subr.mxu0 0.0
      %2725 = vmatpush1.msra.mxu0 0.0
      %2726 = vmatprep.subr.mxu0 0.0
      %2727 = vmatpush1.msra.mxu0 0.0
      %2728 = vmatprep.subr.mxu0 0.0
      %2729 = vmatpush1.msra.mxu0 0.0
      %2730 = vmatprep.subr.mxu0 0.0
      %v2731 = vand.u32 %v1031, 4294901760
      %2732 = vmatpush1.msra.mxu0 %v2731
      %2733 = vmatprep.subr.mxu0 0.0
      %v2734 = vand.u32 %v1030, 4294901760
      %2735 = vmatpush1.msra.mxu0 %v2734
      %2736 = vmatprep.subr.mxu0 0.0
      %v2737 = vand.u32 %v1029, 4294901760
      %2738 = vmatpush1.msra.mxu0 %v2737
      %2739 = vmatprep.subr.mxu0 0.0
      %v2740 = vand.u32 %v1028, 4294901760
      %2741 = vmatpush1.msra.mxu0 %v2740
      %2742 = vmatprep.subr.mxu0 0.0
      %v2743 = vand.u32 %v1027, 4294901760
      %2744 = vmatpush1.msra.mxu0 %v2743
      %2745 = vmatprep.subr.mxu0 0.0
      %v2746 = vand.u32 %v1026, 4294901760
      %2747 = vmatpush1.msra.mxu0 %v2746
      %2748 = vmatprep.subr.mxu0 0.0
      %v2749 = vand.u32 %v1025, 4294901760
      %2750 = vmatpush1.msra.mxu0 %v2749
      %2751 = vmatprep.subr.mxu0 0.0
      %v2752 = vand.u32 %v1024, 4294901760
      %2753 = vmatpush1.msra.mxu0 %v2752
      %2754 = vmatprep.subr.mxu0 0.0
      %2755 = vmatpush2.msra.mxu0 0.0
      %2756 = vmatprep.subr.mxu0 0.0
      %2757 = vmatpush2.msra.mxu0 0.0
      %2758 = vmatprep.subr.mxu0 0.0
      %2759 = vmatpush2.msra.mxu0 0.0
      %2760 = vmatprep.subr.mxu0 0.0
      %2761 = vmatpush2.msra.mxu0 0.0
      %2762 = vmatprep.subr.mxu0 0.0
      %2763 = vmatpush2.msra.mxu0 0.0
      %2764 = vmatprep.subr.mxu0 0.0
      %2765 = vmatpush2.msra.mxu0 0.0
      %2766 = vmatprep.subr.mxu0 0.0
      %2767 = vmatpush2.msra.mxu0 0.0
      %2768 = vmatprep.subr.mxu0 0.0
      %2769 = vmatpush2.msra.mxu0 0.0
      %2770 = vmatprep.subr.mxu0 0.0
      %2771 = vmatpush2.msra.mxu0 0.0
      %2772 = vmatprep.subr.mxu0 0.0
      %2773 = vmatpush2.msra.mxu0 0.0
      %2774 = vmatprep.subr.mxu0 0.0
      %2775 = vmatpush2.msra.mxu0 0.0
      %2776 = vmatprep.subr.mxu0 0.0
      %2777 = vmatpush2.msra.mxu0 0.0
      %2778 = vmatprep.subr.mxu0 0.0
      %2779 = vmatpush2.msra.mxu0 0.0
      %2780 = vmatprep.subr.mxu0 0.0
      %2781 = vmatpush2.msra.mxu0 0.0
      %2782 = vmatprep.subr.mxu0 0.0
      %2783 = vmatpush2.msra.mxu0 0.0
      %2784 = vmatprep.subr.mxu0 0.0
      %2785 = vmatpush2.msra.mxu0 0.0
      %2786 = vmatprep.mubr.f32.mxu0 0.0
      %v2787 = vand.u32 %v2214, 4294901760
      %2788 = vmatmul.mubr.f32.gmra.mxu0 %v2787
      %v2789 = vpop.f32.mrf.mxu0
      %v2790 = vadd.f32 %v2705, %v2789
      %v2791 = vpop.f32.mrf.mxu0
      %2792 = vmatprep.mubr.f32.mxu0 0.0
      %v2793 = vand.u32 %v2217, 4294901760
      %2794 = vmatmul.mubr.f32.gmra.mxu0 %v2793
      %v2795 = vpop.f32.mrf.mxu0
      %v2796 = vadd.f32 %v2711, %v2795
      %v2797 = vpop.f32.mrf.mxu0
      %2798 = vdwg.mxu0
      %s2799 = scalar_lea.vmem %s205, 48
      %v2800 = vld [vmem:[%s2799] sm:$0xff]
      %v2801 = vld [vmem:[%s2799 + $0x8] sm:$0xff]
      %v2803 = vsel %vm1034, %v2800, 0
      %v2806 = vsel %vm1034, %v2801, 0
      %2808 = vmatprep.subr.mxu0 0.0
      %2809 = vmatpush1.msra.mxu0 0.0
      %2810 = vmatprep.subr.mxu0 0.0
      %2811 = vmatpush1.msra.mxu0 0.0
      %2812 = vmatprep.subr.mxu0 0.0
      %2813 = vmatpush1.msra.mxu0 0.0
      %2814 = vmatprep.subr.mxu0 0.0
      %2815 = vmatpush1.msra.mxu0 0.0
      %2816 = vmatprep.subr.mxu0 0.0
      %2817 = vmatpush1.msra.mxu0 0.0
      %2818 = vmatprep.subr.mxu0 0.0
      %2819 = vmatpush1.msra.mxu0 0.0
      %2820 = vmatprep.subr.mxu0 0.0
      %2821 = vmatpush1.msra.mxu0 0.0
      %2822 = vmatprep.subr.mxu0 0.0
      %2823 = vmatpush1.msra.mxu0 0.0
      %2824 = vmatprep.subr.mxu0 0.0
      %v2825 = vand.u32 %v1031, 4294901760
      %2826 = vmatpush1.msra.mxu0 %v2825
      %2827 = vmatprep.subr.mxu0 0.0
      %v2828 = vand.u32 %v1030, 4294901760
      %2829 = vmatpush1.msra.mxu0 %v2828
      %2830 = vmatprep.subr.mxu0 0.0
      %v2831 = vand.u32 %v1029, 4294901760
      %2832 = vmatpush1.msra.mxu0 %v2831
      %2833 = vmatprep.subr.mxu0 0.0
      %v2834 = vand.u32 %v1028, 4294901760
      %2835 = vmatpush1.msra.mxu0 %v2834
      %2836 = vmatprep.subr.mxu0 0.0
      %v2837 = vand.u32 %v1027, 4294901760
      %2838 = vmatpush1.msra.mxu0 %v2837
      %2839 = vmatprep.subr.mxu0 0.0
      %v2840 = vand.u32 %v1026, 4294901760
      %2841 = vmatpush1.msra.mxu0 %v2840
      %2842 = vmatprep.subr.mxu0 0.0
      %v2843 = vand.u32 %v1025, 4294901760
      %2844 = vmatpush1.msra.mxu0 %v2843
      %2845 = vmatprep.subr.mxu0 0.0
      %v2846 = vand.u32 %v1024, 4294901760
      %2847 = vmatpush1.msra.mxu0 %v2846
      %2848 = vmatprep.subr.mxu0 0.0
      %2849 = vmatpush2.msra.mxu0 0.0
      %2850 = vmatprep.subr.mxu0 0.0
      %2851 = vmatpush2.msra.mxu0 0.0
      %2852 = vmatprep.subr.mxu0 0.0
      %2853 = vmatpush2.msra.mxu0 0.0
      %2854 = vmatprep.subr.mxu0 0.0
      %2855 = vmatpush2.msra.mxu0 0.0
      %2856 = vmatprep.subr.mxu0 0.0
      %2857 = vmatpush2.msra.mxu0 0.0
      %2858 = vmatprep.subr.mxu0 0.0
      %2859 = vmatpush2.msra.mxu0 0.0
      %2860 = vmatprep.subr.mxu0 0.0
      %2861 = vmatpush2.msra.mxu0 0.0
      %2862 = vmatprep.subr.mxu0 0.0
      %2863 = vmatpush2.msra.mxu0 0.0
      %2864 = vmatprep.subr.mxu0 0.0
      %2865 = vmatpush2.msra.mxu0 0.0
      %2866 = vmatprep.subr.mxu0 0.0
      %2867 = vmatpush2.msra.mxu0 0.0
      %2868 = vmatprep.subr.mxu0 0.0
      %2869 = vmatpush2.msra.mxu0 0.0
      %2870 = vmatprep.subr.mxu0 0.0
      %2871 = vmatpush2.msra.mxu0 0.0
      %2872 = vmatprep.subr.mxu0 0.0
      %2873 = vmatpush2.msra.mxu0 0.0
      %2874 = vmatprep.subr.mxu0 0.0
      %2875 = vmatpush2.msra.mxu0 0.0
      %2876 = vmatprep.subr.mxu0 0.0
      %2877 = vmatpush2.msra.mxu0 0.0
      %2878 = vmatprep.subr.mxu0 0.0
      %2879 = vmatpush2.msra.mxu0 0.0
      %2880 = vmatprep.mubr.f32.mxu0 0.0
      %v2881 = vand.u32 %v2803, 4294901760
      %v2882 = vsub.f32 %v2803, %v2881
      %v2883 = vand.u32 %v2882, 4294901760
      %v2884 = vsub.f32 %v2882, %v2883
      %v2885 = vand.u32 %v2884, 4294901760
      %2886 = vmatmul.mubr.f32.gmra.mxu0 %v2885
      %v2887 = vpop.f32.mrf.mxu0
      %v2888 = vadd.f32 0.0, %v2887
      %v2889 = vpop.f32.mrf.mxu0
      %2890 = vmatprep.mubr.f32.mxu0 0.0
      %v2891 = vand.u32 %v2806, 4294901760
      %v2892 = vsub.f32 %v2806, %v2891
      %v2893 = vand.u32 %v2892, 4294901760
      %v2894 = vsub.f32 %v2892, %v2893
      %v2895 = vand.u32 %v2894, 4294901760
      %2896 = vmatmul.mubr.f32.gmra.mxu0 %v2895
      %v2897 = vpop.f32.mrf.mxu0
      %v2898 = vadd.f32 0.0, %v2897
      %v2899 = vpop.f32.mrf.mxu0
      %2900 = vdwg.mxu0
      %2901 = vmatprep.subr.mxu0 0.0
      %2902 = vmatpush1.msra.mxu0 0.0
      %2903 = vmatprep.subr.mxu0 0.0
      %2904 = vmatpush1.msra.mxu0 0.0
      %2905 = vmatprep.subr.mxu0 0.0
      %2906 = vmatpush1.msra.mxu0 0.0
      %2907 = vmatprep.subr.mxu0 0.0
      %2908 = vmatpush1.msra.mxu0 0.0
      %2909 = vmatprep.subr.mxu0 0.0
      %2910 = vmatpush1.msra.mxu0 0.0
      %2911 = vmatprep.subr.mxu0 0.0
      %2912 = vmatpush1.msra.mxu0 0.0
      %2913 = vmatprep.subr.mxu0 0.0
      %2914 = vmatpush1.msra.mxu0 0.0
      %2915 = vmatprep.subr.mxu0 0.0
      %2916 = vmatpush1.msra.mxu0 0.0
      %2917 = vmatprep.subr.mxu0 0.0
      %v2918 = vand.u32 %v1031, 4294901760
      %v2919 = vsub.f32 %v1031, %v2918
      %v2920 = vand.u32 %v2919, 4294901760
      %v2921 = vsub.f32 %v2919, %v2920
      %v2922 = vand.u32 %v2921, 4294901760
      %2923 = vmatpush1.msra.mxu0 %v2922
      %2924 = vmatprep.subr.mxu0 0.0
      %v2925 = vand.u32 %v1030, 4294901760
      %v2926 = vsub.f32 %v1030, %v2925
      %v2927 = vand.u32 %v2926, 4294901760
      %v2928 = vsub.f32 %v2926, %v2927
      %v2929 = vand.u32 %v2928, 4294901760
      %2930 = vmatpush1.msra.mxu0 %v2929
      %2931 = vmatprep.subr.mxu0 0.0
      %v2932 = vand.u32 %v1029, 4294901760
      %v2933 = vsub.f32 %v1029, %v2932
      %v2934 = vand.u32 %v2933, 4294901760
      %v2935 = vsub.f32 %v2933, %v2934
      %v2936 = vand.u32 %v2935, 4294901760
      %2937 = vmatpush1.msra.mxu0 %v2936
      %2938 = vmatprep.subr.mxu0 0.0
      %v2939 = vand.u32 %v1028, 4294901760
      %v2940 = vsub.f32 %v1028, %v2939
      %v2941 = vand.u32 %v2940, 4294901760
      %v2942 = vsub.f32 %v2940, %v2941
      %v2943 = vand.u32 %v2942, 4294901760
      %2944 = vmatpush1.msra.mxu0 %v2943
      %2945 = vmatprep.subr.mxu0 0.0
      %v2946 = vand.u32 %v1027, 4294901760
      %v2947 = vsub.f32 %v1027, %v2946
      %v2948 = vand.u32 %v2947, 4294901760
      %v2949 = vsub.f32 %v2947, %v2948
      %v2950 = vand.u32 %v2949, 4294901760
      %2951 = vmatpush1.msra.mxu0 %v2950
      %2952 = vmatprep.subr.mxu0 0.0
      %v2953 = vand.u32 %v1026, 4294901760
      %v2954 = vsub.f32 %v1026, %v2953
      %v2955 = vand.u32 %v2954, 4294901760
      %v2956 = vsub.f32 %v2954, %v2955
      %v2957 = vand.u32 %v2956, 4294901760
      %2958 = vmatpush1.msra.mxu0 %v2957
      %2959 = vmatprep.subr.mxu0 0.0
      %v2960 = vand.u32 %v1025, 4294901760
      %v2961 = vsub.f32 %v1025, %v2960
      %v2962 = vand.u32 %v2961, 4294901760
      %v2963 = vsub.f32 %v2961, %v2962
      %v2964 = vand.u32 %v2963, 4294901760
      %2965 = vmatpush1.msra.mxu0 %v2964
      %2966 = vmatprep.subr.mxu0 0.0
      %v2967 = vand.u32 %v1024, 4294901760
      %v2968 = vsub.f32 %v1024, %v2967
      %v2969 = vand.u32 %v2968, 4294901760
      %v2970 = vsub.f32 %v2968, %v2969
      %v2971 = vand.u32 %v2970, 4294901760
      %2972 = vmatpush1.msra.mxu0 %v2971
      %2973 = vmatprep.subr.mxu0 0.0
      %2974 = vmatpush2.msra.mxu0 0.0
      %2975 = vmatprep.subr.mxu0 0.0
      %2976 = vmatpush2.msra.mxu0 0.0
      %2977 = vmatprep.subr.mxu0 0.0
      %2978 = vmatpush2.msra.mxu0 0.0
      %2979 = vmatprep.subr.mxu0 0.0
      %2980 = vmatpush2.msra.mxu0 0.0
      %2981 = vmatprep.subr.mxu0 0.0
      %2982 = vmatpush2.msra.mxu0 0.0
      %2983 = vmatprep.subr.mxu0 0.0
      %2984 = vmatpush2.msra.mxu0 0.0
      %2985 = vmatprep.subr.mxu0 0.0
      %2986 = vmatpush2.msra.mxu0 0.0
      %2987 = vmatprep.subr.mxu0 0.0
      %2988 = vmatpush2.msra.mxu0 0.0
      %2989 = vmatprep.subr.mxu0 0.0
      %2990 = vmatpush2.msra.mxu0 0.0
      %2991 = vmatprep.subr.mxu0 0.0
      %2992 = vmatpush2.msra.mxu0 0.0
      %2993 = vmatprep.subr.mxu0 0.0
      %2994 = vmatpush2.msra.mxu0 0.0
      %2995 = vmatprep.subr.mxu0 0.0
      %2996 = vmatpush2.msra.mxu0 0.0
      %2997 = vmatprep.subr.mxu0 0.0
      %2998 = vmatpush2.msra.mxu0 0.0
      %2999 = vmatprep.subr.mxu0 0.0
      %3000 = vmatpush2.msra.mxu0 0.0
      %3001 = vmatprep.subr.mxu0 0.0
      %3002 = vmatpush2.msra.mxu0 0.0
      %3003 = vmatprep.subr.mxu0 0.0
      %3004 = vmatpush2.msra.mxu0 0.0
      %3005 = vmatprep.mubr.f32.mxu0 0.0
      %v3006 = vand.u32 %v2803, 4294901760
      %3007 = vmatmul.mubr.f32.gmra.mxu0 %v3006
      %v3008 = vpop.f32.mrf.mxu0
      %v3009 = vadd.f32 %v2888, %v3008
      %v3010 = vpop.f32.mrf.mxu0
      %3011 = vmatprep.mubr.f32.mxu0 0.0
      %v3012 = vand.u32 %v2806, 4294901760
      %3013 = vmatmul.mubr.f32.gmra.mxu0 %v3012
      %v3014 = vpop.f32.mrf.mxu0
      %v3015 = vadd.f32 %v2898, %v3014
      %v3016 = vpop.f32.mrf.mxu0
      %3017 = vdwg.mxu0
      %3018 = vmatprep.subr.mxu0 0.0
      %3019 = vmatpush1.msra.mxu0 0.0
      %3020 = vmatprep.subr.mxu0 0.0
      %3021 = vmatpush1.msra.mxu0 0.0
      %3022 = vmatprep.subr.mxu0 0.0
      %3023 = vmatpush1.msra.mxu0 0.0
      %3024 = vmatprep.subr.mxu0 0.0
      %3025 = vmatpush1.msra.mxu0 0.0
      %3026 = vmatprep.subr.mxu0 0.0
      %3027 = vmatpush1.msra.mxu0 0.0
      %3028 = vmatprep.subr.mxu0 0.0
      %3029 = vmatpush1.msra.mxu0 0.0
      %3030 = vmatprep.subr.mxu0 0.0
      %3031 = vmatpush1.msra.mxu0 0.0
      %3032 = vmatprep.subr.mxu0 0.0
      %3033 = vmatpush1.msra.mxu0 0.0
      %3034 = vmatprep.subr.mxu0 0.0
      %v3035 = vand.u32 %v1031, 4294901760
      %v3036 = vsub.f32 %v1031, %v3035
      %3037 = vmatpush1.msra.mxu0 %v3036
      %3038 = vmatprep.subr.mxu0 0.0
      %v3039 = vand.u32 %v1030, 4294901760
      %v3040 = vsub.f32 %v1030, %v3039
      %3041 = vmatpush1.msra.mxu0 %v3040
      %3042 = vmatprep.subr.mxu0 0.0
      %v3043 = vand.u32 %v1029, 4294901760
      %v3044 = vsub.f32 %v1029, %v3043
      %3045 = vmatpush1.msra.mxu0 %v3044
      %3046 = vmatprep.subr.mxu0 0.0
      %v3047 = vand.u32 %v1028, 4294901760
      %v3048 = vsub.f32 %v1028, %v3047
      %3049 = vmatpush1.msra.mxu0 %v3048
      %3050 = vmatprep.subr.mxu0 0.0
      %v3051 = vand.u32 %v1027, 4294901760
      %v3052 = vsub.f32 %v1027, %v3051
      %3053 = vmatpush1.msra.mxu0 %v3052
      %3054 = vmatprep.subr.mxu0 0.0
      %v3055 = vand.u32 %v1026, 4294901760
      %v3056 = vsub.f32 %v1026, %v3055
      %3057 = vmatpush1.msra.mxu0 %v3056
      %3058 = vmatprep.subr.mxu0 0.0
      %v3059 = vand.u32 %v1025, 4294901760
      %v3060 = vsub.f32 %v1025, %v3059
      %3061 = vmatpush1.msra.mxu0 %v3060
      %3062 = vmatprep.subr.mxu0 0.0
      %v3063 = vand.u32 %v1024, 4294901760
      %v3064 = vsub.f32 %v1024, %v3063
      %3065 = vmatpush1.msra.mxu0 %v3064
      %3066 = vmatprep.subr.mxu0 0.0
      %3067 = vmatpush2.msra.mxu0 0.0
      %3068 = vmatprep.subr.mxu0 0.0
      %3069 = vmatpush2.msra.mxu0 0.0
      %3070 = vmatprep.subr.mxu0 0.0
      %3071 = vmatpush2.msra.mxu0 0.0
      %3072 = vmatprep.subr.mxu0 0.0
      %3073 = vmatpush2.msra.mxu0 0.0
      %3074 = vmatprep.subr.mxu0 0.0
      %3075 = vmatpush2.msra.mxu0 0.0
      %3076 = vmatprep.subr.mxu0 0.0
      %3077 = vmatpush2.msra.mxu0 0.0
      %3078 = vmatprep.subr.mxu0 0.0
      %3079 = vmatpush2.msra.mxu0 0.0
      %3080 = vmatprep.subr.mxu0 0.0
      %3081 = vmatpush2.msra.mxu0 0.0
      %3082 = vmatprep.subr.mxu0 0.0
      %3083 = vmatpush2.msra.mxu0 0.0
      %3084 = vmatprep.subr.mxu0 0.0
      %3085 = vmatpush2.msra.mxu0 0.0
      %3086 = vmatprep.subr.mxu0 0.0
      %3087 = vmatpush2.msra.mxu0 0.0
      %3088 = vmatprep.subr.mxu0 0.0
      %3089 = vmatpush2.msra.mxu0 0.0
      %3090 = vmatprep.subr.mxu0 0.0
      %3091 = vmatpush2.msra.mxu0 0.0
      %3092 = vmatprep.subr.mxu0 0.0
      %3093 = vmatpush2.msra.mxu0 0.0
      %3094 = vmatprep.subr.mxu0 0.0
      %3095 = vmatpush2.msra.mxu0 0.0
      %3096 = vmatprep.subr.mxu0 0.0
      %3097 = vmatpush2.msra.mxu0 0.0
      %3098 = vmatprep.mubr.f32.mxu0 0.0
      %v3099 = vand.u32 %v2803, 4294901760
      %v3100 = vsub.f32 %v2803, %v3099
      %3101 = vmatmul.mubr.f32.gmra.mxu0 %v3100
      %v3102 = vpop.f32.mrf.mxu0
      %v3103 = vadd.f32 %v3009, %v3102
      %v3104 = vpop.f32.mrf.mxu0
      %3105 = vmatprep.mubr.f32.mxu0 0.0
      %v3106 = vand.u32 %v2806, 4294901760
      %v3107 = vsub.f32 %v2806, %v3106
      %3108 = vmatmul.mubr.f32.gmra.mxu0 %v3107
      %v3109 = vpop.f32.mrf.mxu0
      %v3110 = vadd.f32 %v3015, %v3109
      %v3111 = vpop.f32.mrf.mxu0
      %3112 = vdwg.mxu0
      %3113 = vmatprep.subr.mxu0 0.0
      %3114 = vmatpush1.msra.mxu0 0.0
      %3115 = vmatprep.subr.mxu0 0.0
      %3116 = vmatpush1.msra.mxu0 0.0
      %3117 = vmatprep.subr.mxu0 0.0
      %3118 = vmatpush1.msra.mxu0 0.0
      %3119 = vmatprep.subr.mxu0 0.0
      %3120 = vmatpush1.msra.mxu0 0.0
      %3121 = vmatprep.subr.mxu0 0.0
      %3122 = vmatpush1.msra.mxu0 0.0
      %3123 = vmatprep.subr.mxu0 0.0
      %3124 = vmatpush1.msra.mxu0 0.0
      %3125 = vmatprep.subr.mxu0 0.0
      %3126 = vmatpush1.msra.mxu0 0.0
      %3127 = vmatprep.subr.mxu0 0.0
      %3128 = vmatpush1.msra.mxu0 0.0
      %3129 = vmatprep.subr.mxu0 0.0
      %v3130 = vand.u32 %v1031, 4294901760
      %3131 = vmatpush1.msra.mxu0 %v3130
      %3132 = vmatprep.subr.mxu0 0.0
      %v3133 = vand.u32 %v1030, 4294901760
      %3134 = vmatpush1.msra.mxu0 %v3133
      %3135 = vmatprep.subr.mxu0 0.0
      %v3136 = vand.u32 %v1029, 4294901760
      %3137 = vmatpush1.msra.mxu0 %v3136
      %3138 = vmatprep.subr.mxu0 0.0
      %v3139 = vand.u32 %v1028, 4294901760
      %3140 = vmatpush1.msra.mxu0 %v3139
      %3141 = vmatprep.subr.mxu0 0.0
      %v3142 = vand.u32 %v1027, 4294901760
      %3143 = vmatpush1.msra.mxu0 %v3142
      %3144 = vmatprep.subr.mxu0 0.0
      %v3145 = vand.u32 %v1026, 4294901760
      %3146 = vmatpush1.msra.mxu0 %v3145
      %3147 = vmatprep.subr.mxu0 0.0
      %v3148 = vand.u32 %v1025, 4294901760
      %3149 = vmatpush1.msra.mxu0 %v3148
      %3150 = vmatprep.subr.mxu0 0.0
      %v3151 = vand.u32 %v1024, 4294901760
      %3152 = vmatpush1.msra.mxu0 %v3151
      %3153 = vmatprep.subr.mxu0 0.0
      %3154 = vmatpush2.msra.mxu0 0.0
      %3155 = vmatprep.subr.mxu0 0.0
      %3156 = vmatpush2.msra.mxu0 0.0
      %3157 = vmatprep.subr.mxu0 0.0
      %3158 = vmatpush2.msra.mxu0 0.0
      %3159 = vmatprep.subr.mxu0 0.0
      %3160 = vmatpush2.msra.mxu0 0.0
      %3161 = vmatprep.subr.mxu0 0.0
      %3162 = vmatpush2.msra.mxu0 0.0
      %3163 = vmatprep.subr.mxu0 0.0
      %3164 = vmatpush2.msra.mxu0 0.0
      %3165 = vmatprep.subr.mxu0 0.0
      %3166 = vmatpush2.msra.mxu0 0.0
      %3167 = vmatprep.subr.mxu0 0.0
      %3168 = vmatpush2.msra.mxu0 0.0
      %3169 = vmatprep.subr.mxu0 0.0
      %3170 = vmatpush2.msra.mxu0 0.0
      %3171 = vmatprep.subr.mxu0 0.0
      %3172 = vmatpush2.msra.mxu0 0.0
      %3173 = vmatprep.subr.mxu0 0.0
      %3174 = vmatpush2.msra.mxu0 0.0
      %3175 = vmatprep.subr.mxu0 0.0
      %3176 = vmatpush2.msra.mxu0 0.0
      %3177 = vmatprep.subr.mxu0 0.0
      %3178 = vmatpush2.msra.mxu0 0.0
      %3179 = vmatprep.subr.mxu0 0.0
      %3180 = vmatpush2.msra.mxu0 0.0
      %3181 = vmatprep.subr.mxu0 0.0
      %3182 = vmatpush2.msra.mxu0 0.0
      %3183 = vmatprep.subr.mxu0 0.0
      %3184 = vmatpush2.msra.mxu0 0.0
      %3185 = vmatprep.mubr.f32.mxu0 0.0
      %v3186 = vand.u32 %v2803, 4294901760
      %v3187 = vsub.f32 %v2803, %v3186
      %v3188 = vand.u32 %v3187, 4294901760
      %3189 = vmatmul.mubr.f32.gmra.mxu0 %v3188
      %v3190 = vpop.f32.mrf.mxu0
      %v3191 = vadd.f32 %v3103, %v3190
      %v3192 = vpop.f32.mrf.mxu0
      %3193 = vmatprep.mubr.f32.mxu0 0.0
      %v3194 = vand.u32 %v2806, 4294901760
      %v3195 = vsub.f32 %v2806, %v3194
      %v3196 = vand.u32 %v3195, 4294901760
      %3197 = vmatmul.mubr.f32.gmra.mxu0 %v3196
      %v3198 = vpop.f32.mrf.mxu0
      %v3199 = vadd.f32 %v3110, %v3198
      %v3200 = vpop.f32.mrf.mxu0
      %3201 = vdwg.mxu0
      %3202 = vmatprep.subr.mxu0 0.0
      %3203 = vmatpush1.msra.mxu0 0.0
      %3204 = vmatprep.subr.mxu0 0.0
      %3205 = vmatpush1.msra.mxu0 0.0
      %3206 = vmatprep.subr.mxu0 0.0
      %3207 = vmatpush1.msra.mxu0 0.0
      %3208 = vmatprep.subr.mxu0 0.0
      %3209 = vmatpush1.msra.mxu0 0.0
      %3210 = vmatprep.subr.mxu0 0.0
      %3211 = vmatpush1.msra.mxu0 0.0
      %3212 = vmatprep.subr.mxu0 0.0
      %3213 = vmatpush1.msra.mxu0 0.0
      %3214 = vmatprep.subr.mxu0 0.0
      %3215 = vmatpush1.msra.mxu0 0.0
      %3216 = vmatprep.subr.mxu0 0.0
      %3217 = vmatpush1.msra.mxu0 0.0
      %3218 = vmatprep.subr.mxu0 0.0
      %v3219 = vand.u32 %v1031, 4294901760
      %v3220 = vsub.f32 %v1031, %v3219
      %v3221 = vand.u32 %v3220, 4294901760
      %3222 = vmatpush1.msra.mxu0 %v3221
      %3223 = vmatprep.subr.mxu0 0.0
      %v3224 = vand.u32 %v1030, 4294901760
      %v3225 = vsub.f32 %v1030, %v3224
      %v3226 = vand.u32 %v3225, 4294901760
      %3227 = vmatpush1.msra.mxu0 %v3226
      %3228 = vmatprep.subr.mxu0 0.0
      %v3229 = vand.u32 %v1029, 4294901760
      %v3230 = vsub.f32 %v1029, %v3229
      %v3231 = vand.u32 %v3230, 4294901760
      %3232 = vmatpush1.msra.mxu0 %v3231
      %3233 = vmatprep.subr.mxu0 0.0
      %v3234 = vand.u32 %v1028, 4294901760
      %v3235 = vsub.f32 %v1028, %v3234
      %v3236 = vand.u32 %v3235, 4294901760
      %3237 = vmatpush1.msra.mxu0 %v3236
      %3238 = vmatprep.subr.mxu0 0.0
      %v3239 = vand.u32 %v1027, 4294901760
      %v3240 = vsub.f32 %v1027, %v3239
      %v3241 = vand.u32 %v3240, 4294901760
      %3242 = vmatpush1.msra.mxu0 %v3241
      %3243 = vmatprep.subr.mxu0 0.0
      %v3244 = vand.u32 %v1026, 4294901760
      %v3245 = vsub.f32 %v1026, %v3244
      %v3246 = vand.u32 %v3245, 4294901760
      %3247 = vmatpush1.msra.mxu0 %v3246
      %3248 = vmatprep.subr.mxu0 0.0
      %v3249 = vand.u32 %v1025, 4294901760
      %v3250 = vsub.f32 %v1025, %v3249
      %v3251 = vand.u32 %v3250, 4294901760
      %3252 = vmatpush1.msra.mxu0 %v3251
      %3253 = vmatprep.subr.mxu0 0.0
      %v3254 = vand.u32 %v1024, 4294901760
      %v3255 = vsub.f32 %v1024, %v3254
      %v3256 = vand.u32 %v3255, 4294901760
      %3257 = vmatpush1.msra.mxu0 %v3256
      %3258 = vmatprep.subr.mxu0 0.0
      %3259 = vmatpush2.msra.mxu0 0.0
      %3260 = vmatprep.subr.mxu0 0.0
      %3261 = vmatpush2.msra.mxu0 0.0
      %3262 = vmatprep.subr.mxu0 0.0
      %3263 = vmatpush2.msra.mxu0 0.0
      %3264 = vmatprep.subr.mxu0 0.0
      %3265 = vmatpush2.msra.mxu0 0.0
      %3266 = vmatprep.subr.mxu0 0.0
      %3267 = vmatpush2.msra.mxu0 0.0
      %3268 = vmatprep.subr.mxu0 0.0
      %3269 = vmatpush2.msra.mxu0 0.0
      %3270 = vmatprep.subr.mxu0 0.0
      %3271 = vmatpush2.msra.mxu0 0.0
      %3272 = vmatprep.subr.mxu0 0.0
      %3273 = vmatpush2.msra.mxu0 0.0
      %3274 = vmatprep.subr.mxu0 0.0
      %3275 = vmatpush2.msra.mxu0 0.0
      %3276 = vmatprep.subr.mxu0 0.0
      %3277 = vmatpush2.msra.mxu0 0.0
      %3278 = vmatprep.subr.mxu0 0.0
      %3279 = vmatpush2.msra.mxu0 0.0
      %3280 = vmatprep.subr.mxu0 0.0
      %3281 = vmatpush2.msra.mxu0 0.0
      %3282 = vmatprep.subr.mxu0 0.0
      %3283 = vmatpush2.msra.mxu0 0.0
      %3284 = vmatprep.subr.mxu0 0.0
      %3285 = vmatpush2.msra.mxu0 0.0
      %3286 = vmatprep.subr.mxu0 0.0
      %3287 = vmatpush2.msra.mxu0 0.0
      %3288 = vmatprep.subr.mxu0 0.0
      %3289 = vmatpush2.msra.mxu0 0.0
      %3290 = vmatprep.mubr.f32.mxu0 0.0
      %v3291 = vand.u32 %v2803, 4294901760
      %3292 = vmatmul.mubr.f32.gmra.mxu0 %v3291
      %v3293 = vpop.f32.mrf.mxu0
      %v3294 = vadd.f32 %v3191, %v3293
      %v3295 = vpop.f32.mrf.mxu0
      %3296 = vmatprep.mubr.f32.mxu0 0.0
      %v3297 = vand.u32 %v2806, 4294901760
      %3298 = vmatmul.mubr.f32.gmra.mxu0 %v3297
      %v3299 = vpop.f32.mrf.mxu0
      %v3300 = vadd.f32 %v3199, %v3299
      %v3301 = vpop.f32.mrf.mxu0
      %3302 = vdwg.mxu0
      %3303 = vmatprep.subr.mxu0 0.0
      %3304 = vmatpush1.msra.mxu0 0.0
      %3305 = vmatprep.subr.mxu0 0.0
      %3306 = vmatpush1.msra.mxu0 0.0
      %3307 = vmatprep.subr.mxu0 0.0
      %3308 = vmatpush1.msra.mxu0 0.0
      %3309 = vmatprep.subr.mxu0 0.0
      %3310 = vmatpush1.msra.mxu0 0.0
      %3311 = vmatprep.subr.mxu0 0.0
      %3312 = vmatpush1.msra.mxu0 0.0
      %3313 = vmatprep.subr.mxu0 0.0
      %3314 = vmatpush1.msra.mxu0 0.0
      %3315 = vmatprep.subr.mxu0 0.0
      %3316 = vmatpush1.msra.mxu0 0.0
      %3317 = vmatprep.subr.mxu0 0.0
      %3318 = vmatpush1.msra.mxu0 0.0
      %3319 = vmatprep.subr.mxu0 0.0
      %v3320 = vand.u32 %v1031, 4294901760
      %3321 = vmatpush1.msra.mxu0 %v3320
      %3322 = vmatprep.subr.mxu0 0.0
      %v3323 = vand.u32 %v1030, 4294901760
      %3324 = vmatpush1.msra.mxu0 %v3323
      %3325 = vmatprep.subr.mxu0 0.0
      %v3326 = vand.u32 %v1029, 4294901760
      %3327 = vmatpush1.msra.mxu0 %v3326
      %3328 = vmatprep.subr.mxu0 0.0
      %v3329 = vand.u32 %v1028, 4294901760
      %3330 = vmatpush1.msra.mxu0 %v3329
      %3331 = vmatprep.subr.mxu0 0.0
      %v3332 = vand.u32 %v1027, 4294901760
      %3333 = vmatpush1.msra.mxu0 %v3332
      %3334 = vmatprep.subr.mxu0 0.0
      %v3335 = vand.u32 %v1026, 4294901760
      %3336 = vmatpush1.msra.mxu0 %v3335
      %3337 = vmatprep.subr.mxu0 0.0
      %v3338 = vand.u32 %v1025, 4294901760
      %3339 = vmatpush1.msra.mxu0 %v3338
      %3340 = vmatprep.subr.mxu0 0.0
      %v3341 = vand.u32 %v1024, 4294901760
      %3342 = vmatpush1.msra.mxu0 %v3341
      %3343 = vmatprep.subr.mxu0 0.0
      %3344 = vmatpush2.msra.mxu0 0.0
      %3345 = vmatprep.subr.mxu0 0.0
      %3346 = vmatpush2.msra.mxu0 0.0
      %3347 = vmatprep.subr.mxu0 0.0
      %3348 = vmatpush2.msra.mxu0 0.0
      %3349 = vmatprep.subr.mxu0 0.0
      %3350 = vmatpush2.msra.mxu0 0.0
      %3351 = vmatprep.subr.mxu0 0.0
      %3352 = vmatpush2.msra.mxu0 0.0
      %3353 = vmatprep.subr.mxu0 0.0
      %3354 = vmatpush2.msra.mxu0 0.0
      %3355 = vmatprep.subr.mxu0 0.0
      %3356 = vmatpush2.msra.mxu0 0.0
      %3357 = vmatprep.subr.mxu0 0.0
      %3358 = vmatpush2.msra.mxu0 0.0
      %3359 = vmatprep.subr.mxu0 0.0
      %3360 = vmatpush2.msra.mxu0 0.0
      %3361 = vmatprep.subr.mxu0 0.0
      %3362 = vmatpush2.msra.mxu0 0.0
      %3363 = vmatprep.subr.mxu0 0.0
      %3364 = vmatpush2.msra.mxu0 0.0
      %3365 = vmatprep.subr.mxu0 0.0
      %3366 = vmatpush2.msra.mxu0 0.0
      %3367 = vmatprep.subr.mxu0 0.0
      %3368 = vmatpush2.msra.mxu0 0.0
      %3369 = vmatprep.subr.mxu0 0.0
      %3370 = vmatpush2.msra.mxu0 0.0
      %3371 = vmatprep.subr.mxu0 0.0
      %3372 = vmatpush2.msra.mxu0 0.0
      %3373 = vmatprep.subr.mxu0 0.0
      %3374 = vmatpush2.msra.mxu0 0.0
      %3375 = vmatprep.mubr.f32.mxu0 0.0
      %v3376 = vand.u32 %v2803, 4294901760
      %3377 = vmatmul.mubr.f32.gmra.mxu0 %v3376
      %v3378 = vpop.f32.mrf.mxu0
      %v3379 = vadd.f32 %v3294, %v3378
      %v3380 = vpop.f32.mrf.mxu0
      %3381 = vmatprep.mubr.f32.mxu0 0.0
      %v3382 = vand.u32 %v2806, 4294901760
      %3383 = vmatmul.mubr.f32.gmra.mxu0 %v3382
      %v3384 = vpop.f32.mrf.mxu0
      %v3385 = vadd.f32 %v3300, %v3384
      %v3386 = vpop.f32.mrf.mxu0
      %3387 = vdwg.mxu0
      %3390 = vrot.lane.b32.xlu0 %v2201, 32
      %v3391 = vpop.permute.xlu0 %3390
      %3392 = vrot.lane.b32.xlu0 %v2207, 32
      %v3393 = vpop.permute.xlu0 %3392
      %3398 = vrot.lane.b32.xlu0 %v2790, 64
      %v3399 = vpop.permute.xlu0 %3398
      %3400 = vrot.lane.b32.xlu0 %v2796, 64
      %v3401 = vpop.permute.xlu0 %3400
      %3406 = vrot.lane.b32.xlu0 %v3379, 96
      %v3407 = vpop.permute.xlu0 %3406
      %3408 = vrot.lane.b32.xlu0 %v3385, 96
      %v3409 = vpop.permute.xlu0 %3408
      %vm3412 = vcmask 261120
      %v3413 = vsel %vm3412, %v1612, %v3391
      %v3414 = vsel %vm3412, %v1618, %v3393
      %v3415 = vsel %vm1034, %v3413, %v3399
      %v3416 = vsel %vm1034, %v3414, %v3401
      %vm3417 = vcmask 785408
      %v3418 = vsel %vm3417, %v3415, %v3407
      %v3419 = vsel %vm3417, %v3416, %v3409
      %3420 = vst [vmem:[%s212] sm:$0xff] %v3418
      %3421 = vst [vmem:[%s212 + $0x8] sm:$0xff] %v3419
      %s3422 = smul.u32 %s18, 2
      %s3423 = sadd.s32 %s3422, %s19
      %s3424 = smul.u32 2, %s3423
      %p3425 = scmp.lt.s32.totalorder %s3424, 7
      %s3426 = scalar_select %p3425, %s3424, 7
      %s3427 = smul.addr %s3426, 8
      %s3428 = scalar_lea.vmem %s3, %s3427
      // Predicated region
      $region37: #{scale_upsample.1} parent=31 // pred_check
        %p3429 = pneg %p121
      $region38: #{scale_upsample.1} parent=31 // pred_check_branch
        %3431 = sbr.rel (%p3429) target = $region40
      $region39: #{scale_upsample.1} parent=31 // pred_region
        %s3432 = smul.u32 %s18, 2
        %s3433 = sadd.s32 %s3432, %s19
        %s3434 = smul.u32 2, %s3433
      $region40: #{scale_upsample.1} parent=31 // pred_fallthru
        _
    $region32: #{scale_upsample.1} parent=5 // pred_fallthru
      _
    %p3435 = scmp.le.s32.totalorder 2, %s9
    // Predicated region
    $region41: #{scale_upsample.1} parent=5 // pred_check
      %p3436 = pneg %p3435
    $region42: #{scale_upsample.1} parent=5 // pred_check_branch
      %3438 = sbr.rel (%p3436) target = $region44
    $region43: #{scale_upsample.1} parent=5 // pred_region
      %s3439 = ssub.s32 %s9, 2
      // Predicated region
      $region45: #{scale_upsample.1} parent=43 // pred_check
        %p3440 = pneg %p127
      $region46: #{scale_upsample.1} parent=43 // pred_check_branch
        %3442 = sbr.rel (%p3440) target = $region48
      $region47: #{scale_upsample.1} parent=43 // pred_region
        %s3443 = smul.u32 %s20, 2
        %s3444 = sadd.s32 %s3443, %s21
        %s3445 = smul.u32 2, %s3444
        %p3446 = scmp.lt.s32.totalorder %s3445, 7
        %s3447 = scalar_select %p3446, %s3445, 7
        %s3448 = smul.addr %s3447, 8
        %s3449 = scalar_lea.vmem %s3, %s3448
      $region48: #{scale_upsample.1} parent=43 // pred_fallthru
        _
    $region44: #{scale_upsample.1} parent=5 // pred_fallthru
      _
  $region6: #{scale_upsample.1} parent=0 // loop_footer
    %s13 = sadd.s32 1, %s9
  $region7: #{scale_upsample.1} parent=0 // loop_footer_branch
    %8 = sbr.rel target = $region3
  $region8: #{scale_upsample.1} parent=0 // loop_exit
    _

</llo_original>
